<compile_context>
chip_gen: v5e
topology: v5e:2x2
jax: 0.10.0
libtpu: 0.0.40
codegen_flags: <defaults>
</compile_context>

<pallas_src>
import functools

import jax
import jax.numpy as jnp
from jax import lax
from jax.experimental import pallas as pl
from jax.experimental.pallas import tpu as pltpu


def _sigmoid(x):
    # sigmoid(x) = 1 / (1 + exp(-x)); exp and the approx reciprocal both run
    # on the EUP slot (free relative to VALU/MXU on the serial gate chain).
    return pl.reciprocal(1.0 + jnp.exp(-x), approx=True)


def _decoder_lstm_kernel(x_ref, wih_t_ref, whh_hbm_ref, b_ref,
                         w1_t_ref, b1_ref, w2_ref, b2_ref,
                         out_ref, whh_vmem, whh_sem, *, seq_len, hidden_dim):
    T = seq_len
    H = hidden_dim
    B = out_ref.shape[0]

    # --- 0) Kick off the W_hh^T HBM->VMEM DMA immediately; it overlaps the
    #        input-projection matmul below and is awaited right before the
    #        first recurrent matmul needs it. ---
    whh_copy = pltpu.make_async_copy(whh_hbm_ref, whh_vmem, whh_sem)
    whh_copy.start()

    # --- 1) Batched input projection, hoisted off the recurrent chain:
    #        one (T*B, E) x (E, 4H) matmul + one bias broadcast.  Result stays
    #        register-resident (16 x 1024 f32 = 16 vregs). ---
    gx_all = (
        jnp.dot(x_ref[...], wih_t_ref[...], preferred_element_type=jnp.float32)
        + b_ref[...]
    )                                                        # (T*B, 4H) f32

    # Recurrent weights must be in VMEM before the first h @ W_hh^T.
    whh_copy.wait()
    whh_t = whh_vmem[...]                                    # (H, 4H) bf16

    # --- 2) Sequential LSTM recurrence, fully unrolled (T=8); h/c in vregs,
    #        gx sliced with static per-step offsets. ---
    h = jnp.zeros((B, H), jnp.float32)
    c = jnp.zeros((B, H), jnp.float32)
    for t in range(T):
        # Only the recurrent matmul runs with bf16 operands (MXU-native);
        # accumulation and all elementwise gate/state math stay in f32.
        gates = gx_all[t * B:(t + 1) * B, :] + jnp.dot(
            h.astype(jnp.bfloat16), whh_t,
            preferred_element_type=jnp.float32)              # (B, 4H) f32
        if_g = _sigmoid(gates[:, :2 * H])                    # i & f merged
        i_g = if_g[:, :H]
        f_g = if_g[:, H:]
        g_g = jnp.tanh(gates[:, 2 * H:3 * H])
        o_g = _sigmoid(gates[:, 3 * H:])
        c = f_g * c + i_g * g_g
        h = o_g * jnp.tanh(c)

    # --- 3) Head: Linear(H,32) -> ReLU -> Linear(32,1) -> Sigmoid ---
    y1 = jnp.dot(h, w1_t_ref[...],
                 preferred_element_type=jnp.float32) + b1_ref[...]
    y1 = jnp.maximum(y1, 0.0)
    # (B,32) x (32,1) projection on the VPU (multiply + lane reduction),
    # bias scalar read from SMEM.
    y2 = jnp.sum(y1 * w2_ref[...], axis=-1, keepdims=True) + b2_ref[0, 0]
    out_ref[...] = _sigmoid(y2)


def decoder_lstm_forward(x, params):
    """x: [B, T, E] float32 (PyTorch batch_first convention)."""
    B, T, E = x.shape
    H = params["w_hh"].shape[1]

    # Time-major, then flatten (T, B) so the pre-pass is one matmul whose
    # row t*B:(t+1)*B block is the step-t projection.
    x_flat = jnp.transpose(x, (1, 0, 2)).reshape(T * B, E)    # [T*B, E]
    wih_t = params["w_ih"].T                                  # [E, 4H]  f32
    whh_t = params["w_hh"].T.astype(jnp.bfloat16)             # [H, 4H]  bf16 (MXU)
    b = (params["b_ih"] + params["b_hh"]).reshape(1, 4 * H)   # [1, 4H]
    w1_t = params["w1"].T                                     # [H, 32]
    b1 = params["b1"].reshape(1, 32)
    w2 = params["w2"].reshape(1, 32)                          # row vector
    b2 = params["b2"].reshape(1, 1)

    kernel = functools.partial(_decoder_lstm_kernel, seq_len=T, hidden_dim=H)

    def vmem():
        return pl.BlockSpec(memory_space=pltpu.MemorySpace.VMEM)

    out = pl.pallas_call(
        kernel,
        out_shape=jax.ShapeDtypeStruct((B, 1), jnp.float32),
        in_specs=[
            vmem(),                                  # x_flat       [T*B, E]
            vmem(),                                  # W_ih^T       [E, 4H]
            pl.BlockSpec(memory_space=pl.ANY),       # W_hh^T (bf16, manual DMA)
            vmem(),                                  # b_ih + b_hh  [1, 4H]
            vmem(),                                  # W1^T         [H, 32]
            vmem(),                                  # b1           [1, 32]
            vmem(),                                  # W2 row       [1, 32]
            pl.BlockSpec(memory_space=pltpu.MemorySpace.SMEM),  # b2 [1, 1]
        ],
        out_specs=vmem(),
        scratch_shapes=[
            pltpu.VMEM((H, 4 * H), jnp.bfloat16),    # W_hh^T landing buffer
            pltpu.SemaphoreType.DMA,                 # its DMA completion sem
        ],
    )(x_flat, wih_t, whh_t, b, w1_t, b1, w2, b2)
    return out


def reference_forward(x, params):
    """Pure-JAX f32 reference (matches torch nn.LSTM + MLP head semantics)."""
    B, T, E = x.shape
    H = params["w_hh"].shape[1]
    h0 = jnp.zeros((B, H), jnp.float32)
    c0 = jnp.zeros((B, H), jnp.float32)

    def step(carry, x_t):
        h, c = carry
        gates = (x_t @ params["w_ih"].T + params["b_ih"]
                 + h @ params["w_hh"].T + params["b_hh"])
        i_g = jax.nn.sigmoid(gates[:, 0 * H:1 * H])
        f_g = jax.nn.sigmoid(gates[:, 1 * H:2 * H])
        g_g = jnp.tanh(gates[:, 2 * H:3 * H])
        o_g = jax.nn.sigmoid(gates[:, 3 * H:4 * H])
        c = f_g * c + i_g * g_g
        h = o_g * jnp.tanh(c)
        return (h, c), None

    (h_n, _), _ = lax.scan(step, (h0, c0), jnp.swapaxes(x, 0, 1))
    y = jnp.maximum(h_n @ params["w1"].T + params["b1"], 0.0)
    return jax.nn.sigmoid(y @ params["w2"].T + params["b2"])


def init_params(key, embedding_dim=32, hidden_dim=256):
    H, E = hidden_dim, embedding_dim
    ks = jax.random.split(key, 8)
    s = 1.0 / jnp.sqrt(H)
    return {
        "w_ih": jax.random.uniform(ks[0], (4 * H, E), jnp.float32, -s, s),
        "w_hh": jax.random.uniform(ks[1], (4 * H, H), jnp.float32, -s, s),
        "b_ih": jax.random.uniform(ks[2], (4 * H,), jnp.float32, -s, s),
        "b_hh": jax.random.uniform(ks[3], (4 * H,), jnp.float32, -s, s),
        "w1": jax.random.uniform(ks[4], (32, H), jnp.float32, -s, s),
        "b1": jax.random.uniform(ks[5], (32,), jnp.float32, -s, s),
        "w2": jax.random.uniform(ks[6], (1, 32), jnp.float32, -0.2, 0.2),
        "b2": jax.random.uniform(ks[7], (1,), jnp.float32, -0.2, 0.2),
    }


if __name__ == "__main__":
    key = jax.random.PRNGKey(0)
    k_param, k_x = jax.random.split(key)

    B, T, E, H = 2, 8, 32, 256
    params = init_params(k_param, embedding_dim=E, hidden_dim=H)
    x = jax.random.normal(k_x, (B, T, E), jnp.float32)

    out = decoder_lstm_forward(x, params)
    out = jax.block_until_ready(out)

    ref = jax.block_until_ready(reference_forward(x, params))
    assert out.shape == (B, 1)
    # Tolerance relaxed vs. pure f32: recurrent matmul uses bf16 operands
    # (f32 accumulation) and the sigmoids use the EUP approx reciprocal.
    assert jnp.allclose(out, ref, rtol=2e-2, atol=2e-2), (out, ref)

    print("KERNEL_OK")
</pallas_src>

<mosaic_0001>
module attributes {stable_mosaic.version = 11 : i64} {
  func.func @_decoder_lstm_kernel(%arg0: memref<16x32xf32, #tpu.memory_space<vmem>>, %arg1: memref<32x1024xf32, #tpu.memory_space<vmem>>, %arg2: memref<256x1024xbf16, #tpu.memory_space<any>>, %arg3: memref<1x1024xf32, #tpu.memory_space<vmem>>, %arg4: memref<256x32xf32, #tpu.memory_space<vmem>>, %arg5: memref<1x32xf32, #tpu.memory_space<vmem>>, %arg6: memref<1x32xf32, #tpu.memory_space<vmem>>, %arg7: memref<1x1xf32, #tpu.memory_space<smem>>, %arg8: memref<2x1xf32, #tpu.memory_space<vmem>>, %arg9: memref<256x1024xbf16, #tpu.memory_space<vmem>>, %arg10: memref<!tpu.dma_semaphore, #tpu.memory_space<semaphore_mem>>) attributes {dimension_semantics = [], scalar_prefetch = 0 : i64, scratch_operands = 2 : i64, tpu.core_type = #tpu.core_type<tc>} {
    tpu.enqueue_dma source(%arg2 : memref<256x1024xbf16, #tpu.memory_space<any>>) target(%arg9 : memref<256x1024xbf16, #tpu.memory_space<vmem>>) target_semaphore(%arg10 : memref<!tpu.dma_semaphore, #tpu.memory_space<semaphore_mem>>)
    %c0 = arith.constant 0 : index
    %c0_0 = arith.constant 0 : index
    %0 = vector.load %arg0[%c0, %c0_0] : memref<16x32xf32, #tpu.memory_space<vmem>>, vector<16x32xf32>
    %c0_1 = arith.constant 0 : index
    %c0_2 = arith.constant 0 : index
    %1 = vector.load %arg1[%c0_1, %c0_2] : memref<32x1024xf32, #tpu.memory_space<vmem>>, vector<32x1024xf32>
    %cst = arith.constant dense<0.000000e+00> : vector<16x1024xf32>
    %2 = tpu.matmul %0, %1, %cst {dimension_numbers = #tpu.dot_dimension_numbers<[1], [0], [0], [1], [0, 0, 1, 1], [], []>} : vector<16x32xf32>, vector<32x1024xf32>, vector<16x1024xf32> -> vector<16x1024xf32>
    %c0_3 = arith.constant 0 : index
    %c0_4 = arith.constant 0 : index
    %3 = vector.load %arg3[%c0_3, %c0_4] : memref<1x1024xf32, #tpu.memory_space<vmem>>, vector<1x1024xf32>
    %4 = vector.broadcast %3 : vector<1x1024xf32> to vector<16x1024xf32>
    %5 = arith.addf %2, %4 : vector<16x1024xf32>
    tpu.wait_dma2 semaphore(%arg10 : memref<!tpu.dma_semaphore, #tpu.memory_space<semaphore_mem>>) src(%arg2 : memref<256x1024xbf16, #tpu.memory_space<any>>) dst(%arg9 : memref<256x1024xbf16, #tpu.memory_space<vmem>>)
    %c0_5 = arith.constant 0 : index
    %c0_6 = arith.constant 0 : index
    %6 = vector.load %arg9[%c0_5, %c0_6] : memref<256x1024xbf16, #tpu.memory_space<vmem>>, vector<256x1024xbf16>
    %cst_7 = arith.constant 0.000000e+00 : f32
    %7 = vector.broadcast %cst_7 : f32 to vector<2x256xf32>
    %cst_8 = arith.constant 0.000000e+00 : f32
    %8 = vector.broadcast %cst_8 : f32 to vector<2x256xf32>
    %9 = vector.extract_strided_slice %5 {offsets = [0, 0], sizes = [2, 1024], strides = [1, 1]} : vector<16x1024xf32> to vector<2x1024xf32>
    %10 = arith.truncf %7 : vector<2x256xf32> to vector<2x256xbf16>
    %cst_9 = arith.constant dense<0.000000e+00> : vector<2x1024xf32>
    %11 = tpu.matmul %10, %6, %cst_9 {dimension_numbers = #tpu.dot_dimension_numbers<[1], [0], [0], [1], [0, 0, 1, 1], [], []>} : vector<2x256xbf16>, vector<256x1024xbf16>, vector<2x1024xf32> -> vector<2x1024xf32>
    %12 = arith.addf %9, %11 : vector<2x1024xf32>
    %13 = vector.extract_strided_slice %12 {offsets = [0, 0], sizes = [2, 512], strides = [1, 1]} : vector<2x1024xf32> to vector<2x512xf32>
    %cst_10 = arith.constant 0.000000e+00 : f32
    %14 = vector.broadcast %cst_10 : f32 to vector<2x512xf32>
    %15 = arith.subf %14, %13 : vector<2x512xf32>
    %16 = math.exp %15 : vector<2x512xf32>
    %cst_11 = arith.constant 1.000000e+00 : f32
    %17 = vector.broadcast %cst_11 : f32 to vector<2x512xf32>
    %18 = arith.addf %17, %16 : vector<2x512xf32>
    %19 = tpu.reciprocal %18 {approx = true} : vector<2x512xf32> -> vector<2x512xf32>
    %20 = vector.extract_strided_slice %19 {offsets = [0, 0], sizes = [2, 256], strides = [1, 1]} : vector<2x512xf32> to vector<2x256xf32>
    %21 = vector.extract_strided_slice %19 {offsets = [0, 256], sizes = [2, 256], strides = [1, 1]} : vector<2x512xf32> to vector<2x256xf32>
    %22 = vector.extract_strided_slice %12 {offsets = [0, 512], sizes = [2, 256], strides = [1, 1]} : vector<2x1024xf32> to vector<2x256xf32>
    %23 = math.tanh %22 : vector<2x256xf32>
    %24 = vector.extract_strided_slice %12 {offsets = [0, 768], sizes = [2, 256], strides = [1, 1]} : vector<2x1024xf32> to vector<2x256xf32>
    %cst_12 = arith.constant 0.000000e+00 : f32
    %25 = vector.broadcast %cst_12 : f32 to vector<2x256xf32>
    %26 = arith.subf %25, %24 : vector<2x256xf32>
    %27 = math.exp %26 : vector<2x256xf32>
    %cst_13 = arith.constant 1.000000e+00 : f32
    %28 = vector.broadcast %cst_13 : f32 to vector<2x256xf32>
    %29 = arith.addf %28, %27 : vector<2x256xf32>
    %30 = tpu.reciprocal %29 {approx = true} : vector<2x256xf32> -> vector<2x256xf32>
    %31 = arith.mulf %21, %8 : vector<2x256xf32>
    %32 = arith.mulf %20, %23 : vector<2x256xf32>
    %33 = arith.addf %31, %32 : vector<2x256xf32>
    %34 = math.tanh %33 : vector<2x256xf32>
    %35 = arith.mulf %30, %34 : vector<2x256xf32>
    %36 = vector.extract_strided_slice %5 {offsets = [2, 0], sizes = [2, 1024], strides = [1, 1]} : vector<16x1024xf32> to vector<2x1024xf32>
    %37 = arith.truncf %35 : vector<2x256xf32> to vector<2x256xbf16>
    %cst_14 = arith.constant dense<0.000000e+00> : vector<2x1024xf32>
    %38 = tpu.matmul %37, %6, %cst_14 {dimension_numbers = #tpu.dot_dimension_numbers<[1], [0], [0], [1], [0, 0, 1, 1], [], []>} : vector<2x256xbf16>, vector<256x1024xbf16>, vector<2x1024xf32> -> vector<2x1024xf32>
    %39 = arith.addf %36, %38 : vector<2x1024xf32>
    %40 = vector.extract_strided_slice %39 {offsets = [0, 0], sizes = [2, 512], strides = [1, 1]} : vector<2x1024xf32> to vector<2x512xf32>
    %cst_15 = arith.constant 0.000000e+00 : f32
    %41 = vector.broadcast %cst_15 : f32 to vector<2x512xf32>
    %42 = arith.subf %41, %40 : vector<2x512xf32>
    %43 = math.exp %42 : vector<2x512xf32>
    %cst_16 = arith.constant 1.000000e+00 : f32
    %44 = vector.broadcast %cst_16 : f32 to vector<2x512xf32>
    %45 = arith.addf %44, %43 : vector<2x512xf32>
    %46 = tpu.reciprocal %45 {approx = true} : vector<2x512xf32> -> vector<2x512xf32>
    %47 = vector.extract_strided_slice %46 {offsets = [0, 0], sizes = [2, 256], strides = [1, 1]} : vector<2x512xf32> to vector<2x256xf32>
    %48 = vector.extract_strided_slice %46 {offsets = [0, 256], sizes = [2, 256], strides = [1, 1]} : vector<2x512xf32> to vector<2x256xf32>
    %49 = vector.extract_strided_slice %39 {offsets = [0, 512], sizes = [2, 256], strides = [1, 1]} : vector<2x1024xf32> to vector<2x256xf32>
    %50 = math.tanh %49 : vector<2x256xf32>
    %51 = vector.extract_strided_slice %39 {offsets = [0, 768], sizes = [2, 256], strides = [1, 1]} : vector<2x1024xf32> to vector<2x256xf32>
    %cst_17 = arith.constant 0.000000e+00 : f32
    %52 = vector.broadcast %cst_17 : f32 to vector<2x256xf32>
    %53 = arith.subf %52, %51 : vector<2x256xf32>
    %54 = math.exp %53 : vector<2x256xf32>
    %cst_18 = arith.constant 1.000000e+00 : f32
    %55 = vector.broadcast %cst_18 : f32 to vector<2x256xf32>
    %56 = arith.addf %55, %54 : vector<2x256xf32>
    %57 = tpu.reciprocal %56 {approx = true} : vector<2x256xf32> -> vector<2x256xf32>
    %58 = arith.mulf %48, %33 : vector<2x256xf32>
    %59 = arith.mulf %47, %50 : vector<2x256xf32>
    %60 = arith.addf %58, %59 : vector<2x256xf32>
    %61 = math.tanh %60 : vector<2x256xf32>
    %62 = arith.mulf %57, %61 : vector<2x256xf32>
    %63 = vector.extract_strided_slice %5 {offsets = [4, 0], sizes = [2, 1024], strides = [1, 1]} : vector<16x1024xf32> to vector<2x1024xf32>
    %64 = arith.truncf %62 : vector<2x256xf32> to vector<2x256xbf16>
    %cst_19 = arith.constant dense<0.000000e+00> : vector<2x1024xf32>
    %65 = tpu.matmul %64, %6, %cst_19 {dimension_numbers = #tpu.dot_dimension_numbers<[1], [0], [0], [1], [0, 0, 1, 1], [], []>} : vector<2x256xbf16>, vector<256x1024xbf16>, vector<2x1024xf32> -> vector<2x1024xf32>
    %66 = arith.addf %63, %65 : vector<2x1024xf32>
    %67 = vector.extract_strided_slice %66 {offsets = [0, 0], sizes = [2, 512], strides = [1, 1]} : vector<2x1024xf32> to vector<2x512xf32>
    %cst_20 = arith.constant 0.000000e+00 : f32
    %68 = vector.broadcast %cst_20 : f32 to vector<2x512xf32>
    %69 = arith.subf %68, %67 : vector<2x512xf32>
    %70 = math.exp %69 : vector<2x512xf32>
    %cst_21 = arith.constant 1.000000e+00 : f32
    %71 = vector.broadcast %cst_21 : f32 to vector<2x512xf32>
    %72 = arith.addf %71, %70 : vector<2x512xf32>
    %73 = tpu.reciprocal %72 {approx = true} : vector<2x512xf32> -> vector<2x512xf32>
    %74 = vector.extract_strided_slice %73 {offsets = [0, 0], sizes = [2, 256], strides = [1, 1]} : vector<2x512xf32> to vector<2x256xf32>
    %75 = vector.extract_strided_slice %73 {offsets = [0, 256], sizes = [2, 256], strides = [1, 1]} : vector<2x512xf32> to vector<2x256xf32>
    %76 = vector.extract_strided_slice %66 {offsets = [0, 512], sizes = [2, 256], strides = [1, 1]} : vector<2x1024xf32> to vector<2x256xf32>
    %77 = math.tanh %76 : vector<2x256xf32>
    %78 = vector.extract_strided_slice %66 {offsets = [0, 768], sizes = [2, 256], strides = [1, 1]} : vector<2x1024xf32> to vector<2x256xf32>
    %cst_22 = arith.constant 0.000000e+00 : f32
    %79 = vector.broadcast %cst_22 : f32 to vector<2x256xf32>
    %80 = arith.subf %79, %78 : vector<2x256xf32>
    %81 = math.exp %80 : vector<2x256xf32>
    %cst_23 = arith.constant 1.000000e+00 : f32
    %82 = vector.broadcast %cst_23 : f32 to vector<2x256xf32>
    %83 = arith.addf %82, %81 : vector<2x256xf32>
    %84 = tpu.reciprocal %83 {approx = true} : vector<2x256xf32> -> vector<2x256xf32>
    %85 = arith.mulf %75, %60 : vector<2x256xf32>
    %86 = arith.mulf %74, %77 : vector<2x256xf32>
    %87 = arith.addf %85, %86 : vector<2x256xf32>
    %88 = math.tanh %87 : vector<2x256xf32>
    %89 = arith.mulf %84, %88 : vector<2x256xf32>
    %90 = vector.extract_strided_slice %5 {offsets = [6, 0], sizes = [2, 1024], strides = [1, 1]} : vector<16x1024xf32> to vector<2x1024xf32>
    %91 = arith.truncf %89 : vector<2x256xf32> to vector<2x256xbf16>
    %cst_24 = arith.constant dense<0.000000e+00> : vector<2x1024xf32>
    %92 = tpu.matmul %91, %6, %cst_24 {dimension_numbers = #tpu.dot_dimension_numbers<[1], [0], [0], [1], [0, 0, 1, 1], [], []>} : vector<2x256xbf16>, vector<256x1024xbf16>, vector<2x1024xf32> -> vector<2x1024xf32>
    %93 = arith.addf %90, %92 : vector<2x1024xf32>
    %94 = vector.extract_strided_slice %93 {offsets = [0, 0], sizes = [2, 512], strides = [1, 1]} : vector<2x1024xf32> to vector<2x512xf32>
    %cst_25 = arith.constant 0.000000e+00 : f32
    %95 = vector.broadcast %cst_25 : f32 to vector<2x512xf32>
    %96 = arith.subf %95, %94 : vector<2x512xf32>
    %97 = math.exp %96 : vector<2x512xf32>
    %cst_26 = arith.constant 1.000000e+00 : f32
    %98 = vector.broadcast %cst_26 : f32 to vector<2x512xf32>
    %99 = arith.addf %98, %97 : vector<2x512xf32>
    %100 = tpu.reciprocal %99 {approx = true} : vector<2x512xf32> -> vector<2x512xf32>
    %101 = vector.extract_strided_slice %100 {offsets = [0, 0], sizes = [2, 256], strides = [1, 1]} : vector<2x512xf32> to vector<2x256xf32>
    %102 = vector.extract_strided_slice %100 {offsets = [0, 256], sizes = [2, 256], strides = [1, 1]} : vector<2x512xf32> to vector<2x256xf32>
    %103 = vector.extract_strided_slice %93 {offsets = [0, 512], sizes = [2, 256], strides = [1, 1]} : vector<2x1024xf32> to vector<2x256xf32>
    %104 = math.tanh %103 : vector<2x256xf32>
    %105 = vector.extract_strided_slice %93 {offsets = [0, 768], sizes = [2, 256], strides = [1, 1]} : vector<2x1024xf32> to vector<2x256xf32>
    %cst_27 = arith.constant 0.000000e+00 : f32
    %106 = vector.broadcast %cst_27 : f32 to vector<2x256xf32>
    %107 = arith.subf %106, %105 : vector<2x256xf32>
    %108 = math.exp %107 : vector<2x256xf32>
    %cst_28 = arith.constant 1.000000e+00 : f32
    %109 = vector.broadcast %cst_28 : f32 to vector<2x256xf32>
    %110 = arith.addf %109, %108 : vector<2x256xf32>
    %111 = tpu.reciprocal %110 {approx = true} : vector<2x256xf32> -> vector<2x256xf32>
    %112 = arith.mulf %102, %87 : vector<2x256xf32>
    %113 = arith.mulf %101, %104 : vector<2x256xf32>
    %114 = arith.addf %112, %113 : vector<2x256xf32>
    %115 = math.tanh %114 : vector<2x256xf32>
    %116 = arith.mulf %111, %115 : vector<2x256xf32>
    %117 = vector.extract_strided_slice %5 {offsets = [8, 0], sizes = [2, 1024], strides = [1, 1]} : vector<16x1024xf32> to vector<2x1024xf32>
    %118 = arith.truncf %116 : vector<2x256xf32> to vector<2x256xbf16>
    %cst_29 = arith.constant dense<0.000000e+00> : vector<2x1024xf32>
    %119 = tpu.matmul %118, %6, %cst_29 {dimension_numbers = #tpu.dot_dimension_numbers<[1], [0], [0], [1], [0, 0, 1, 1], [], []>} : vector<2x256xbf16>, vector<256x1024xbf16>, vector<2x1024xf32> -> vector<2x1024xf32>
    %120 = arith.addf %117, %119 : vector<2x1024xf32>
    %121 = vector.extract_strided_slice %120 {offsets = [0, 0], sizes = [2, 512], strides = [1, 1]} : vector<2x1024xf32> to vector<2x512xf32>
    %cst_30 = arith.constant 0.000000e+00 : f32
    %122 = vector.broadcast %cst_30 : f32 to vector<2x512xf32>
    %123 = arith.subf %122, %121 : vector<2x512xf32>
    %124 = math.exp %123 : vector<2x512xf32>
    %cst_31 = arith.constant 1.000000e+00 : f32
    %125 = vector.broadcast %cst_31 : f32 to vector<2x512xf32>
    %126 = arith.addf %125, %124 : vector<2x512xf32>
    %127 = tpu.reciprocal %126 {approx = true} : vector<2x512xf32> -> vector<2x512xf32>
    %128 = vector.extract_strided_slice %127 {offsets = [0, 0], sizes = [2, 256], strides = [1, 1]} : vector<2x512xf32> to vector<2x256xf32>
    %129 = vector.extract_strided_slice %127 {offsets = [0, 256], sizes = [2, 256], strides = [1, 1]} : vector<2x512xf32> to vector<2x256xf32>
    %130 = vector.extract_strided_slice %120 {offsets = [0, 512], sizes = [2, 256], strides = [1, 1]} : vector<2x1024xf32> to vector<2x256xf32>
    %131 = math.tanh %130 : vector<2x256xf32>
    %132 = vector.extract_strided_slice %120 {offsets = [0, 768], sizes = [2, 256], strides = [1, 1]} : vector<2x1024xf32> to vector<2x256xf32>
    %cst_32 = arith.constant 0.000000e+00 : f32
    %133 = vector.broadcast %cst_32 : f32 to vector<2x256xf32>
    %134 = arith.subf %133, %132 : vector<2x256xf32>
    %135 = math.exp %134 : vector<2x256xf32>
    %cst_33 = arith.constant 1.000000e+00 : f32
    %136 = vector.broadcast %cst_33 : f32 to vector<2x256xf32>
    %137 = arith.addf %136, %135 : vector<2x256xf32>
    %138 = tpu.reciprocal %137 {approx = true} : vector<2x256xf32> -> vector<2x256xf32>
    %139 = arith.mulf %129, %114 : vector<2x256xf32>
    %140 = arith.mulf %128, %131 : vector<2x256xf32>
    %141 = arith.addf %139, %140 : vector<2x256xf32>
    %142 = math.tanh %141 : vector<2x256xf32>
    %143 = arith.mulf %138, %142 : vector<2x256xf32>
    %144 = vector.extract_strided_slice %5 {offsets = [10, 0], sizes = [2, 1024], strides = [1, 1]} : vector<16x1024xf32> to vector<2x1024xf32>
    %145 = arith.truncf %143 : vector<2x256xf32> to vector<2x256xbf16>
    %cst_34 = arith.constant dense<0.000000e+00> : vector<2x1024xf32>
    %146 = tpu.matmul %145, %6, %cst_34 {dimension_numbers = #tpu.dot_dimension_numbers<[1], [0], [0], [1], [0, 0, 1, 1], [], []>} : vector<2x256xbf16>, vector<256x1024xbf16>, vector<2x1024xf32> -> vector<2x1024xf32>
    %147 = arith.addf %144, %146 : vector<2x1024xf32>
    %148 = vector.extract_strided_slice %147 {offsets = [0, 0], sizes = [2, 512], strides = [1, 1]} : vector<2x1024xf32> to vector<2x512xf32>
    %cst_35 = arith.constant 0.000000e+00 : f32
    %149 = vector.broadcast %cst_35 : f32 to vector<2x512xf32>
    %150 = arith.subf %149, %148 : vector<2x512xf32>
    %151 = math.exp %150 : vector<2x512xf32>
    %cst_36 = arith.constant 1.000000e+00 : f32
    %152 = vector.broadcast %cst_36 : f32 to vector<2x512xf32>
    %153 = arith.addf %152, %151 : vector<2x512xf32>
    %154 = tpu.reciprocal %153 {approx = true} : vector<2x512xf32> -> vector<2x512xf32>
    %155 = vector.extract_strided_slice %154 {offsets = [0, 0], sizes = [2, 256], strides = [1, 1]} : vector<2x512xf32> to vector<2x256xf32>
    %156 = vector.extract_strided_slice %154 {offsets = [0, 256], sizes = [2, 256], strides = [1, 1]} : vector<2x512xf32> to vector<2x256xf32>
    %157 = vector.extract_strided_slice %147 {offsets = [0, 512], sizes = [2, 256], strides = [1, 1]} : vector<2x1024xf32> to vector<2x256xf32>
    %158 = math.tanh %157 : vector<2x256xf32>
    %159 = vector.extract_strided_slice %147 {offsets = [0, 768], sizes = [2, 256], strides = [1, 1]} : vector<2x1024xf32> to vector<2x256xf32>
    %cst_37 = arith.constant 0.000000e+00 : f32
    %160 = vector.broadcast %cst_37 : f32 to vector<2x256xf32>
    %161 = arith.subf %160, %159 : vector<2x256xf32>
    %162 = math.exp %161 : vector<2x256xf32>
    %cst_38 = arith.constant 1.000000e+00 : f32
    %163 = vector.broadcast %cst_38 : f32 to vector<2x256xf32>
    %164 = arith.addf %163, %162 : vector<2x256xf32>
    %165 = tpu.reciprocal %164 {approx = true} : vector<2x256xf32> -> vector<2x256xf32>
    %166 = arith.mulf %156, %141 : vector<2x256xf32>
    %167 = arith.mulf %155, %158 : vector<2x256xf32>
    %168 = arith.addf %166, %167 : vector<2x256xf32>
    %169 = math.tanh %168 : vector<2x256xf32>
    %170 = arith.mulf %165, %169 : vector<2x256xf32>
    %171 = vector.extract_strided_slice %5 {offsets = [12, 0], sizes = [2, 1024], strides = [1, 1]} : vector<16x1024xf32> to vector<2x1024xf32>
    %172 = arith.truncf %170 : vector<2x256xf32> to vector<2x256xbf16>
    %cst_39 = arith.constant dense<0.000000e+00> : vector<2x1024xf32>
    %173 = tpu.matmul %172, %6, %cst_39 {dimension_numbers = #tpu.dot_dimension_numbers<[1], [0], [0], [1], [0, 0, 1, 1], [], []>} : vector<2x256xbf16>, vector<256x1024xbf16>, vector<2x1024xf32> -> vector<2x1024xf32>
    %174 = arith.addf %171, %173 : vector<2x1024xf32>
    %175 = vector.extract_strided_slice %174 {offsets = [0, 0], sizes = [2, 512], strides = [1, 1]} : vector<2x1024xf32> to vector<2x512xf32>
    %cst_40 = arith.constant 0.000000e+00 : f32
    %176 = vector.broadcast %cst_40 : f32 to vector<2x512xf32>
    %177 = arith.subf %176, %175 : vector<2x512xf32>
    %178 = math.exp %177 : vector<2x512xf32>
    %cst_41 = arith.constant 1.000000e+00 : f32
    %179 = vector.broadcast %cst_41 : f32 to vector<2x512xf32>
    %180 = arith.addf %179, %178 : vector<2x512xf32>
    %181 = tpu.reciprocal %180 {approx = true} : vector<2x512xf32> -> vector<2x512xf32>
    %182 = vector.extract_strided_slice %181 {offsets = [0, 0], sizes = [2, 256], strides = [1, 1]} : vector<2x512xf32> to vector<2x256xf32>
    %183 = vector.extract_strided_slice %181 {offsets = [0, 256], sizes = [2, 256], strides = [1, 1]} : vector<2x512xf32> to vector<2x256xf32>
    %184 = vector.extract_strided_slice %174 {offsets = [0, 512], sizes = [2, 256], strides = [1, 1]} : vector<2x1024xf32> to vector<2x256xf32>
    %185 = math.tanh %184 : vector<2x256xf32>
    %186 = vector.extract_strided_slice %174 {offsets = [0, 768], sizes = [2, 256], strides = [1, 1]} : vector<2x1024xf32> to vector<2x256xf32>
    %cst_42 = arith.constant 0.000000e+00 : f32
    %187 = vector.broadcast %cst_42 : f32 to vector<2x256xf32>
    %188 = arith.subf %187, %186 : vector<2x256xf32>
    %189 = math.exp %188 : vector<2x256xf32>
    %cst_43 = arith.constant 1.000000e+00 : f32
    %190 = vector.broadcast %cst_43 : f32 to vector<2x256xf32>
    %191 = arith.addf %190, %189 : vector<2x256xf32>
    %192 = tpu.reciprocal %191 {approx = true} : vector<2x256xf32> -> vector<2x256xf32>
    %193 = arith.mulf %183, %168 : vector<2x256xf32>
    %194 = arith.mulf %182, %185 : vector<2x256xf32>
    %195 = arith.addf %193, %194 : vector<2x256xf32>
    %196 = math.tanh %195 : vector<2x256xf32>
    %197 = arith.mulf %192, %196 : vector<2x256xf32>
    %198 = vector.extract_strided_slice %5 {offsets = [14, 0], sizes = [2, 1024], strides = [1, 1]} : vector<16x1024xf32> to vector<2x1024xf32>
    %199 = arith.truncf %197 : vector<2x256xf32> to vector<2x256xbf16>
    %cst_44 = arith.constant dense<0.000000e+00> : vector<2x1024xf32>
    %200 = tpu.matmul %199, %6, %cst_44 {dimension_numbers = #tpu.dot_dimension_numbers<[1], [0], [0], [1], [0, 0, 1, 1], [], []>} : vector<2x256xbf16>, vector<256x1024xbf16>, vector<2x1024xf32> -> vector<2x1024xf32>
    %201 = arith.addf %198, %200 : vector<2x1024xf32>
    %202 = vector.extract_strided_slice %201 {offsets = [0, 0], sizes = [2, 512], strides = [1, 1]} : vector<2x1024xf32> to vector<2x512xf32>
    %cst_45 = arith.constant 0.000000e+00 : f32
    %203 = vector.broadcast %cst_45 : f32 to vector<2x512xf32>
    %204 = arith.subf %203, %202 : vector<2x512xf32>
    %205 = math.exp %204 : vector<2x512xf32>
    %cst_46 = arith.constant 1.000000e+00 : f32
    %206 = vector.broadcast %cst_46 : f32 to vector<2x512xf32>
    %207 = arith.addf %206, %205 : vector<2x512xf32>
    %208 = tpu.reciprocal %207 {approx = true} : vector<2x512xf32> -> vector<2x512xf32>
    %209 = vector.extract_strided_slice %208 {offsets = [0, 0], sizes = [2, 256], strides = [1, 1]} : vector<2x512xf32> to vector<2x256xf32>
    %210 = vector.extract_strided_slice %208 {offsets = [0, 256], sizes = [2, 256], strides = [1, 1]} : vector<2x512xf32> to vector<2x256xf32>
    %211 = vector.extract_strided_slice %201 {offsets = [0, 512], sizes = [2, 256], strides = [1, 1]} : vector<2x1024xf32> to vector<2x256xf32>
    %212 = math.tanh %211 : vector<2x256xf32>
    %213 = vector.extract_strided_slice %201 {offsets = [0, 768], sizes = [2, 256], strides = [1, 1]} : vector<2x1024xf32> to vector<2x256xf32>
    %cst_47 = arith.constant 0.000000e+00 : f32
    %214 = vector.broadcast %cst_47 : f32 to vector<2x256xf32>
    %215 = arith.subf %214, %213 : vector<2x256xf32>
    %216 = math.exp %215 : vector<2x256xf32>
    %cst_48 = arith.constant 1.000000e+00 : f32
    %217 = vector.broadcast %cst_48 : f32 to vector<2x256xf32>
    %218 = arith.addf %217, %216 : vector<2x256xf32>
    %219 = tpu.reciprocal %218 {approx = true} : vector<2x256xf32> -> vector<2x256xf32>
    %220 = arith.mulf %210, %195 : vector<2x256xf32>
    %221 = arith.mulf %209, %212 : vector<2x256xf32>
    %222 = arith.addf %220, %221 : vector<2x256xf32>
    %223 = math.tanh %222 : vector<2x256xf32>
    %224 = arith.mulf %219, %223 : vector<2x256xf32>
    %c0_49 = arith.constant 0 : index
    %c0_50 = arith.constant 0 : index
    %225 = vector.load %arg4[%c0_49, %c0_50] : memref<256x32xf32, #tpu.memory_space<vmem>>, vector<256x32xf32>
    %cst_51 = arith.constant dense<0.000000e+00> : vector<2x32xf32>
    %226 = tpu.matmul %224, %225, %cst_51 {dimension_numbers = #tpu.dot_dimension_numbers<[1], [0], [0], [1], [0, 0, 1, 1], [], []>} : vector<2x256xf32>, vector<256x32xf32>, vector<2x32xf32> -> vector<2x32xf32>
    %c0_52 = arith.constant 0 : index
    %c0_53 = arith.constant 0 : index
    %227 = vector.load %arg5[%c0_52, %c0_53] : memref<1x32xf32, #tpu.memory_space<vmem>>, vector<1x32xf32>
    %228 = vector.broadcast %227 : vector<1x32xf32> to vector<2x32xf32>
    %229 = arith.addf %226, %228 : vector<2x32xf32>
    %cst_54 = arith.constant 0.000000e+00 : f32
    %230 = vector.broadcast %cst_54 : f32 to vector<2x32xf32>
    %231 = arith.maximumf %229, %230 : vector<2x32xf32>
    %c0_55 = arith.constant 0 : index
    %c0_56 = arith.constant 0 : index
    %232 = vector.load %arg6[%c0_55, %c0_56] : memref<1x32xf32, #tpu.memory_space<vmem>>, vector<1x32xf32>
    %233 = vector.broadcast %232 : vector<1x32xf32> to vector<2x32xf32>
    %234 = arith.mulf %231, %233 : vector<2x32xf32>
    %cst_57 = arith.constant dense<0.000000e+00> : vector<2xf32>
    %235 = vector.multi_reduction <add>, %234, %cst_57 [1] : vector<2x32xf32> to vector<2xf32>
    %236 = vector.shape_cast %235 : vector<2xf32> to vector<2x1xf32>
    %c0_58 = arith.constant 0 : index
    %c0_59 = arith.constant 0 : index
    %237 = memref.load %arg7[%c0_58, %c0_59] : memref<1x1xf32, #tpu.memory_space<smem>>
    %238 = vector.broadcast %237 : f32 to vector<2x1xf32>
    %239 = arith.addf %236, %238 : vector<2x1xf32>
    %cst_60 = arith.constant 0.000000e+00 : f32
    %240 = vector.broadcast %cst_60 : f32 to vector<2x1xf32>
    %241 = arith.subf %240, %239 : vector<2x1xf32>
    %242 = math.exp %241 : vector<2x1xf32>
    %cst_61 = arith.constant 1.000000e+00 : f32
    %243 = vector.broadcast %cst_61 : f32 to vector<2x1xf32>
    %244 = arith.addf %243, %242 : vector<2x1xf32>
    %245 = tpu.reciprocal %244 {approx = true} : vector<2x1xf32> -> vector<2x1xf32>
    %c0_62 = arith.constant 0 : index
    %c0_63 = arith.constant 0 : index
    %246 = vector.load %arg8[%c0_62, %c0_63] : memref<2x1xf32, #tpu.memory_space<vmem>>, vector<2x1xf32>
    tpu.vector_store %arg8[%c0_62, %c0_63], %245 {strides = array<i32>} : memref<2x1xf32, #tpu.memory_space<vmem>>, vector<2x1xf32>,
    return
  }
}

</mosaic_0001>

<llo_original>
// kernel: tpu_custom_call.1
$region0: #{tpu_custom_call.1}
  #allocation0 [shape = 'u32[]', space=smem, size = 0x4, offset = 0x4, fixed_abs, tag = 'smem constant byte address 0x4 - core index']
  #allocation1 [shape = 'u32[72,128]{1,0:T(1,128)}', space=vmem, size = 0x9000, scoped, tag = 'internal scratch']
  #allocation2 [shape = 'bf16[256,1024]{1,0:T(8,128)(2,1)}', space=vmem, size = 0x80000, scoped, tag = 'scratch operand']
  #allocation3 [shape = 's32[1]{0}', space=sflag, size = 0x4, scoped, tag = 'scratch operand']
  #allocation4 [shape = 'f32[1,1]{1,0:T(1,128)S(6)}', space=smem, size = 0x200, scoped, tag = 'scoped memory for tpu_custom_call.1']
  #allocation5 [shape = 's32[]', space=sflag, size = 0x4, offset = 0, fixed_abs, tag = 'sflag constant byte address 0x0 - dummy sync flag']
  #allocation6 [shape = 's32[]', space=sflag, size = 0x4, offset = 0, fixed_abs, tag = 'sflag constant byte address 0x0 - dummy sync flag']
  #allocation7 [shape = 'u32[]', space=smem, size = 0x4, offset = 0x44, fixed_abs, tag = 'smem constant byte address 0x44 - assertion arg 0']
  #allocation8 [shape = 'u32[]', space=smem, size = 0x4, offset = 0x48, fixed_abs, tag = 'smem constant byte address 0x48 - assertion arg 1']
  %s0 = inlined_call_operand.vmem [shape: f32[16,32], index: 0, kind: input, shape index: {}]
  %s1 = inlined_call_operand.vmem [shape: f32[32,1024], index: 1, kind: input, shape index: {}]
  %s2 = inlined_call_operand.hbm [shape: bf16[256,1024], index: 2, kind: input, shape index: {}]
  %s3 = inlined_call_operand.vmem [shape: f32[1,1024], index: 3, kind: input, shape index: {}]
  %s4 = inlined_call_operand.vmem [shape: f32[256,32], index: 4, kind: input, shape index: {}]
  %s5 = inlined_call_operand.vmem [shape: f32[1,32], index: 5, kind: input, shape index: {}]
  %s6 = inlined_call_operand.vmem [shape: f32[1,32], index: 6, kind: input, shape index: {}]
  %s7 = inlined_call_operand.<no memory space> [shape: f32[1,1], index: 7, kind: input, shape index: {}]
  %s8 = inlined_call_operand.vmem [shape: f32[2,1], index: 8, kind: output, shape index: {}]
  %s9 = sld [smem:[#allocation0]]
  $region42: #{tpu_custom_call.1} parent=0
    _
  %s11 = ssub.s32 1, %s9
  %s12 = scalar_select 0, %s11, %s9
  %13 = sst [smem:[#allocation4]] %s7
  // Predicated region
  $region2: #{tpu_custom_call.1} parent=0 // pred_check
    _
  $region3: #{tpu_custom_call.1} parent=0 // pred_check_branch
    %15 = sbr.rel (0) target = $region5
  $region4: #{tpu_custom_call.1} parent=0 // pred_region
    _
  $region5: #{tpu_custom_call.1} parent=0 // pred_fallthru
    _
  // Predicated region
  $region6: #{tpu_custom_call.1} parent=0 // pred_check
    _
  $region7: #{tpu_custom_call.1} parent=0 // pred_check_branch
    %17 = sbr.rel (0) target = $region9
  $region8: #{tpu_custom_call.1} parent=0 // pred_region
    _
  $region9: #{tpu_custom_call.1} parent=0 // pred_fallthru
    _
  // Predicated region
  $region10: #{tpu_custom_call.1} parent=0 // pred_check
    _
  $region11: #{tpu_custom_call.1} parent=0 // pred_check_branch
    %19 = sbr.rel (0) target = $region13
  $region12: #{tpu_custom_call.1} parent=0 // pred_region
    _
  $region13: #{tpu_custom_call.1} parent=0 // pred_fallthru
    _
  // Predicated region
  $region14: #{tpu_custom_call.1} parent=0 // pred_check
    _
  $region15: #{tpu_custom_call.1} parent=0 // pred_check_branch
    %21 = sbr.rel (0) target = $region17
  $region16: #{tpu_custom_call.1} parent=0 // pred_region
    _
  $region17: #{tpu_custom_call.1} parent=0 // pred_fallthru
    _
  // Predicated region
  $region18: #{tpu_custom_call.1} parent=0 // pred_check
    _
  $region19: #{tpu_custom_call.1} parent=0 // pred_check_branch
    %23 = sbr.rel (0) target = $region21
  $region20: #{tpu_custom_call.1} parent=0 // pred_region
    _
  $region21: #{tpu_custom_call.1} parent=0 // pred_fallthru
    _
  // Predicated region
  $region22: #{tpu_custom_call.1} parent=0 // pred_check
    _
  $region23: #{tpu_custom_call.1} parent=0 // pred_check_branch
    %25 = sbr.rel (0) target = $region25
  $region24: #{tpu_custom_call.1} parent=0 // pred_region
    _
  $region25: #{tpu_custom_call.1} parent=0 // pred_fallthru
    _
  // Predicated region
  $region26: #{tpu_custom_call.1} parent=0 // pred_check
    _
  $region27: #{tpu_custom_call.1} parent=0 // pred_check_branch
    %27 = sbr.rel (0) target = $region29
  $region28: #{tpu_custom_call.1} parent=0 // pred_region
    _
  $region29: #{tpu_custom_call.1} parent=0 // pred_fallthru
    _
  // Predicated region
  $region30: #{tpu_custom_call.1} parent=0 // pred_check
    _
  $region31: #{tpu_custom_call.1} parent=0 // pred_check_branch
    %30 = sbr.rel target = $region33
  $region32: #{tpu_custom_call.1} parent=0 // pred_region
    %31 = sst [smem:[#allocation7]] [#allocation6]
    %32 = sst [smem:[#allocation8]] [#allocation5]
  $region33: #{tpu_custom_call.1} parent=0 // pred_fallthru
    _
  %34 = shalt.err (0)
  %s36 = sshll.u32 %s2, 4
  %s37 = int_to_ptr.hbm [resolvable:$true] %s36
  %s38 = sshll.u32 [#allocation2], 4
  %s39 = int_to_ptr.vmem [resolvable:$true] %s38
  %41 = dma.hbm_to_vmem [thread:$0]  %s37, 16384, %s39, [#allocation3]
  %v42 = vld [vmem:[%s0] sm:$0xff]
  %v43 = vld [vmem:[%s0 + $0x8] sm:$0xff]
  %v44 = vld [vmem:[%s1] sm:$0xff]
  %v45 = vld [vmem:[%s1 + $0x8] sm:$0xff]
  %v46 = vld [vmem:[%s1 + $0x10] sm:$0xff]
  %v47 = vld [vmem:[%s1 + $0x18] sm:$0xff]
  %v48 = vld [vmem:[%s1 + $0x20] sm:$0xff]
  %v49 = vld [vmem:[%s1 + $0x28] sm:$0xff]
  %v50 = vld [vmem:[%s1 + $0x30] sm:$0xff]
  %v51 = vld [vmem:[%s1 + $0x38] sm:$0xff]
  %v52 = vld [vmem:[%s1 + $0x40] sm:$0xff]
  %v53 = vld [vmem:[%s1 + $0x48] sm:$0xff]
  %v54 = vld [vmem:[%s1 + $0x50] sm:$0xff]
  %v55 = vld [vmem:[%s1 + $0x58] sm:$0xff]
  %v56 = vld [vmem:[%s1 + $0x60] sm:$0xff]
  %v57 = vld [vmem:[%s1 + $0x68] sm:$0xff]
  %v58 = vld [vmem:[%s1 + $0x70] sm:$0xff]
  %v59 = vld [vmem:[%s1 + $0x78] sm:$0xff]
  %v60 = vld [vmem:[%s1 + $0x80] sm:$0xff]
  %v61 = vld [vmem:[%s1 + $0x88] sm:$0xff]
  %v62 = vld [vmem:[%s1 + $0x90] sm:$0xff]
  %v63 = vld [vmem:[%s1 + $0x98] sm:$0xff]
  %v64 = vld [vmem:[%s1 + $0xa0] sm:$0xff]
  %v65 = vld [vmem:[%s1 + $0xa8] sm:$0xff]
  %v66 = vld [vmem:[%s1 + $0xb0] sm:$0xff]
  %v67 = vld [vmem:[%s1 + $0xb8] sm:$0xff]
  %v68 = vld [vmem:[%s1 + $0xc0] sm:$0xff]
  %v69 = vld [vmem:[%s1 + $0xc8] sm:$0xff]
  %v70 = vld [vmem:[%s1 + $0xd0] sm:$0xff]
  %v71 = vld [vmem:[%s1 + $0xd8] sm:$0xff]
  %v72 = vld [vmem:[%s1 + $0xe0] sm:$0xff]
  %v73 = vld [vmem:[%s1 + $0xe8] sm:$0xff]
  %v74 = vld [vmem:[%s1 + $0xf0] sm:$0xff]
  %v75 = vld [vmem:[%s1 + $0xf8] sm:$0xff]
  %v76 = vld [vmem:[%s3] sm:$0xff]
  %v78 = vperm.slane %v76, 0
  %v79 = vperm.slane %v76, 1
  %v80 = vperm.slane %v76, 2
  %v81 = vperm.slane %v76, 3
  %v82 = vperm.slane %v76, 4
  %v83 = vperm.slane %v76, 5
  %v84 = vperm.slane %v76, 6
  %v85 = vperm.slane %v76, 7
  %vm94 = vcmask 261120
  %v96 = vsel %vm94, %v42, 0
  %v99 = vsel %vm94, %v43, 0
  %101 = vmatpush.msra.mxu0 0.0
  %102 = vmatpush.msra.mxu0 0.0
  %103 = vmatpush.msra.mxu0 0.0
  %104 = vmatpush.msra.mxu0 0.0
  %105 = vmatpush.msra.mxu0 0.0
  %106 = vmatpush.msra.mxu0 0.0
  %107 = vmatpush.msra.mxu0 0.0
  %108 = vmatpush.msra.mxu0 0.0
  %109 = vmatpush.msra.mxu0 0.0
  %110 = vmatpush.msra.mxu0 0.0
  %111 = vmatpush.msra.mxu0 0.0
  %112 = vmatpush.msra.mxu0 0.0
  %113 = vmatpush.msra.mxu0 %v68
  %114 = vmatpush.msra.mxu0 %v60
  %115 = vmatpush.msra.mxu0 %v52
  %116 = vmatpush.msra.mxu0 %v44
  %117 = vmatmul.f32.gmra.mxu0 %v96
  %v118 = vpop.f32.mrf.mxu0
  %v119 = vadd.f32 %v78, %v118
  %120 = vmatmul.f32.gmra.mxu0 %v99
  %v121 = vpop.f32.mrf.mxu0
  %v122 = vadd.f32 %v78, %v121
  %123 = vdwg.mxu0
  %124 = vmatpush.msra.mxu0 0.0
  %125 = vmatpush.msra.mxu0 0.0
  %126 = vmatpush.msra.mxu0 0.0
  %127 = vmatpush.msra.mxu0 0.0
  %128 = vmatpush.msra.mxu0 0.0
  %129 = vmatpush.msra.mxu0 0.0
  %130 = vmatpush.msra.mxu0 0.0
  %131 = vmatpush.msra.mxu0 0.0
  %132 = vmatpush.msra.mxu0 0.0
  %133 = vmatpush.msra.mxu0 0.0
  %134 = vmatpush.msra.mxu0 0.0
  %135 = vmatpush.msra.mxu0 0.0
  %136 = vmatpush.msra.mxu0 %v69
  %137 = vmatpush.msra.mxu0 %v61
  %138 = vmatpush.msra.mxu0 %v53
  %139 = vmatpush.msra.mxu0 %v45
  %140 = vmatmul.f32.gmra.mxu0 %v96
  %v141 = vpop.f32.mrf.mxu0
  %v142 = vadd.f32 %v79, %v141
  %143 = vmatmul.f32.gmra.mxu0 %v99
  %v144 = vpop.f32.mrf.mxu0
  %v145 = vadd.f32 %v79, %v144
  %146 = vdwg.mxu0
  %147 = vmatpush.msra.mxu0 0.0
  %148 = vmatpush.msra.mxu0 0.0
  %149 = vmatpush.msra.mxu0 0.0
  %150 = vmatpush.msra.mxu0 0.0
  %151 = vmatpush.msra.mxu0 0.0
  %152 = vmatpush.msra.mxu0 0.0
  %153 = vmatpush.msra.mxu0 0.0
  %154 = vmatpush.msra.mxu0 0.0
  %155 = vmatpush.msra.mxu0 0.0
  %156 = vmatpush.msra.mxu0 0.0
  %157 = vmatpush.msra.mxu0 0.0
  %158 = vmatpush.msra.mxu0 0.0
  %159 = vmatpush.msra.mxu0 %v70
  %160 = vmatpush.msra.mxu0 %v62
  %161 = vmatpush.msra.mxu0 %v54
  %162 = vmatpush.msra.mxu0 %v46
  %163 = vmatmul.f32.gmra.mxu0 %v96
  %v164 = vpop.f32.mrf.mxu0
  %v165 = vadd.f32 %v80, %v164
  %166 = vmatmul.f32.gmra.mxu0 %v99
  %v167 = vpop.f32.mrf.mxu0
  %v168 = vadd.f32 %v80, %v167
  %169 = vdwg.mxu0
  %170 = vmatpush.msra.mxu0 0.0
  %171 = vmatpush.msra.mxu0 0.0
  %172 = vmatpush.msra.mxu0 0.0
  %173 = vmatpush.msra.mxu0 0.0
  %174 = vmatpush.msra.mxu0 0.0
  %175 = vmatpush.msra.mxu0 0.0
  %176 = vmatpush.msra.mxu0 0.0
  %177 = vmatpush.msra.mxu0 0.0
  %178 = vmatpush.msra.mxu0 0.0
  %179 = vmatpush.msra.mxu0 0.0
  %180 = vmatpush.msra.mxu0 0.0
  %181 = vmatpush.msra.mxu0 0.0
  %182 = vmatpush.msra.mxu0 %v71
  %183 = vmatpush.msra.mxu0 %v63
  %184 = vmatpush.msra.mxu0 %v55
  %185 = vmatpush.msra.mxu0 %v47
  %186 = vmatmul.f32.gmra.mxu0 %v96
  %v187 = vpop.f32.mrf.mxu0
  %v188 = vadd.f32 %v81, %v187
  %189 = vmatmul.f32.gmra.mxu0 %v99
  %v190 = vpop.f32.mrf.mxu0
  %v191 = vadd.f32 %v81, %v190
  %192 = vdwg.mxu0
  %193 = vmatpush.msra.mxu0 0.0
  %194 = vmatpush.msra.mxu0 0.0
  %195 = vmatpush.msra.mxu0 0.0
  %196 = vmatpush.msra.mxu0 0.0
  %197 = vmatpush.msra.mxu0 0.0
  %198 = vmatpush.msra.mxu0 0.0
  %199 = vmatpush.msra.mxu0 0.0
  %200 = vmatpush.msra.mxu0 0.0
  %201 = vmatpush.msra.mxu0 0.0
  %202 = vmatpush.msra.mxu0 0.0
  %203 = vmatpush.msra.mxu0 0.0
  %204 = vmatpush.msra.mxu0 0.0
  %205 = vmatpush.msra.mxu0 %v72
  %206 = vmatpush.msra.mxu0 %v64
  %207 = vmatpush.msra.mxu0 %v56
  %208 = vmatpush.msra.mxu0 %v48
  %209 = vmatmul.f32.gmra.mxu0 %v96
  %v210 = vpop.f32.mrf.mxu0
  %v211 = vadd.f32 %v82, %v210
  %212 = vmatmul.f32.gmra.mxu0 %v99
  %v213 = vpop.f32.mrf.mxu0
  %v214 = vadd.f32 %v82, %v213
  %215 = vdwg.mxu0
  %216 = vmatpush.msra.mxu0 0.0
  %217 = vmatpush.msra.mxu0 0.0
  %218 = vmatpush.msra.mxu0 0.0
  %219 = vmatpush.msra.mxu0 0.0
  %220 = vmatpush.msra.mxu0 0.0
  %221 = vmatpush.msra.mxu0 0.0
  %222 = vmatpush.msra.mxu0 0.0
  %223 = vmatpush.msra.mxu0 0.0
  %224 = vmatpush.msra.mxu0 0.0
  %225 = vmatpush.msra.mxu0 0.0
  %226 = vmatpush.msra.mxu0 0.0
  %227 = vmatpush.msra.mxu0 0.0
  %228 = vmatpush.msra.mxu0 %v73
  %229 = vmatpush.msra.mxu0 %v65
  %230 = vmatpush.msra.mxu0 %v57
  %231 = vmatpush.msra.mxu0 %v49
  %232 = vmatmul.f32.gmra.mxu0 %v96
  %v233 = vpop.f32.mrf.mxu0
  %v234 = vadd.f32 %v83, %v233
  %235 = vmatmul.f32.gmra.mxu0 %v99
  %v236 = vpop.f32.mrf.mxu0
  %v237 = vadd.f32 %v83, %v236
  %238 = vdwg.mxu0
  %239 = vmatpush.msra.mxu0 0.0
  %240 = vmatpush.msra.mxu0 0.0
  %241 = vmatpush.msra.mxu0 0.0
  %242 = vmatpush.msra.mxu0 0.0
  %243 = vmatpush.msra.mxu0 0.0
  %244 = vmatpush.msra.mxu0 0.0
  %245 = vmatpush.msra.mxu0 0.0
  %246 = vmatpush.msra.mxu0 0.0
  %247 = vmatpush.msra.mxu0 0.0
  %248 = vmatpush.msra.mxu0 0.0
  %249 = vmatpush.msra.mxu0 0.0
  %250 = vmatpush.msra.mxu0 0.0
  %251 = vmatpush.msra.mxu0 %v74
  %252 = vmatpush.msra.mxu0 %v66
  %253 = vmatpush.msra.mxu0 %v58
  %254 = vmatpush.msra.mxu0 %v50
  %255 = vmatmul.f32.gmra.mxu0 %v96
  %v256 = vpop.f32.mrf.mxu0
  %v257 = vadd.f32 %v84, %v256
  %258 = vmatmul.f32.gmra.mxu0 %v99
  %v259 = vpop.f32.mrf.mxu0
  %v260 = vadd.f32 %v84, %v259
  %261 = vdwg.mxu0
  %262 = vmatpush.msra.mxu0 0.0
  %263 = vmatpush.msra.mxu0 0.0
  %264 = vmatpush.msra.mxu0 0.0
  %265 = vmatpush.msra.mxu0 0.0
  %266 = vmatpush.msra.mxu0 0.0
  %267 = vmatpush.msra.mxu0 0.0
  %268 = vmatpush.msra.mxu0 0.0
  %269 = vmatpush.msra.mxu0 0.0
  %270 = vmatpush.msra.mxu0 0.0
  %271 = vmatpush.msra.mxu0 0.0
  %272 = vmatpush.msra.mxu0 0.0
  %273 = vmatpush.msra.mxu0 0.0
  %274 = vmatpush.msra.mxu0 %v75
  %275 = vmatpush.msra.mxu0 %v67
  %276 = vmatpush.msra.mxu0 %v59
  %277 = vmatpush.msra.mxu0 %v51
  %278 = vmatmul.f32.gmra.mxu0 %v96
  %v279 = vpop.f32.mrf.mxu0
  %v280 = vadd.f32 %v85, %v279
  %281 = vmatmul.f32.gmra.mxu0 %v99
  %v282 = vpop.f32.mrf.mxu0
  %v283 = vadd.f32 %v85, %v282
  %284 = vdwg.mxu0
  %s285 = smul.u32 4, 32
  %s286 = smul.u32 %s285, 8
  %s287 = sshll.u32 %s286, 4
  %288 = dma.done [#allocation3], %s287
  %v289 = vld [vmem:[#allocation2] sm:$0xff]
  %v290 = vld [vmem:[#allocation2 + $0x8] sm:$0xff]
  %v291 = vld [vmem:[#allocation2 + $0x10] sm:$0xff]
  %v292 = vld [vmem:[#allocation2 + $0x18] sm:$0xff]
  %v293 = vld [vmem:[#allocation2 + $0x20] sm:$0xff]
  %v294 = vld [vmem:[#allocation2 + $0x28] sm:$0xff]
  %v295 = vld [vmem:[#allocation2 + $0x30] sm:$0xff]
  %v296 = vld [vmem:[#allocation2 + $0x38] sm:$0xff]
  %v297 = vld [vmem:[#allocation2 + $0x40] sm:$0xff]
  %v298 = vld [vmem:[#allocation2 + $0x48] sm:$0xff]
  %v299 = vld [vmem:[#allocation2 + $0x50] sm:$0xff]
  %v300 = vld [vmem:[#allocation2 + $0x58] sm:$0xff]
  %v301 = vld [vmem:[#allocation2 + $0x60] sm:$0xff]
  %v302 = vld [vmem:[#allocation2 + $0x68] sm:$0xff]
  %v303 = vld [vmem:[#allocation2 + $0x70] sm:$0xff]
  %v304 = vld [vmem:[#allocation2 + $0x78] sm:$0xff]
  %v305 = vld [vmem:[#allocation2 + $0x80] sm:$0xff]
  %v306 = vld [vmem:[#allocation2 + $0x88] sm:$0xff]
  %v307 = vld [vmem:[#allocation2 + $0x90] sm:$0xff]
  %v308 = vld [vmem:[#allocation2 + $0x98] sm:$0xff]
  %v309 = vld [vmem:[#allocation2 + $0xa0] sm:$0xff]
  %v310 = vld [vmem:[#allocation2 + $0xa8] sm:$0xff]
  %v311 = vld [vmem:[#allocation2 + $0xb0] sm:$0xff]
  %v312 = vld [vmem:[#allocation2 + $0xb8] sm:$0xff]
  %v313 = vld [vmem:[#allocation2 + $0xc0] sm:$0xff]
  %v314 = vld [vmem:[#allocation2 + $0xc8] sm:$0xff]
  %v315 = vld [vmem:[#allocation2 + $0xd0] sm:$0xff]
  %v316 = vld [vmem:[#allocation2 + $0xd8] sm:$0xff]
  %v317 = vld [vmem:[#allocation2 + $0xe0] sm:$0xff]
  %v318 = vld [vmem:[#allocation2 + $0xe8] sm:$0xff]
  %v319 = vld [vmem:[#allocation2 + $0xf0] sm:$0xff]
  %v320 = vld [vmem:[#allocation2 + $0xf8] sm:$0xff]
  %v321 = vld [vmem:[#allocation2 + $0x100] sm:$0xff]
  %v322 = vld [vmem:[#allocation2 + $0x108] sm:$0xff]
  %v323 = vld [vmem:[#allocation2 + $0x110] sm:$0xff]
  %v324 = vld [vmem:[#allocation2 + $0x118] sm:$0xff]
  %v325 = vld [vmem:[#allocation2 + $0x120] sm:$0xff]
  %v326 = vld [vmem:[#allocation2 + $0x128] sm:$0xff]
  %v327 = vld [vmem:[#allocation2 + $0x130] sm:$0xff]
  %v328 = vld [vmem:[#allocation2 + $0x138] sm:$0xff]
  %v329 = vld [vmem:[#allocation2 + $0x140] sm:$0xff]
  %v330 = vld [vmem:[#allocation2 + $0x148] sm:$0xff]
  %v331 = vld [vmem:[#allocation2 + $0x150] sm:$0xff]
  %v332 = vld [vmem:[#allocation2 + $0x158] sm:$0xff]
  %v333 = vld [vmem:[#allocation2 + $0x160] sm:$0xff]
  %v334 = vld [vmem:[#allocation2 + $0x168] sm:$0xff]
  %v335 = vld [vmem:[#allocation2 + $0x170] sm:$0xff]
  %v336 = vld [vmem:[#allocation2 + $0x178] sm:$0xff]
  %v337 = vld [vmem:[#allocation2 + $0x180] sm:$0xff]
  %v338 = vld [vmem:[#allocation2 + $0x188] sm:$0xff]
  %v339 = vld [vmem:[#allocation2 + $0x190] sm:$0xff]
  %v340 = vld [vmem:[#allocation2 + $0x198] sm:$0xff]
  %v341 = vld [vmem:[#allocation2 + $0x1a0] sm:$0xff]
  %v342 = vld [vmem:[#allocation2 + $0x1a8] sm:$0xff]
  %v343 = vld [vmem:[#allocation2 + $0x1b0] sm:$0xff]
  %v344 = vld [vmem:[#allocation2 + $0x1b8] sm:$0xff]
  %v345 = vld [vmem:[#allocation2 + $0x1c0] sm:$0xff]
  %v346 = vld [vmem:[#allocation2 + $0x1c8] sm:$0xff]
  %v347 = vld [vmem:[#allocation2 + $0x1d0] sm:$0xff]
  %v348 = vld [vmem:[#allocation2 + $0x1d8] sm:$0xff]
  %v349 = vld [vmem:[#allocation2 + $0x1e0] sm:$0xff]
  %v350 = vld [vmem:[#allocation2 + $0x1e8] sm:$0xff]
  %v351 = vld [vmem:[#allocation2 + $0x1f0] sm:$0xff]
  %v352 = vld [vmem:[#allocation2 + $0x1f8] sm:$0xff]
  %v353 = vld [vmem:[#allocation2 + $0x200] sm:$0xff]
  %v354 = vld [vmem:[#allocation2 + $0x208] sm:$0xff]
  %v355 = vld [vmem:[#allocation2 + $0x210] sm:$0xff]
  %v356 = vld [vmem:[#allocation2 + $0x218] sm:$0xff]
  %v357 = vld [vmem:[#allocation2 + $0x220] sm:$0xff]
  %v358 = vld [vmem:[#allocation2 + $0x228] sm:$0xff]
  %v359 = vld [vmem:[#allocation2 + $0x230] sm:$0xff]
  %v360 = vld [vmem:[#allocation2 + $0x238] sm:$0xff]
  %v361 = vld [vmem:[#allocation2 + $0x240] sm:$0xff]
  %v362 = vld [vmem:[#allocation2 + $0x248] sm:$0xff]
  %v363 = vld [vmem:[#allocation2 + $0x250] sm:$0xff]
  %v364 = vld [vmem:[#allocation2 + $0x258] sm:$0xff]
  %v365 = vld [vmem:[#allocation2 + $0x260] sm:$0xff]
  %v366 = vld [vmem:[#allocation2 + $0x268] sm:$0xff]
  %v367 = vld [vmem:[#allocation2 + $0x270] sm:$0xff]
  %v368 = vld [vmem:[#allocation2 + $0x278] sm:$0xff]
  %v369 = vld [vmem:[#allocation2 + $0x280] sm:$0xff]
  %v370 = vld [vmem:[#allocation2 + $0x288] sm:$0xff]
  %v371 = vld [vmem:[#allocation2 + $0x290] sm:$0xff]
  %v372 = vld [vmem:[#allocation2 + $0x298] sm:$0xff]
  %v373 = vld [vmem:[#allocation2 + $0x2a0] sm:$0xff]
  %v374 = vld [vmem:[#allocation2 + $0x2a8] sm:$0xff]
  %v375 = vld [vmem:[#allocation2 + $0x2b0] sm:$0xff]
  %v376 = vld [vmem:[#allocation2 + $0x2b8] sm:$0xff]
  %v377 = vld [vmem:[#allocation2 + $0x2c0] sm:$0xff]
  %v378 = vld [vmem:[#allocation2 + $0x2c8] sm:$0xff]
  %v379 = vld [vmem:[#allocation2 + $0x2d0] sm:$0xff]
  %v380 = vld [vmem:[#allocation2 + $0x2d8] sm:$0xff]
  %v381 = vld [vmem:[#allocation2 + $0x2e0] sm:$0xff]
  %v382 = vld [vmem:[#allocation2 + $0x2e8] sm:$0xff]
  %v383 = vld [vmem:[#allocation2 + $0x2f0] sm:$0xff]
  %v384 = vld [vmem:[#allocation2 + $0x2f8] sm:$0xff]
  %v385 = vld [vmem:[#allocation2 + $0x300] sm:$0xff]
  %v386 = vld [vmem:[#allocation2 + $0x308] sm:$0xff]
  %v387 = vld [vmem:[#allocation2 + $0x310] sm:$0xff]
  %v388 = vld [vmem:[#allocation2 + $0x318] sm:$0xff]
  %v389 = vld [vmem:[#allocation2 + $0x320] sm:$0xff]
  %v390 = vld [vmem:[#allocation2 + $0x328] sm:$0xff]
  %v391 = vld [vmem:[#allocation2 + $0x330] sm:$0xff]
  %v392 = vld [vmem:[#allocation2 + $0x338] sm:$0xff]
  %v393 = vld [vmem:[#allocation2 + $0x340] sm:$0xff]
  %v394 = vld [vmem:[#allocation2 + $0x348] sm:$0xff]
  %v395 = vld [vmem:[#allocation2 + $0x350] sm:$0xff]
  %v396 = vld [vmem:[#allocation2 + $0x358] sm:$0xff]
  %v397 = vld [vmem:[#allocation2 + $0x360] sm:$0xff]
  %v398 = vld [vmem:[#allocation2 + $0x368] sm:$0xff]
  %v399 = vld [vmem:[#allocation2 + $0x370] sm:$0xff]
  %v400 = vld [vmem:[#allocation2 + $0x378] sm:$0xff]
  %v401 = vld [vmem:[#allocation2 + $0x380] sm:$0xff]
  %v402 = vld [vmem:[#allocation2 + $0x388] sm:$0xff]
  %v403 = vld [vmem:[#allocation2 + $0x390] sm:$0xff]
  %v404 = vld [vmem:[#allocation2 + $0x398] sm:$0xff]
  %v405 = vld [vmem:[#allocation2 + $0x3a0] sm:$0xff]
  %v406 = vld [vmem:[#allocation2 + $0x3a8] sm:$0xff]
  %v407 = vld [vmem:[#allocation2 + $0x3b0] sm:$0xff]
  %v408 = vld [vmem:[#allocation2 + $0x3b8] sm:$0xff]
  %v409 = vld [vmem:[#allocation2 + $0x3c0] sm:$0xff]
  %v410 = vld [vmem:[#allocation2 + $0x3c8] sm:$0xff]
  %v411 = vld [vmem:[#allocation2 + $0x3d0] sm:$0xff]
  %v412 = vld [vmem:[#allocation2 + $0x3d8] sm:$0xff]
  %v413 = vld [vmem:[#allocation2 + $0x3e0] sm:$0xff]
  %v414 = vld [vmem:[#allocation2 + $0x3e8] sm:$0xff]
  %v415 = vld [vmem:[#allocation2 + $0x3f0] sm:$0xff]
  %v416 = vld [vmem:[#allocation2 + $0x3f8] sm:$0xff]
  %v545 = vunpack.c.l.b16 %v289
  %v546 = vunpack.c.h.b16 %v289
  %v547 = vunpack.c.l.b16 %v290
  %v548 = vunpack.c.h.b16 %v290
  %v549 = vunpack.c.l.b16 %v291
  %v550 = vunpack.c.h.b16 %v291
  %v551 = vunpack.c.l.b16 %v292
  %v552 = vunpack.c.h.b16 %v292
  %v553 = vunpack.c.l.b16 %v293
  %v554 = vunpack.c.h.b16 %v293
  %v555 = vunpack.c.l.b16 %v294
  %v556 = vunpack.c.h.b16 %v294
  %v557 = vunpack.c.l.b16 %v295
  %v558 = vunpack.c.h.b16 %v295
  %v559 = vunpack.c.l.b16 %v296
  %v560 = vunpack.c.h.b16 %v296
  %v561 = vunpack.c.l.b16 %v297
  %v562 = vunpack.c.h.b16 %v297
  %v563 = vunpack.c.l.b16 %v298
  %v564 = vunpack.c.h.b16 %v298
  %v565 = vunpack.c.l.b16 %v299
  %v566 = vunpack.c.h.b16 %v299
  %v567 = vunpack.c.l.b16 %v300
  %v568 = vunpack.c.h.b16 %v300
  %v569 = vunpack.c.l.b16 %v301
  %v570 = vunpack.c.h.b16 %v301
  %v571 = vunpack.c.l.b16 %v302
  %v572 = vunpack.c.h.b16 %v302
  %v573 = vunpack.c.l.b16 %v303
  %v574 = vunpack.c.h.b16 %v303
  %v575 = vunpack.c.l.b16 %v304
  %v576 = vunpack.c.h.b16 %v304
  %v577 = vunpack.c.l.b16 %v305
  %v578 = vunpack.c.h.b16 %v305
  %v579 = vunpack.c.l.b16 %v306
  %v580 = vunpack.c.h.b16 %v306
  %v581 = vunpack.c.l.b16 %v307
  %v582 = vunpack.c.h.b16 %v307
  %v583 = vunpack.c.l.b16 %v308
  %v584 = vunpack.c.h.b16 %v308
  %v585 = vunpack.c.l.b16 %v309
  %v586 = vunpack.c.h.b16 %v309
  %v587 = vunpack.c.l.b16 %v310
  %v588 = vunpack.c.h.b16 %v310
  %v589 = vunpack.c.l.b16 %v311
  %v590 = vunpack.c.h.b16 %v311
  %v591 = vunpack.c.l.b16 %v312
  %v592 = vunpack.c.h.b16 %v312
  %v593 = vunpack.c.l.b16 %v313
  %v594 = vunpack.c.h.b16 %v313
  %v595 = vunpack.c.l.b16 %v314
  %v596 = vunpack.c.h.b16 %v314
  %v597 = vunpack.c.l.b16 %v315
  %v598 = vunpack.c.h.b16 %v315
  %v599 = vunpack.c.l.b16 %v316
  %v600 = vunpack.c.h.b16 %v316
  %v601 = vunpack.c.l.b16 %v317
  %v602 = vunpack.c.h.b16 %v317
  %v603 = vunpack.c.l.b16 %v318
  %v604 = vunpack.c.h.b16 %v318
  %v605 = vunpack.c.l.b16 %v319
  %v606 = vunpack.c.h.b16 %v319
  %v607 = vunpack.c.l.b16 %v320
  %v608 = vunpack.c.h.b16 %v320
  %v609 = vunpack.c.l.b16 %v321
  %v610 = vunpack.c.h.b16 %v321
  %v611 = vunpack.c.l.b16 %v322
  %v612 = vunpack.c.h.b16 %v322
  %v613 = vunpack.c.l.b16 %v323
  %v614 = vunpack.c.h.b16 %v323
  %v615 = vunpack.c.l.b16 %v324
  %v616 = vunpack.c.h.b16 %v324
  %v617 = vunpack.c.l.b16 %v325
  %v618 = vunpack.c.h.b16 %v325
  %v619 = vunpack.c.l.b16 %v326
  %v620 = vunpack.c.h.b16 %v326
  %v621 = vunpack.c.l.b16 %v327
  %v622 = vunpack.c.h.b16 %v327
  %v623 = vunpack.c.l.b16 %v328
  %v624 = vunpack.c.h.b16 %v328
  %v625 = vunpack.c.l.b16 %v329
  %v626 = vunpack.c.h.b16 %v329
  %v627 = vunpack.c.l.b16 %v330
  %v628 = vunpack.c.h.b16 %v330
  %v629 = vunpack.c.l.b16 %v331
  %v630 = vunpack.c.h.b16 %v331
  %v631 = vunpack.c.l.b16 %v332
  %v632 = vunpack.c.h.b16 %v332
  %v633 = vunpack.c.l.b16 %v333
  %v634 = vunpack.c.h.b16 %v333
  %v635 = vunpack.c.l.b16 %v334
  %v636 = vunpack.c.h.b16 %v334
  %v637 = vunpack.c.l.b16 %v335
  %v638 = vunpack.c.h.b16 %v335
  %v639 = vunpack.c.l.b16 %v336
  %v640 = vunpack.c.h.b16 %v336
  %v641 = vunpack.c.l.b16 %v337
  %v642 = vunpack.c.h.b16 %v337
  %v643 = vunpack.c.l.b16 %v338
  %v644 = vunpack.c.h.b16 %v338
  %v645 = vunpack.c.l.b16 %v339
  %v646 = vunpack.c.h.b16 %v339
  %v647 = vunpack.c.l.b16 %v340
  %v648 = vunpack.c.h.b16 %v340
  %v649 = vunpack.c.l.b16 %v341
  %v650 = vunpack.c.h.b16 %v341
  %v651 = vunpack.c.l.b16 %v342
  %v652 = vunpack.c.h.b16 %v342
  %v653 = vunpack.c.l.b16 %v343
  %v654 = vunpack.c.h.b16 %v343
  %v655 = vunpack.c.l.b16 %v344
  %v656 = vunpack.c.h.b16 %v344
  %v657 = vunpack.c.l.b16 %v345
  %v658 = vunpack.c.h.b16 %v345
  %v659 = vunpack.c.l.b16 %v346
  %v660 = vunpack.c.h.b16 %v346
  %v661 = vunpack.c.l.b16 %v347
  %v662 = vunpack.c.h.b16 %v347
  %v663 = vunpack.c.l.b16 %v348
  %v664 = vunpack.c.h.b16 %v348
  %v665 = vunpack.c.l.b16 %v349
  %v666 = vunpack.c.h.b16 %v349
  %v667 = vunpack.c.l.b16 %v350
  %v668 = vunpack.c.h.b16 %v350
  %v669 = vunpack.c.l.b16 %v351
  %v670 = vunpack.c.h.b16 %v351
  %v671 = vunpack.c.l.b16 %v352
  %v672 = vunpack.c.h.b16 %v352
  %v673 = vunpack.c.l.b16 %v353
  %v674 = vunpack.c.h.b16 %v353
  %v675 = vunpack.c.l.b16 %v354
  %v676 = vunpack.c.h.b16 %v354
  %v677 = vunpack.c.l.b16 %v355
  %v678 = vunpack.c.h.b16 %v355
  %v679 = vunpack.c.l.b16 %v356
  %v680 = vunpack.c.h.b16 %v356
  %v681 = vunpack.c.l.b16 %v357
  %v682 = vunpack.c.h.b16 %v357
  %v683 = vunpack.c.l.b16 %v358
  %v684 = vunpack.c.h.b16 %v358
  %v685 = vunpack.c.l.b16 %v359
  %v686 = vunpack.c.h.b16 %v359
  %v687 = vunpack.c.l.b16 %v360
  %v688 = vunpack.c.h.b16 %v360
  %v689 = vunpack.c.l.b16 %v361
  %v690 = vunpack.c.h.b16 %v361
  %v691 = vunpack.c.l.b16 %v362
  %v692 = vunpack.c.h.b16 %v362
  %v693 = vunpack.c.l.b16 %v363
  %v694 = vunpack.c.h.b16 %v363
  %v695 = vunpack.c.l.b16 %v364
  %v696 = vunpack.c.h.b16 %v364
  %v697 = vunpack.c.l.b16 %v365
  %v698 = vunpack.c.h.b16 %v365
  %v699 = vunpack.c.l.b16 %v366
  %v700 = vunpack.c.h.b16 %v366
  %v701 = vunpack.c.l.b16 %v367
  %v702 = vunpack.c.h.b16 %v367
  %v703 = vunpack.c.l.b16 %v368
  %v704 = vunpack.c.h.b16 %v368
  %v705 = vunpack.c.l.b16 %v369
  %v706 = vunpack.c.h.b16 %v369
  %v707 = vunpack.c.l.b16 %v370
  %v708 = vunpack.c.h.b16 %v370
  %v709 = vunpack.c.l.b16 %v371
  %v710 = vunpack.c.h.b16 %v371
  %v711 = vunpack.c.l.b16 %v372
  %v712 = vunpack.c.h.b16 %v372
  %v713 = vunpack.c.l.b16 %v373
  %v714 = vunpack.c.h.b16 %v373
  %v715 = vunpack.c.l.b16 %v374
  %v716 = vunpack.c.h.b16 %v374
  %v717 = vunpack.c.l.b16 %v375
  %v718 = vunpack.c.h.b16 %v375
  %v719 = vunpack.c.l.b16 %v376
  %v720 = vunpack.c.h.b16 %v376
  %v721 = vunpack.c.l.b16 %v377
  %v722 = vunpack.c.h.b16 %v377
  %v723 = vunpack.c.l.b16 %v378
  %v724 = vunpack.c.h.b16 %v378
  %v725 = vunpack.c.l.b16 %v379
  %v726 = vunpack.c.h.b16 %v379
  %v727 = vunpack.c.l.b16 %v380
  %v728 = vunpack.c.h.b16 %v380
  %v729 = vunpack.c.l.b16 %v381
  %v730 = vunpack.c.h.b16 %v381
  %v731 = vunpack.c.l.b16 %v382
  %v732 = vunpack.c.h.b16 %v382
  %v733 = vunpack.c.l.b16 %v383
  %v734 = vunpack.c.h.b16 %v383
  %v735 = vunpack.c.l.b16 %v384
  %v736 = vunpack.c.h.b16 %v384
  %v737 = vunpack.c.l.b16 %v385
  %v738 = vunpack.c.h.b16 %v385
  %v739 = vunpack.c.l.b16 %v386
  %v740 = vunpack.c.h.b16 %v386
  %v741 = vunpack.c.l.b16 %v387
  %v742 = vunpack.c.h.b16 %v387
  %v743 = vunpack.c.l.b16 %v388
  %v744 = vunpack.c.h.b16 %v388
  %v745 = vunpack.c.l.b16 %v389
  %v746 = vunpack.c.h.b16 %v389
  %v747 = vunpack.c.l.b16 %v390
  %v748 = vunpack.c.h.b16 %v390
  %v749 = vunpack.c.l.b16 %v391
  %v750 = vunpack.c.h.b16 %v391
  %v751 = vunpack.c.l.b16 %v392
  %v752 = vunpack.c.h.b16 %v392
  %v753 = vunpack.c.l.b16 %v393
  %v754 = vunpack.c.h.b16 %v393
  %v755 = vunpack.c.l.b16 %v394
  %v756 = vunpack.c.h.b16 %v394
  %v757 = vunpack.c.l.b16 %v395
  %v758 = vunpack.c.h.b16 %v395
  %v759 = vunpack.c.l.b16 %v396
  %v760 = vunpack.c.h.b16 %v396
  %v761 = vunpack.c.l.b16 %v397
  %v762 = vunpack.c.h.b16 %v397
  %v763 = vunpack.c.l.b16 %v398
  %v764 = vunpack.c.h.b16 %v398
  %v765 = vunpack.c.l.b16 %v399
  %v766 = vunpack.c.h.b16 %v399
  %v767 = vunpack.c.l.b16 %v400
  %v768 = vunpack.c.h.b16 %v400
  %v769 = vunpack.c.l.b16 %v401
  %v770 = vunpack.c.h.b16 %v401
  %v771 = vunpack.c.l.b16 %v402
  %v772 = vunpack.c.h.b16 %v402
  %v773 = vunpack.c.l.b16 %v403
  %v774 = vunpack.c.h.b16 %v403
  %v775 = vunpack.c.l.b16 %v404
  %v776 = vunpack.c.h.b16 %v404
  %v777 = vunpack.c.l.b16 %v405
  %v778 = vunpack.c.h.b16 %v405
  %v779 = vunpack.c.l.b16 %v406
  %v780 = vunpack.c.h.b16 %v406
  %v781 = vunpack.c.l.b16 %v407
  %v782 = vunpack.c.h.b16 %v407
  %v783 = vunpack.c.l.b16 %v408
  %v784 = vunpack.c.h.b16 %v408
  %v785 = vunpack.c.l.b16 %v409
  %v786 = vunpack.c.h.b16 %v409
  %v787 = vunpack.c.l.b16 %v410
  %v788 = vunpack.c.h.b16 %v410
  %v789 = vunpack.c.l.b16 %v411
  %v790 = vunpack.c.h.b16 %v411
  %v791 = vunpack.c.l.b16 %v412
  %v792 = vunpack.c.h.b16 %v412
  %v793 = vunpack.c.l.b16 %v413
  %v794 = vunpack.c.h.b16 %v413
  %v795 = vunpack.c.l.b16 %v414
  %v796 = vunpack.c.h.b16 %v414
  %v797 = vunpack.c.l.b16 %v415
  %v798 = vunpack.c.h.b16 %v415
  %v799 = vunpack.c.l.b16 %v416
  %v800 = vunpack.c.h.b16 %v416
  %v801 = vpack.c.b16 %v553, %v545
  %v802 = vpack.c.b16 %v554, %v546
  %v803 = vpack.c.b16 %v555, %v547
  %v804 = vpack.c.b16 %v556, %v548
  %v805 = vpack.c.b16 %v557, %v549
  %v806 = vpack.c.b16 %v558, %v550
  %v807 = vpack.c.b16 %v559, %v551
  %v808 = vpack.c.b16 %v560, %v552
  %v809 = vpack.c.b16 %v569, %v561
  %v810 = vpack.c.b16 %v570, %v562
  %v811 = vpack.c.b16 %v571, %v563
  %v812 = vpack.c.b16 %v572, %v564
  %v813 = vpack.c.b16 %v573, %v565
  %v814 = vpack.c.b16 %v574, %v566
  %v815 = vpack.c.b16 %v575, %v567
  %v816 = vpack.c.b16 %v576, %v568
  %v817 = vpack.c.b16 %v585, %v577
  %v818 = vpack.c.b16 %v586, %v578
  %v819 = vpack.c.b16 %v587, %v579
  %v820 = vpack.c.b16 %v588, %v580
  %v821 = vpack.c.b16 %v589, %v581
  %v822 = vpack.c.b16 %v590, %v582
  %v823 = vpack.c.b16 %v591, %v583
  %v824 = vpack.c.b16 %v592, %v584
  %v825 = vpack.c.b16 %v601, %v593
  %v826 = vpack.c.b16 %v602, %v594
  %v827 = vpack.c.b16 %v603, %v595
  %v828 = vpack.c.b16 %v604, %v596
  %v829 = vpack.c.b16 %v605, %v597
  %v830 = vpack.c.b16 %v606, %v598
  %v831 = vpack.c.b16 %v607, %v599
  %v832 = vpack.c.b16 %v608, %v600
  %v833 = vpack.c.b16 %v617, %v609
  %v834 = vpack.c.b16 %v618, %v610
  %v835 = vpack.c.b16 %v619, %v611
  %v836 = vpack.c.b16 %v620, %v612
  %v837 = vpack.c.b16 %v621, %v613
  %v838 = vpack.c.b16 %v622, %v614
  %v839 = vpack.c.b16 %v623, %v615
  %v840 = vpack.c.b16 %v624, %v616
  %v841 = vpack.c.b16 %v633, %v625
  %v842 = vpack.c.b16 %v634, %v626
  %v843 = vpack.c.b16 %v635, %v627
  %v844 = vpack.c.b16 %v636, %v628
  %v845 = vpack.c.b16 %v637, %v629
  %v846 = vpack.c.b16 %v638, %v630
  %v847 = vpack.c.b16 %v639, %v631
  %v848 = vpack.c.b16 %v640, %v632
  %v849 = vpack.c.b16 %v649, %v641
  %v850 = vpack.c.b16 %v650, %v642
  %v851 = vpack.c.b16 %v651, %v643
  %v852 = vpack.c.b16 %v652, %v644
  %v853 = vpack.c.b16 %v653, %v645
  %v854 = vpack.c.b16 %v654, %v646
  %v855 = vpack.c.b16 %v655, %v647
  %v856 = vpack.c.b16 %v656, %v648
  %v857 = vpack.c.b16 %v665, %v657
  %v858 = vpack.c.b16 %v666, %v658
  %v859 = vpack.c.b16 %v667, %v659
  %v860 = vpack.c.b16 %v668, %v660
  %v861 = vpack.c.b16 %v669, %v661
  %v862 = vpack.c.b16 %v670, %v662
  %v863 = vpack.c.b16 %v671, %v663
  %v864 = vpack.c.b16 %v672, %v664
  %v865 = vpack.c.b16 %v681, %v673
  %v866 = vpack.c.b16 %v682, %v674
  %v867 = vpack.c.b16 %v683, %v675
  %v868 = vpack.c.b16 %v684, %v676
  %v869 = vpack.c.b16 %v685, %v677
  %v870 = vpack.c.b16 %v686, %v678
  %v871 = vpack.c.b16 %v687, %v679
  %v872 = vpack.c.b16 %v688, %v680
  %v873 = vpack.c.b16 %v697, %v689
  %v874 = vpack.c.b16 %v698, %v690
  %v875 = vpack.c.b16 %v699, %v691
  %v876 = vpack.c.b16 %v700, %v692
  %v877 = vpack.c.b16 %v701, %v693
  %v878 = vpack.c.b16 %v702, %v694
  %v879 = vpack.c.b16 %v703, %v695
  %v880 = vpack.c.b16 %v704, %v696
  %v881 = vpack.c.b16 %v713, %v705
  %v882 = vpack.c.b16 %v714, %v706
  %v883 = vpack.c.b16 %v715, %v707
  %v884 = vpack.c.b16 %v716, %v708
  %v885 = vpack.c.b16 %v717, %v709
  %v886 = vpack.c.b16 %v718, %v710
  %v887 = vpack.c.b16 %v719, %v711
  %v888 = vpack.c.b16 %v720, %v712
  %v889 = vpack.c.b16 %v729, %v721
  %v890 = vpack.c.b16 %v730, %v722
  %v891 = vpack.c.b16 %v731, %v723
  %v892 = vpack.c.b16 %v732, %v724
  %v893 = vpack.c.b16 %v733, %v725
  %v894 = vpack.c.b16 %v734, %v726
  %v895 = vpack.c.b16 %v735, %v727
  %v896 = vpack.c.b16 %v736, %v728
  %v897 = vpack.c.b16 %v745, %v737
  %v898 = vpack.c.b16 %v746, %v738
  %v899 = vpack.c.b16 %v747, %v739
  %v900 = vpack.c.b16 %v748, %v740
  %v901 = vpack.c.b16 %v749, %v741
  %v902 = vpack.c.b16 %v750, %v742
  %v903 = vpack.c.b16 %v751, %v743
  %v904 = vpack.c.b16 %v752, %v744
  %v905 = vpack.c.b16 %v761, %v753
  %v906 = vpack.c.b16 %v762, %v754
  %v907 = vpack.c.b16 %v763, %v755
  %v908 = vpack.c.b16 %v764, %v756
  %v909 = vpack.c.b16 %v765, %v757
  %v910 = vpack.c.b16 %v766, %v758
  %v911 = vpack.c.b16 %v767, %v759
  %v912 = vpack.c.b16 %v768, %v760
  %v913 = vpack.c.b16 %v777, %v769
  %v914 = vpack.c.b16 %v778, %v770
  %v915 = vpack.c.b16 %v779, %v771
  %v916 = vpack.c.b16 %v780, %v772
  %v917 = vpack.c.b16 %v781, %v773
  %v918 = vpack.c.b16 %v782, %v774
  %v919 = vpack.c.b16 %v783, %v775
  %v920 = vpack.c.b16 %v784, %v776
  %v921 = vpack.c.b16 %v793, %v785
  %v922 = vpack.c.b16 %v794, %v786
  %v923 = vpack.c.b16 %v795, %v787
  %v924 = vpack.c.b16 %v796, %v788
  %v925 = vpack.c.b16 %v797, %v789
  %v926 = vpack.c.b16 %v798, %v790
  %v927 = vpack.c.b16 %v799, %v791
  %v928 = vpack.c.b16 %v800, %v792
  %1057 = vmatpush.bf16.msra.mxu0 %v857
  %1058 = vmatpush.bf16.msra.mxu0 %v849
  %1059 = vmatpush.bf16.msra.mxu0 %v841
  %1060 = vmatpush.bf16.msra.mxu0 %v833
  %1061 = vmatpush.bf16.msra.mxu0 %v825
  %1062 = vmatpush.bf16.msra.mxu0 %v817
  %1063 = vmatpush.bf16.msra.mxu0 %v809
  %1064 = vmatpush.bf16.msra.mxu0 %v801
  %1065 = vmatmul.bf16.gmra.mxu0 0
  %v1066 = vpop.f32.mrf.mxu0
  %v1067 = vadd.f32 0.0, %v1066
  %v1068 = vpop.f32.mrf.mxu0
  %1069 = vdwg.mxu0
  %1070 = vmatpush.bf16.msra.mxu0 %v921
  %1071 = vmatpush.bf16.msra.mxu0 %v913
  %1072 = vmatpush.bf16.msra.mxu0 %v905
  %1073 = vmatpush.bf16.msra.mxu0 %v897
  %1074 = vmatpush.bf16.msra.mxu0 %v889
  %1075 = vmatpush.bf16.msra.mxu0 %v881
  %1076 = vmatpush.bf16.msra.mxu0 %v873
  %1077 = vmatpush.bf16.msra.mxu0 %v865
  %1078 = vmatmul.bf16.gmra.mxu0 0
  %v1079 = vpop.f32.mrf.mxu0
  %v1080 = vadd.f32 %v1067, %v1079
  %v1081 = vpop.f32.mrf.mxu0
  %1082 = vdwg.mxu0
  %1083 = vmatpush.bf16.msra.mxu0 %v858
  %1084 = vmatpush.bf16.msra.mxu0 %v850
  %1085 = vmatpush.bf16.msra.mxu0 %v842
  %1086 = vmatpush.bf16.msra.mxu0 %v834
  %1087 = vmatpush.bf16.msra.mxu0 %v826
  %1088 = vmatpush.bf16.msra.mxu0 %v818
  %1089 = vmatpush.bf16.msra.mxu0 %v810
  %1090 = vmatpush.bf16.msra.mxu0 %v802
  %1091 = vmatmul.bf16.gmra.mxu0 0
  %v1092 = vpop.f32.mrf.mxu0
  %v1093 = vadd.f32 0.0, %v1092
  %v1094 = vpop.f32.mrf.mxu0
  %1095 = vdwg.mxu0
  %1096 = vmatpush.bf16.msra.mxu0 %v922
  %1097 = vmatpush.bf16.msra.mxu0 %v914
  %1098 = vmatpush.bf16.msra.mxu0 %v906
  %1099 = vmatpush.bf16.msra.mxu0 %v898
  %1100 = vmatpush.bf16.msra.mxu0 %v890
  %1101 = vmatpush.bf16.msra.mxu0 %v882
  %1102 = vmatpush.bf16.msra.mxu0 %v874
  %1103 = vmatpush.bf16.msra.mxu0 %v866
  %1104 = vmatmul.bf16.gmra.mxu0 0
  %v1105 = vpop.f32.mrf.mxu0
  %v1106 = vadd.f32 %v1093, %v1105
  %v1107 = vpop.f32.mrf.mxu0
  %1108 = vdwg.mxu0
  %1109 = vmatpush.bf16.msra.mxu0 %v859
  %1110 = vmatpush.bf16.msra.mxu0 %v851
  %1111 = vmatpush.bf16.msra.mxu0 %v843
  %1112 = vmatpush.bf16.msra.mxu0 %v835
  %1113 = vmatpush.bf16.msra.mxu0 %v827
  %1114 = vmatpush.bf16.msra.mxu0 %v819
  %1115 = vmatpush.bf16.msra.mxu0 %v811
  %1116 = vmatpush.bf16.msra.mxu0 %v803
  %1117 = vmatmul.bf16.gmra.mxu0 0
  %v1118 = vpop.f32.mrf.mxu0
  %v1119 = vadd.f32 0.0, %v1118
  %v1120 = vpop.f32.mrf.mxu0
  %1121 = vdwg.mxu0
  %1122 = vmatpush.bf16.msra.mxu0 %v923
  %1123 = vmatpush.bf16.msra.mxu0 %v915
  %1124 = vmatpush.bf16.msra.mxu0 %v907
  %1125 = vmatpush.bf16.msra.mxu0 %v899
  %1126 = vmatpush.bf16.msra.mxu0 %v891
  %1127 = vmatpush.bf16.msra.mxu0 %v883
  %1128 = vmatpush.bf16.msra.mxu0 %v875
  %1129 = vmatpush.bf16.msra.mxu0 %v867
  %1130 = vmatmul.bf16.gmra.mxu0 0
  %v1131 = vpop.f32.mrf.mxu0
  %v1132 = vadd.f32 %v1119, %v1131
  %v1133 = vpop.f32.mrf.mxu0
  %1134 = vdwg.mxu0
  %1135 = vmatpush.bf16.msra.mxu0 %v860
  %1136 = vmatpush.bf16.msra.mxu0 %v852
  %1137 = vmatpush.bf16.msra.mxu0 %v844
  %1138 = vmatpush.bf16.msra.mxu0 %v836
  %1139 = vmatpush.bf16.msra.mxu0 %v828
  %1140 = vmatpush.bf16.msra.mxu0 %v820
  %1141 = vmatpush.bf16.msra.mxu0 %v812
  %1142 = vmatpush.bf16.msra.mxu0 %v804
  %1143 = vmatmul.bf16.gmra.mxu0 0
  %v1144 = vpop.f32.mrf.mxu0
  %v1145 = vadd.f32 0.0, %v1144
  %v1146 = vpop.f32.mrf.mxu0
  %1147 = vdwg.mxu0
  %1148 = vmatpush.bf16.msra.mxu0 %v924
  %1149 = vmatpush.bf16.msra.mxu0 %v916
  %1150 = vmatpush.bf16.msra.mxu0 %v908
  %1151 = vmatpush.bf16.msra.mxu0 %v900
  %1152 = vmatpush.bf16.msra.mxu0 %v892
  %1153 = vmatpush.bf16.msra.mxu0 %v884
  %1154 = vmatpush.bf16.msra.mxu0 %v876
  %1155 = vmatpush.bf16.msra.mxu0 %v868
  %1156 = vmatmul.bf16.gmra.mxu0 0
  %v1157 = vpop.f32.mrf.mxu0
  %v1158 = vadd.f32 %v1145, %v1157
  %v1159 = vpop.f32.mrf.mxu0
  %1160 = vdwg.mxu0
  %1161 = vmatpush.bf16.msra.mxu0 %v861
  %1162 = vmatpush.bf16.msra.mxu0 %v853
  %1163 = vmatpush.bf16.msra.mxu0 %v845
  %1164 = vmatpush.bf16.msra.mxu0 %v837
  %1165 = vmatpush.bf16.msra.mxu0 %v829
  %1166 = vmatpush.bf16.msra.mxu0 %v821
  %1167 = vmatpush.bf16.msra.mxu0 %v813
  %1168 = vmatpush.bf16.msra.mxu0 %v805
  %1169 = vmatmul.bf16.gmra.mxu0 0
  %v1170 = vpop.f32.mrf.mxu0
  %v1171 = vadd.f32 0.0, %v1170
  %v1172 = vpop.f32.mrf.mxu0
  %1173 = vdwg.mxu0
  %1174 = vmatpush.bf16.msra.mxu0 %v925
  %1175 = vmatpush.bf16.msra.mxu0 %v917
  %1176 = vmatpush.bf16.msra.mxu0 %v909
  %1177 = vmatpush.bf16.msra.mxu0 %v901
  %1178 = vmatpush.bf16.msra.mxu0 %v893
  %1179 = vmatpush.bf16.msra.mxu0 %v885
  %1180 = vmatpush.bf16.msra.mxu0 %v877
  %1181 = vmatpush.bf16.msra.mxu0 %v869
  %1182 = vmatmul.bf16.gmra.mxu0 0
  %v1183 = vpop.f32.mrf.mxu0
  %v1184 = vadd.f32 %v1171, %v1183
  %v1185 = vpop.f32.mrf.mxu0
  %1186 = vdwg.mxu0
  %1187 = vmatpush.bf16.msra.mxu0 %v862
  %1188 = vmatpush.bf16.msra.mxu0 %v854
  %1189 = vmatpush.bf16.msra.mxu0 %v846
  %1190 = vmatpush.bf16.msra.mxu0 %v838
  %1191 = vmatpush.bf16.msra.mxu0 %v830
  %1192 = vmatpush.bf16.msra.mxu0 %v822
  %1193 = vmatpush.bf16.msra.mxu0 %v814
  %1194 = vmatpush.bf16.msra.mxu0 %v806
  %1195 = vmatmul.bf16.gmra.mxu0 0
  %v1196 = vpop.f32.mrf.mxu0
  %v1197 = vadd.f32 0.0, %v1196
  %v1198 = vpop.f32.mrf.mxu0
  %1199 = vdwg.mxu0
  %1200 = vmatpush.bf16.msra.mxu0 %v926
  %1201 = vmatpush.bf16.msra.mxu0 %v918
  %1202 = vmatpush.bf16.msra.mxu0 %v910
  %1203 = vmatpush.bf16.msra.mxu0 %v902
  %1204 = vmatpush.bf16.msra.mxu0 %v894
  %1205 = vmatpush.bf16.msra.mxu0 %v886
  %1206 = vmatpush.bf16.msra.mxu0 %v878
  %1207 = vmatpush.bf16.msra.mxu0 %v870
  %1208 = vmatmul.bf16.gmra.mxu0 0
  %v1209 = vpop.f32.mrf.mxu0
  %v1210 = vadd.f32 %v1197, %v1209
  %v1211 = vpop.f32.mrf.mxu0
  %1212 = vdwg.mxu0
  %1213 = vmatpush.bf16.msra.mxu0 %v863
  %1214 = vmatpush.bf16.msra.mxu0 %v855
  %1215 = vmatpush.bf16.msra.mxu0 %v847
  %1216 = vmatpush.bf16.msra.mxu0 %v839
  %1217 = vmatpush.bf16.msra.mxu0 %v831
  %1218 = vmatpush.bf16.msra.mxu0 %v823
  %1219 = vmatpush.bf16.msra.mxu0 %v815
  %1220 = vmatpush.bf16.msra.mxu0 %v807
  %1221 = vmatmul.bf16.gmra.mxu0 0
  %v1222 = vpop.f32.mrf.mxu0
  %v1223 = vadd.f32 0.0, %v1222
  %v1224 = vpop.f32.mrf.mxu0
  %1225 = vdwg.mxu0
  %1226 = vmatpush.bf16.msra.mxu0 %v927
  %1227 = vmatpush.bf16.msra.mxu0 %v919
  %1228 = vmatpush.bf16.msra.mxu0 %v911
  %1229 = vmatpush.bf16.msra.mxu0 %v903
  %1230 = vmatpush.bf16.msra.mxu0 %v895
  %1231 = vmatpush.bf16.msra.mxu0 %v887
  %1232 = vmatpush.bf16.msra.mxu0 %v879
  %1233 = vmatpush.bf16.msra.mxu0 %v871
  %1234 = vmatmul.bf16.gmra.mxu0 0
  %v1235 = vpop.f32.mrf.mxu0
  %v1236 = vadd.f32 %v1223, %v1235
  %v1237 = vpop.f32.mrf.mxu0
  %1238 = vdwg.mxu0
  %1239 = vmatpush.bf16.msra.mxu0 %v864
  %1240 = vmatpush.bf16.msra.mxu0 %v856
  %1241 = vmatpush.bf16.msra.mxu0 %v848
  %1242 = vmatpush.bf16.msra.mxu0 %v840
  %1243 = vmatpush.bf16.msra.mxu0 %v832
  %1244 = vmatpush.bf16.msra.mxu0 %v824
  %1245 = vmatpush.bf16.msra.mxu0 %v816
  %1246 = vmatpush.bf16.msra.mxu0 %v808
  %1247 = vmatmul.bf16.gmra.mxu0 0
  %v1248 = vpop.f32.mrf.mxu0
  %v1249 = vadd.f32 0.0, %v1248
  %v1250 = vpop.f32.mrf.mxu0
  %1251 = vdwg.mxu0
  %1252 = vmatpush.bf16.msra.mxu0 %v928
  %1253 = vmatpush.bf16.msra.mxu0 %v920
  %1254 = vmatpush.bf16.msra.mxu0 %v912
  %1255 = vmatpush.bf16.msra.mxu0 %v904
  %1256 = vmatpush.bf16.msra.mxu0 %v896
  %1257 = vmatpush.bf16.msra.mxu0 %v888
  %1258 = vmatpush.bf16.msra.mxu0 %v880
  %1259 = vmatpush.bf16.msra.mxu0 %v872
  %1260 = vmatmul.bf16.gmra.mxu0 0
  %v1261 = vpop.f32.mrf.mxu0
  %v1262 = vadd.f32 %v1249, %v1261
  %v1263 = vpop.f32.mrf.mxu0
  %1264 = vdwg.mxu0
  %v1265 = vadd.f32 %v119, %v1080
  %v1266 = vadd.f32 %v142, %v1106
  %v1267 = vadd.f32 %v165, %v1132
  %v1268 = vadd.f32 %v188, %v1158
  %v1269 = vadd.f32 %v211, %v1184
  %v1270 = vadd.f32 %v234, %v1210
  %v1271 = vadd.f32 %v257, %v1236
  %v1272 = vadd.f32 %v280, %v1262
  %v1273 = vsub.f32 0.0, %v1265
  %v1274 = vsub.f32 0.0, %v1266
  %v1275 = vsub.f32 0.0, %v1267
  %v1276 = vsub.f32 0.0, %v1268
  %v1277 = vmul.f32 %v1273, 1.442695
  %v1278 = vpow.pop %v1277
  %v1279 = vmul.f32 %v1274, 1.442695
  %v1280 = vpow.pop %v1279
  %v1281 = vmul.f32 %v1275, 1.442695
  %v1282 = vpow.pop %v1281
  %v1283 = vmul.f32 %v1276, 1.442695
  %v1284 = vpow.pop %v1283
  %v1285 = vadd.f32 %v1278, 1.0
  %v1286 = vadd.f32 %v1280, 1.0
  %v1287 = vadd.f32 %v1282, 1.0
  %v1288 = vadd.f32 %v1284, 1.0
  %v1289 = vrcp.pop %v1285
  %v1290 = vrcp.pop %v1286
  %v1291 = vrcp.pop %v1287
  %v1292 = vrcp.pop %v1288
  %v1293 = vtanh.pop %v1269
  %v1294 = vtanh.pop %v1270
  %v1295 = vsub.f32 0.0, %v1271
  %v1296 = vsub.f32 0.0, %v1272
  %v1297 = vmul.f32 %v1295, 1.442695
  %v1298 = vpow.pop %v1297
  %v1299 = vmul.f32 %v1296, 1.442695
  %v1300 = vpow.pop %v1299
  %v1301 = vadd.f32 %v1298, 1.0
  %v1302 = vadd.f32 %v1300, 1.0
  %v1303 = vrcp.pop %v1301
  %v1304 = vrcp.pop %v1302
  %v1305 = vmul.f32 %v1291, 0.0
  %v1306 = vmul.f32 %v1292, 0.0
  %v1307 = vmul.f32 %v1289, %v1293
  %v1308 = vmul.f32 %v1290, %v1294
  %v1309 = vadd.f32 %v1305, %v1307
  %v1310 = vadd.f32 %v1306, %v1308
  %v1311 = vtanh.pop %v1309
  %v1312 = vtanh.pop %v1310
  %v1313 = vmul.f32 %v1303, %v1311
  %v1314 = vmul.f32 %v1304, %v1312
  %v1315 = vpack.c.bf16 %v1313, %v1313
  %v1316 = vpack.c.bf16 %v1314, %v1314
  %1317 = vmatpush.bf16.msra.mxu0 %v857
  %1318 = vmatpush.bf16.msra.mxu0 %v849
  %1319 = vmatpush.bf16.msra.mxu0 %v841
  %1320 = vmatpush.bf16.msra.mxu0 %v833
  %1321 = vmatpush.bf16.msra.mxu0 %v825
  %1322 = vmatpush.bf16.msra.mxu0 %v817
  %1323 = vmatpush.bf16.msra.mxu0 %v809
  %1324 = vmatpush.bf16.msra.mxu0 %v801
  %1325 = vmatmul.bf16.gmra.mxu0 %v1315
  %v1326 = vpop.f32.mrf.mxu0
  %v1327 = vadd.f32 0.0, %v1326
  %v1328 = vpop.f32.mrf.mxu0
  %1329 = vdwg.mxu0
  %1330 = vmatpush.bf16.msra.mxu0 %v921
  %1331 = vmatpush.bf16.msra.mxu0 %v913
  %1332 = vmatpush.bf16.msra.mxu0 %v905
  %1333 = vmatpush.bf16.msra.mxu0 %v897
  %1334 = vmatpush.bf16.msra.mxu0 %v889
  %1335 = vmatpush.bf16.msra.mxu0 %v881
  %1336 = vmatpush.bf16.msra.mxu0 %v873
  %1337 = vmatpush.bf16.msra.mxu0 %v865
  %1338 = vmatmul.bf16.gmra.mxu0 %v1316
  %v1339 = vpop.f32.mrf.mxu0
  %v1340 = vadd.f32 %v1327, %v1339
  %v1341 = vpop.f32.mrf.mxu0
  %1342 = vdwg.mxu0
  %1343 = vmatpush.bf16.msra.mxu0 %v858
  %1344 = vmatpush.bf16.msra.mxu0 %v850
  %1345 = vmatpush.bf16.msra.mxu0 %v842
  %1346 = vmatpush.bf16.msra.mxu0 %v834
  %1347 = vmatpush.bf16.msra.mxu0 %v826
  %1348 = vmatpush.bf16.msra.mxu0 %v818
  %1349 = vmatpush.bf16.msra.mxu0 %v810
  %1350 = vmatpush.bf16.msra.mxu0 %v802
  %1351 = vmatmul.bf16.gmra.mxu0 %v1315
  %v1352 = vpop.f32.mrf.mxu0
  %v1353 = vadd.f32 0.0, %v1352
  %v1354 = vpop.f32.mrf.mxu0
  %1355 = vdwg.mxu0
  %1356 = vmatpush.bf16.msra.mxu0 %v922
  %1357 = vmatpush.bf16.msra.mxu0 %v914
  %1358 = vmatpush.bf16.msra.mxu0 %v906
  %1359 = vmatpush.bf16.msra.mxu0 %v898
  %1360 = vmatpush.bf16.msra.mxu0 %v890
  %1361 = vmatpush.bf16.msra.mxu0 %v882
  %1362 = vmatpush.bf16.msra.mxu0 %v874
  %1363 = vmatpush.bf16.msra.mxu0 %v866
  %1364 = vmatmul.bf16.gmra.mxu0 %v1316
  %v1365 = vpop.f32.mrf.mxu0
  %v1366 = vadd.f32 %v1353, %v1365
  %v1367 = vpop.f32.mrf.mxu0
  %1368 = vdwg.mxu0
  %1369 = vmatpush.bf16.msra.mxu0 %v859
  %1370 = vmatpush.bf16.msra.mxu0 %v851
  %1371 = vmatpush.bf16.msra.mxu0 %v843
  %1372 = vmatpush.bf16.msra.mxu0 %v835
  %1373 = vmatpush.bf16.msra.mxu0 %v827
  %1374 = vmatpush.bf16.msra.mxu0 %v819
  %1375 = vmatpush.bf16.msra.mxu0 %v811
  %1376 = vmatpush.bf16.msra.mxu0 %v803
  %1377 = vmatmul.bf16.gmra.mxu0 %v1315
  %v1378 = vpop.f32.mrf.mxu0
  %v1379 = vadd.f32 0.0, %v1378
  %v1380 = vpop.f32.mrf.mxu0
  %1381 = vdwg.mxu0
  %1382 = vmatpush.bf16.msra.mxu0 %v923
  %1383 = vmatpush.bf16.msra.mxu0 %v915
  %1384 = vmatpush.bf16.msra.mxu0 %v907
  %1385 = vmatpush.bf16.msra.mxu0 %v899
  %1386 = vmatpush.bf16.msra.mxu0 %v891
  %1387 = vmatpush.bf16.msra.mxu0 %v883
  %1388 = vmatpush.bf16.msra.mxu0 %v875
  %1389 = vmatpush.bf16.msra.mxu0 %v867
  %1390 = vmatmul.bf16.gmra.mxu0 %v1316
  %v1391 = vpop.f32.mrf.mxu0
  %v1392 = vadd.f32 %v1379, %v1391
  %v1393 = vpop.f32.mrf.mxu0
  %1394 = vdwg.mxu0
  %1395 = vmatpush.bf16.msra.mxu0 %v860
  %1396 = vmatpush.bf16.msra.mxu0 %v852
  %1397 = vmatpush.bf16.msra.mxu0 %v844
  %1398 = vmatpush.bf16.msra.mxu0 %v836
  %1399 = vmatpush.bf16.msra.mxu0 %v828
  %1400 = vmatpush.bf16.msra.mxu0 %v820
  %1401 = vmatpush.bf16.msra.mxu0 %v812
  %1402 = vmatpush.bf16.msra.mxu0 %v804
  %1403 = vmatmul.bf16.gmra.mxu0 %v1315
  %v1404 = vpop.f32.mrf.mxu0
  %v1405 = vadd.f32 0.0, %v1404
  %v1406 = vpop.f32.mrf.mxu0
  %1407 = vdwg.mxu0
  %1408 = vmatpush.bf16.msra.mxu0 %v924
  %1409 = vmatpush.bf16.msra.mxu0 %v916
  %1410 = vmatpush.bf16.msra.mxu0 %v908
  %1411 = vmatpush.bf16.msra.mxu0 %v900
  %1412 = vmatpush.bf16.msra.mxu0 %v892
  %1413 = vmatpush.bf16.msra.mxu0 %v884
  %1414 = vmatpush.bf16.msra.mxu0 %v876
  %1415 = vmatpush.bf16.msra.mxu0 %v868
  %1416 = vmatmul.bf16.gmra.mxu0 %v1316
  %v1417 = vpop.f32.mrf.mxu0
  %v1418 = vadd.f32 %v1405, %v1417
  %v1419 = vpop.f32.mrf.mxu0
  %1420 = vdwg.mxu0
  %1421 = vmatpush.bf16.msra.mxu0 %v861
  %1422 = vmatpush.bf16.msra.mxu0 %v853
  %1423 = vmatpush.bf16.msra.mxu0 %v845
  %1424 = vmatpush.bf16.msra.mxu0 %v837
  %1425 = vmatpush.bf16.msra.mxu0 %v829
  %1426 = vmatpush.bf16.msra.mxu0 %v821
  %1427 = vmatpush.bf16.msra.mxu0 %v813
  %1428 = vmatpush.bf16.msra.mxu0 %v805
  %1429 = vmatmul.bf16.gmra.mxu0 %v1315
  %v1430 = vpop.f32.mrf.mxu0
  %v1431 = vadd.f32 0.0, %v1430
  %v1432 = vpop.f32.mrf.mxu0
  %1433 = vdwg.mxu0
  %1434 = vmatpush.bf16.msra.mxu0 %v925
  %1435 = vmatpush.bf16.msra.mxu0 %v917
  %1436 = vmatpush.bf16.msra.mxu0 %v909
  %1437 = vmatpush.bf16.msra.mxu0 %v901
  %1438 = vmatpush.bf16.msra.mxu0 %v893
  %1439 = vmatpush.bf16.msra.mxu0 %v885
  %1440 = vmatpush.bf16.msra.mxu0 %v877
  %1441 = vmatpush.bf16.msra.mxu0 %v869
  %1442 = vmatmul.bf16.gmra.mxu0 %v1316
  %v1443 = vpop.f32.mrf.mxu0
  %v1444 = vadd.f32 %v1431, %v1443
  %v1445 = vpop.f32.mrf.mxu0
  %1446 = vdwg.mxu0
  %1447 = vmatpush.bf16.msra.mxu0 %v862
  %1448 = vmatpush.bf16.msra.mxu0 %v854
  %1449 = vmatpush.bf16.msra.mxu0 %v846
  %1450 = vmatpush.bf16.msra.mxu0 %v838
  %1451 = vmatpush.bf16.msra.mxu0 %v830
  %1452 = vmatpush.bf16.msra.mxu0 %v822
  %1453 = vmatpush.bf16.msra.mxu0 %v814
  %1454 = vmatpush.bf16.msra.mxu0 %v806
  %1455 = vmatmul.bf16.gmra.mxu0 %v1315
  %v1456 = vpop.f32.mrf.mxu0
  %v1457 = vadd.f32 0.0, %v1456
  %v1458 = vpop.f32.mrf.mxu0
  %1459 = vdwg.mxu0
  %1460 = vmatpush.bf16.msra.mxu0 %v926
  %1461 = vmatpush.bf16.msra.mxu0 %v918
  %1462 = vmatpush.bf16.msra.mxu0 %v910
  %1463 = vmatpush.bf16.msra.mxu0 %v902
  %1464 = vmatpush.bf16.msra.mxu0 %v894
  %1465 = vmatpush.bf16.msra.mxu0 %v886
  %1466 = vmatpush.bf16.msra.mxu0 %v878
  %1467 = vmatpush.bf16.msra.mxu0 %v870
  %1468 = vmatmul.bf16.gmra.mxu0 %v1316
  %v1469 = vpop.f32.mrf.mxu0
  %v1470 = vadd.f32 %v1457, %v1469
  %v1471 = vpop.f32.mrf.mxu0
  %1472 = vdwg.mxu0
  %1473 = vmatpush.bf16.msra.mxu0 %v863
  %1474 = vmatpush.bf16.msra.mxu0 %v855
  %1475 = vmatpush.bf16.msra.mxu0 %v847
  %1476 = vmatpush.bf16.msra.mxu0 %v839
  %1477 = vmatpush.bf16.msra.mxu0 %v831
  %1478 = vmatpush.bf16.msra.mxu0 %v823
  %1479 = vmatpush.bf16.msra.mxu0 %v815
  %1480 = vmatpush.bf16.msra.mxu0 %v807
  %1481 = vmatmul.bf16.gmra.mxu0 %v1315
  %v1482 = vpop.f32.mrf.mxu0
  %v1483 = vadd.f32 0.0, %v1482
  %v1484 = vpop.f32.mrf.mxu0
  %1485 = vdwg.mxu0
  %1486 = vmatpush.bf16.msra.mxu0 %v927
  %1487 = vmatpush.bf16.msra.mxu0 %v919
  %1488 = vmatpush.bf16.msra.mxu0 %v911
  %1489 = vmatpush.bf16.msra.mxu0 %v903
  %1490 = vmatpush.bf16.msra.mxu0 %v895
  %1491 = vmatpush.bf16.msra.mxu0 %v887
  %1492 = vmatpush.bf16.msra.mxu0 %v879
  %1493 = vmatpush.bf16.msra.mxu0 %v871
  %1494 = vmatmul.bf16.gmra.mxu0 %v1316
  %v1495 = vpop.f32.mrf.mxu0
  %v1496 = vadd.f32 %v1483, %v1495
  %v1497 = vpop.f32.mrf.mxu0
  %1498 = vdwg.mxu0
  %1499 = vmatpush.bf16.msra.mxu0 %v864
  %1500 = vmatpush.bf16.msra.mxu0 %v856
  %1501 = vmatpush.bf16.msra.mxu0 %v848
  %1502 = vmatpush.bf16.msra.mxu0 %v840
  %1503 = vmatpush.bf16.msra.mxu0 %v832
  %1504 = vmatpush.bf16.msra.mxu0 %v824
  %1505 = vmatpush.bf16.msra.mxu0 %v816
  %1506 = vmatpush.bf16.msra.mxu0 %v808
  %1507 = vmatmul.bf16.gmra.mxu0 %v1315
  %v1508 = vpop.f32.mrf.mxu0
  %v1509 = vadd.f32 0.0, %v1508
  %v1510 = vpop.f32.mrf.mxu0
  %1511 = vdwg.mxu0
  %1512 = vmatpush.bf16.msra.mxu0 %v928
  %1513 = vmatpush.bf16.msra.mxu0 %v920
  %1514 = vmatpush.bf16.msra.mxu0 %v912
  %1515 = vmatpush.bf16.msra.mxu0 %v904
  %1516 = vmatpush.bf16.msra.mxu0 %v896
  %1517 = vmatpush.bf16.msra.mxu0 %v888
  %1518 = vmatpush.bf16.msra.mxu0 %v880
  %1519 = vmatpush.bf16.msra.mxu0 %v872
  %1520 = vmatmul.bf16.gmra.mxu0 %v1316
  %v1521 = vpop.f32.mrf.mxu0
  %v1522 = vadd.f32 %v1509, %v1521
  %v1523 = vpop.f32.mrf.mxu0
  %1524 = vdwg.mxu0
  %v1533 = vrot.slane %v1340, 6
  %v1534 = vrot.slane %v1366, 6
  %v1535 = vrot.slane %v1392, 6
  %v1536 = vrot.slane %v1418, 6
  %v1537 = vrot.slane %v1444, 6
  %v1538 = vrot.slane %v1470, 6
  %v1539 = vrot.slane %v1496, 6
  %v1540 = vrot.slane %v1522, 6
  %v1549 = vadd.f32 %v119, %v1533
  %v1550 = vadd.f32 %v142, %v1534
  %v1551 = vadd.f32 %v165, %v1535
  %v1552 = vadd.f32 %v188, %v1536
  %v1553 = vadd.f32 %v211, %v1537
  %v1554 = vadd.f32 %v234, %v1538
  %v1555 = vadd.f32 %v257, %v1539
  %v1556 = vadd.f32 %v280, %v1540
  %v1557 = vsub.f32 0.0, %v1549
  %v1558 = vsub.f32 0.0, %v1550
  %v1559 = vsub.f32 0.0, %v1551
  %v1560 = vsub.f32 0.0, %v1552
  %v1561 = vmul.f32 %v1557, 1.442695
  %v1562 = vpow.pop %v1561
  %v1563 = vmul.f32 %v1558, 1.442695
  %v1564 = vpow.pop %v1563
  %v1565 = vmul.f32 %v1559, 1.442695
  %v1566 = vpow.pop %v1565
  %v1567 = vmul.f32 %v1560, 1.442695
  %v1568 = vpow.pop %v1567
  %v1569 = vadd.f32 %v1562, 1.0
  %v1570 = vadd.f32 %v1564, 1.0
  %v1571 = vadd.f32 %v1566, 1.0
  %v1572 = vadd.f32 %v1568, 1.0
  %v1573 = vrcp.pop %v1569
  %v1574 = vrcp.pop %v1570
  %v1575 = vrcp.pop %v1571
  %v1576 = vrcp.pop %v1572
  %v1577 = vtanh.pop %v1553
  %v1578 = vtanh.pop %v1554
  %v1579 = vsub.f32 0.0, %v1555
  %v1580 = vsub.f32 0.0, %v1556
  %v1581 = vmul.f32 %v1579, 1.442695
  %v1582 = vpow.pop %v1581
  %v1583 = vmul.f32 %v1580, 1.442695
  %v1584 = vpow.pop %v1583
  %v1585 = vadd.f32 %v1582, 1.0
  %v1586 = vadd.f32 %v1584, 1.0
  %v1587 = vrcp.pop %v1585
  %v1588 = vrcp.pop %v1586
  %v1591 = vrot.slane %v1309, 6
  %v1592 = vrot.slane %v1310, 6
  %v1595 = vmul.f32 %v1575, %v1591
  %v1596 = vmul.f32 %v1576, %v1592
  %v1597 = vmul.f32 %v1573, %v1577
  %v1598 = vmul.f32 %v1574, %v1578
  %v1599 = vadd.f32 %v1595, %v1597
  %v1600 = vadd.f32 %v1596, %v1598
  %v1601 = vtanh.pop %v1599
  %v1602 = vtanh.pop %v1600
  %v1603 = vmul.f32 %v1587, %v1601
  %v1604 = vmul.f32 %v1588, %v1602
  %v1605 = vpack.c.bf16 %v1603, %v1603
  %v1606 = vpack.c.bf16 %v1604, %v1604
  %v1609 = vrot.slane %v1605, 1
  %v1610 = vrot.slane %v1606, 1
  %1613 = vmatpush.bf16.msra.mxu0 %v857
  %1614 = vmatpush.bf16.msra.mxu0 %v849
  %1615 = vmatpush.bf16.msra.mxu0 %v841
  %1616 = vmatpush.bf16.msra.mxu0 %v833
  %1617 = vmatpush.bf16.msra.mxu0 %v825
  %1618 = vmatpush.bf16.msra.mxu0 %v817
  %1619 = vmatpush.bf16.msra.mxu0 %v809
  %1620 = vmatpush.bf16.msra.mxu0 %v801
  %1621 = vmatmul.bf16.gmra.mxu0 %v1609
  %v1622 = vpop.f32.mrf.mxu0
  %v1623 = vadd.f32 0.0, %v1622
  %v1624 = vpop.f32.mrf.mxu0
  %1625 = vdwg.mxu0
  %1626 = vmatpush.bf16.msra.mxu0 %v921
  %1627 = vmatpush.bf16.msra.mxu0 %v913
  %1628 = vmatpush.bf16.msra.mxu0 %v905
  %1629 = vmatpush.bf16.msra.mxu0 %v897
  %1630 = vmatpush.bf16.msra.mxu0 %v889
  %1631 = vmatpush.bf16.msra.mxu0 %v881
  %1632 = vmatpush.bf16.msra.mxu0 %v873
  %1633 = vmatpush.bf16.msra.mxu0 %v865
  %1634 = vmatmul.bf16.gmra.mxu0 %v1610
  %v1635 = vpop.f32.mrf.mxu0
  %v1636 = vadd.f32 %v1623, %v1635
  %v1637 = vpop.f32.mrf.mxu0
  %1638 = vdwg.mxu0
  %1639 = vmatpush.bf16.msra.mxu0 %v858
  %1640 = vmatpush.bf16.msra.mxu0 %v850
  %1641 = vmatpush.bf16.msra.mxu0 %v842
  %1642 = vmatpush.bf16.msra.mxu0 %v834
  %1643 = vmatpush.bf16.msra.mxu0 %v826
  %1644 = vmatpush.bf16.msra.mxu0 %v818
  %1645 = vmatpush.bf16.msra.mxu0 %v810
  %1646 = vmatpush.bf16.msra.mxu0 %v802
  %1647 = vmatmul.bf16.gmra.mxu0 %v1609
  %v1648 = vpop.f32.mrf.mxu0
  %v1649 = vadd.f32 0.0, %v1648
  %v1650 = vpop.f32.mrf.mxu0
  %1651 = vdwg.mxu0
  %1652 = vmatpush.bf16.msra.mxu0 %v922
  %1653 = vmatpush.bf16.msra.mxu0 %v914
  %1654 = vmatpush.bf16.msra.mxu0 %v906
  %1655 = vmatpush.bf16.msra.mxu0 %v898
  %1656 = vmatpush.bf16.msra.mxu0 %v890
  %1657 = vmatpush.bf16.msra.mxu0 %v882
  %1658 = vmatpush.bf16.msra.mxu0 %v874
  %1659 = vmatpush.bf16.msra.mxu0 %v866
  %1660 = vmatmul.bf16.gmra.mxu0 %v1610
  %v1661 = vpop.f32.mrf.mxu0
  %v1662 = vadd.f32 %v1649, %v1661
  %v1663 = vpop.f32.mrf.mxu0
  %1664 = vdwg.mxu0
  %1665 = vmatpush.bf16.msra.mxu0 %v859
  %1666 = vmatpush.bf16.msra.mxu0 %v851
  %1667 = vmatpush.bf16.msra.mxu0 %v843
  %1668 = vmatpush.bf16.msra.mxu0 %v835
  %1669 = vmatpush.bf16.msra.mxu0 %v827
  %1670 = vmatpush.bf16.msra.mxu0 %v819
  %1671 = vmatpush.bf16.msra.mxu0 %v811
  %1672 = vmatpush.bf16.msra.mxu0 %v803
  %1673 = vmatmul.bf16.gmra.mxu0 %v1609
  %v1674 = vpop.f32.mrf.mxu0
  %v1675 = vadd.f32 0.0, %v1674
  %v1676 = vpop.f32.mrf.mxu0
  %1677 = vdwg.mxu0
  %1678 = vmatpush.bf16.msra.mxu0 %v923
  %1679 = vmatpush.bf16.msra.mxu0 %v915
  %1680 = vmatpush.bf16.msra.mxu0 %v907
  %1681 = vmatpush.bf16.msra.mxu0 %v899
  %1682 = vmatpush.bf16.msra.mxu0 %v891
  %1683 = vmatpush.bf16.msra.mxu0 %v883
  %1684 = vmatpush.bf16.msra.mxu0 %v875
  %1685 = vmatpush.bf16.msra.mxu0 %v867
  %1686 = vmatmul.bf16.gmra.mxu0 %v1610
  %v1687 = vpop.f32.mrf.mxu0
  %v1688 = vadd.f32 %v1675, %v1687
  %v1689 = vpop.f32.mrf.mxu0
  %1690 = vdwg.mxu0
  %1691 = vmatpush.bf16.msra.mxu0 %v860
  %1692 = vmatpush.bf16.msra.mxu0 %v852
  %1693 = vmatpush.bf16.msra.mxu0 %v844
  %1694 = vmatpush.bf16.msra.mxu0 %v836
  %1695 = vmatpush.bf16.msra.mxu0 %v828
  %1696 = vmatpush.bf16.msra.mxu0 %v820
  %1697 = vmatpush.bf16.msra.mxu0 %v812
  %1698 = vmatpush.bf16.msra.mxu0 %v804
  %1699 = vmatmul.bf16.gmra.mxu0 %v1609
  %v1700 = vpop.f32.mrf.mxu0
  %v1701 = vadd.f32 0.0, %v1700
  %v1702 = vpop.f32.mrf.mxu0
  %1703 = vdwg.mxu0
  %1704 = vmatpush.bf16.msra.mxu0 %v924
  %1705 = vmatpush.bf16.msra.mxu0 %v916
  %1706 = vmatpush.bf16.msra.mxu0 %v908
  %1707 = vmatpush.bf16.msra.mxu0 %v900
  %1708 = vmatpush.bf16.msra.mxu0 %v892
  %1709 = vmatpush.bf16.msra.mxu0 %v884
  %1710 = vmatpush.bf16.msra.mxu0 %v876
  %1711 = vmatpush.bf16.msra.mxu0 %v868
  %1712 = vmatmul.bf16.gmra.mxu0 %v1610
  %v1713 = vpop.f32.mrf.mxu0
  %v1714 = vadd.f32 %v1701, %v1713
  %v1715 = vpop.f32.mrf.mxu0
  %1716 = vdwg.mxu0
  %1717 = vmatpush.bf16.msra.mxu0 %v861
  %1718 = vmatpush.bf16.msra.mxu0 %v853
  %1719 = vmatpush.bf16.msra.mxu0 %v845
  %1720 = vmatpush.bf16.msra.mxu0 %v837
  %1721 = vmatpush.bf16.msra.mxu0 %v829
  %1722 = vmatpush.bf16.msra.mxu0 %v821
  %1723 = vmatpush.bf16.msra.mxu0 %v813
  %1724 = vmatpush.bf16.msra.mxu0 %v805
  %1725 = vmatmul.bf16.gmra.mxu0 %v1609
  %v1726 = vpop.f32.mrf.mxu0
  %v1727 = vadd.f32 0.0, %v1726
  %v1728 = vpop.f32.mrf.mxu0
  %1729 = vdwg.mxu0
  %1730 = vmatpush.bf16.msra.mxu0 %v925
  %1731 = vmatpush.bf16.msra.mxu0 %v917
  %1732 = vmatpush.bf16.msra.mxu0 %v909
  %1733 = vmatpush.bf16.msra.mxu0 %v901
  %1734 = vmatpush.bf16.msra.mxu0 %v893
  %1735 = vmatpush.bf16.msra.mxu0 %v885
  %1736 = vmatpush.bf16.msra.mxu0 %v877
  %1737 = vmatpush.bf16.msra.mxu0 %v869
  %1738 = vmatmul.bf16.gmra.mxu0 %v1610
  %v1739 = vpop.f32.mrf.mxu0
  %v1740 = vadd.f32 %v1727, %v1739
  %v1741 = vpop.f32.mrf.mxu0
  %1742 = vdwg.mxu0
  %1743 = vmatpush.bf16.msra.mxu0 %v862
  %1744 = vmatpush.bf16.msra.mxu0 %v854
  %1745 = vmatpush.bf16.msra.mxu0 %v846
  %1746 = vmatpush.bf16.msra.mxu0 %v838
  %1747 = vmatpush.bf16.msra.mxu0 %v830
  %1748 = vmatpush.bf16.msra.mxu0 %v822
  %1749 = vmatpush.bf16.msra.mxu0 %v814
  %1750 = vmatpush.bf16.msra.mxu0 %v806
  %1751 = vmatmul.bf16.gmra.mxu0 %v1609
  %v1752 = vpop.f32.mrf.mxu0
  %v1753 = vadd.f32 0.0, %v1752
  %v1754 = vpop.f32.mrf.mxu0
  %1755 = vdwg.mxu0
  %1756 = vmatpush.bf16.msra.mxu0 %v926
  %1757 = vmatpush.bf16.msra.mxu0 %v918
  %1758 = vmatpush.bf16.msra.mxu0 %v910
  %1759 = vmatpush.bf16.msra.mxu0 %v902
  %1760 = vmatpush.bf16.msra.mxu0 %v894
  %1761 = vmatpush.bf16.msra.mxu0 %v886
  %1762 = vmatpush.bf16.msra.mxu0 %v878
  %1763 = vmatpush.bf16.msra.mxu0 %v870
  %1764 = vmatmul.bf16.gmra.mxu0 %v1610
  %v1765 = vpop.f32.mrf.mxu0
  %v1766 = vadd.f32 %v1753, %v1765
  %v1767 = vpop.f32.mrf.mxu0
  %1768 = vdwg.mxu0
  %1769 = vmatpush.bf16.msra.mxu0 %v863
  %1770 = vmatpush.bf16.msra.mxu0 %v855
  %1771 = vmatpush.bf16.msra.mxu0 %v847
  %1772 = vmatpush.bf16.msra.mxu0 %v839
  %1773 = vmatpush.bf16.msra.mxu0 %v831
  %1774 = vmatpush.bf16.msra.mxu0 %v823
  %1775 = vmatpush.bf16.msra.mxu0 %v815
  %1776 = vmatpush.bf16.msra.mxu0 %v807
  %1777 = vmatmul.bf16.gmra.mxu0 %v1609
  %v1778 = vpop.f32.mrf.mxu0
  %v1779 = vadd.f32 0.0, %v1778
  %v1780 = vpop.f32.mrf.mxu0
  %1781 = vdwg.mxu0
  %1782 = vmatpush.bf16.msra.mxu0 %v927
  %1783 = vmatpush.bf16.msra.mxu0 %v919
  %1784 = vmatpush.bf16.msra.mxu0 %v911
  %1785 = vmatpush.bf16.msra.mxu0 %v903
  %1786 = vmatpush.bf16.msra.mxu0 %v895
  %1787 = vmatpush.bf16.msra.mxu0 %v887
  %1788 = vmatpush.bf16.msra.mxu0 %v879
  %1789 = vmatpush.bf16.msra.mxu0 %v871
  %1790 = vmatmul.bf16.gmra.mxu0 %v1610
  %v1791 = vpop.f32.mrf.mxu0
  %v1792 = vadd.f32 %v1779, %v1791
  %v1793 = vpop.f32.mrf.mxu0
  %1794 = vdwg.mxu0
  %1795 = vmatpush.bf16.msra.mxu0 %v864
  %1796 = vmatpush.bf16.msra.mxu0 %v856
  %1797 = vmatpush.bf16.msra.mxu0 %v848
  %1798 = vmatpush.bf16.msra.mxu0 %v840
  %1799 = vmatpush.bf16.msra.mxu0 %v832
  %1800 = vmatpush.bf16.msra.mxu0 %v824
  %1801 = vmatpush.bf16.msra.mxu0 %v816
  %1802 = vmatpush.bf16.msra.mxu0 %v808
  %1803 = vmatmul.bf16.gmra.mxu0 %v1609
  %v1804 = vpop.f32.mrf.mxu0
  %v1805 = vadd.f32 0.0, %v1804
  %v1806 = vpop.f32.mrf.mxu0
  %1807 = vdwg.mxu0
  %1808 = vmatpush.bf16.msra.mxu0 %v928
  %1809 = vmatpush.bf16.msra.mxu0 %v920
  %1810 = vmatpush.bf16.msra.mxu0 %v912
  %1811 = vmatpush.bf16.msra.mxu0 %v904
  %1812 = vmatpush.bf16.msra.mxu0 %v896
  %1813 = vmatpush.bf16.msra.mxu0 %v888
  %1814 = vmatpush.bf16.msra.mxu0 %v880
  %1815 = vmatpush.bf16.msra.mxu0 %v872
  %1816 = vmatmul.bf16.gmra.mxu0 %v1610
  %v1817 = vpop.f32.mrf.mxu0
  %v1818 = vadd.f32 %v1805, %v1817
  %v1819 = vpop.f32.mrf.mxu0
  %1820 = vdwg.mxu0
  %v1829 = vrot.slane %v1636, 4
  %v1830 = vrot.slane %v1662, 4
  %v1831 = vrot.slane %v1688, 4
  %v1832 = vrot.slane %v1714, 4
  %v1833 = vrot.slane %v1740, 4
  %v1834 = vrot.slane %v1766, 4
  %v1835 = vrot.slane %v1792, 4
  %v1836 = vrot.slane %v1818, 4
  %v1845 = vadd.f32 %v119, %v1829
  %v1846 = vadd.f32 %v142, %v1830
  %v1847 = vadd.f32 %v165, %v1831
  %v1848 = vadd.f32 %v188, %v1832
  %v1849 = vadd.f32 %v211, %v1833
  %v1850 = vadd.f32 %v234, %v1834
  %v1851 = vadd.f32 %v257, %v1835
  %v1852 = vadd.f32 %v280, %v1836
  %v1853 = vsub.f32 0.0, %v1845
  %v1854 = vsub.f32 0.0, %v1846
  %v1855 = vsub.f32 0.0, %v1847
  %v1856 = vsub.f32 0.0, %v1848
  %v1857 = vmul.f32 %v1853, 1.442695
  %v1858 = vpow.pop %v1857
  %v1859 = vmul.f32 %v1854, 1.442695
  %v1860 = vpow.pop %v1859
  %v1861 = vmul.f32 %v1855, 1.442695
  %v1862 = vpow.pop %v1861
  %v1863 = vmul.f32 %v1856, 1.442695
  %v1864 = vpow.pop %v1863
  %v1865 = vadd.f32 %v1858, 1.0
  %v1866 = vadd.f32 %v1860, 1.0
  %v1867 = vadd.f32 %v1862, 1.0
  %v1868 = vadd.f32 %v1864, 1.0
  %v1869 = vrcp.pop %v1865
  %v1870 = vrcp.pop %v1866
  %v1871 = vrcp.pop %v1867
  %v1872 = vrcp.pop %v1868
  %v1873 = vtanh.pop %v1849
  %v1874 = vtanh.pop %v1850
  %v1875 = vsub.f32 0.0, %v1851
  %v1876 = vsub.f32 0.0, %v1852
  %v1877 = vmul.f32 %v1875, 1.442695
  %v1878 = vpow.pop %v1877
  %v1879 = vmul.f32 %v1876, 1.442695
  %v1880 = vpow.pop %v1879
  %v1881 = vadd.f32 %v1878, 1.0
  %v1882 = vadd.f32 %v1880, 1.0
  %v1883 = vrcp.pop %v1881
  %v1884 = vrcp.pop %v1882
  %v1887 = vrot.slane %v1599, 6
  %v1888 = vrot.slane %v1600, 6
  %v1891 = vmul.f32 %v1871, %v1887
  %v1892 = vmul.f32 %v1872, %v1888
  %v1893 = vmul.f32 %v1869, %v1873
  %v1894 = vmul.f32 %v1870, %v1874
  %v1895 = vadd.f32 %v1891, %v1893
  %v1896 = vadd.f32 %v1892, %v1894
  %v1897 = vtanh.pop %v1895
  %v1898 = vtanh.pop %v1896
  %v1899 = vmul.f32 %v1883, %v1897
  %v1900 = vmul.f32 %v1884, %v1898
  %v1901 = vpack.c.bf16 %v1899, %v1899
  %v1902 = vpack.c.bf16 %v1900, %v1900
  %v1905 = vrot.slane %v1901, 2
  %v1906 = vrot.slane %v1902, 2
  %1909 = vmatpush.bf16.msra.mxu0 %v857
  %1910 = vmatpush.bf16.msra.mxu0 %v849
  %1911 = vmatpush.bf16.msra.mxu0 %v841
  %1912 = vmatpush.bf16.msra.mxu0 %v833
  %1913 = vmatpush.bf16.msra.mxu0 %v825
  %1914 = vmatpush.bf16.msra.mxu0 %v817
  %1915 = vmatpush.bf16.msra.mxu0 %v809
  %1916 = vmatpush.bf16.msra.mxu0 %v801
  %1917 = vmatmul.bf16.gmra.mxu0 %v1905
  %v1918 = vpop.f32.mrf.mxu0
  %v1919 = vadd.f32 0.0, %v1918
  %v1920 = vpop.f32.mrf.mxu0
  %1921 = vdwg.mxu0
  %1922 = vmatpush.bf16.msra.mxu0 %v921
  %1923 = vmatpush.bf16.msra.mxu0 %v913
  %1924 = vmatpush.bf16.msra.mxu0 %v905
  %1925 = vmatpush.bf16.msra.mxu0 %v897
  %1926 = vmatpush.bf16.msra.mxu0 %v889
  %1927 = vmatpush.bf16.msra.mxu0 %v881
  %1928 = vmatpush.bf16.msra.mxu0 %v873
  %1929 = vmatpush.bf16.msra.mxu0 %v865
  %1930 = vmatmul.bf16.gmra.mxu0 %v1906
  %v1931 = vpop.f32.mrf.mxu0
  %v1932 = vadd.f32 %v1919, %v1931
  %v1933 = vpop.f32.mrf.mxu0
  %1934 = vdwg.mxu0
  %1935 = vmatpush.bf16.msra.mxu0 %v858
  %1936 = vmatpush.bf16.msra.mxu0 %v850
  %1937 = vmatpush.bf16.msra.mxu0 %v842
  %1938 = vmatpush.bf16.msra.mxu0 %v834
  %1939 = vmatpush.bf16.msra.mxu0 %v826
  %1940 = vmatpush.bf16.msra.mxu0 %v818
  %1941 = vmatpush.bf16.msra.mxu0 %v810
  %1942 = vmatpush.bf16.msra.mxu0 %v802
  %1943 = vmatmul.bf16.gmra.mxu0 %v1905
  %v1944 = vpop.f32.mrf.mxu0
  %v1945 = vadd.f32 0.0, %v1944
  %v1946 = vpop.f32.mrf.mxu0
  %1947 = vdwg.mxu0
  %1948 = vmatpush.bf16.msra.mxu0 %v922
  %1949 = vmatpush.bf16.msra.mxu0 %v914
  %1950 = vmatpush.bf16.msra.mxu0 %v906
  %1951 = vmatpush.bf16.msra.mxu0 %v898
  %1952 = vmatpush.bf16.msra.mxu0 %v890
  %1953 = vmatpush.bf16.msra.mxu0 %v882
  %1954 = vmatpush.bf16.msra.mxu0 %v874
  %1955 = vmatpush.bf16.msra.mxu0 %v866
  %1956 = vmatmul.bf16.gmra.mxu0 %v1906
  %v1957 = vpop.f32.mrf.mxu0
  %v1958 = vadd.f32 %v1945, %v1957
  %v1959 = vpop.f32.mrf.mxu0
  %1960 = vdwg.mxu0
  %1961 = vmatpush.bf16.msra.mxu0 %v859
  %1962 = vmatpush.bf16.msra.mxu0 %v851
  %1963 = vmatpush.bf16.msra.mxu0 %v843
  %1964 = vmatpush.bf16.msra.mxu0 %v835
  %1965 = vmatpush.bf16.msra.mxu0 %v827
  %1966 = vmatpush.bf16.msra.mxu0 %v819
  %1967 = vmatpush.bf16.msra.mxu0 %v811
  %1968 = vmatpush.bf16.msra.mxu0 %v803
  %1969 = vmatmul.bf16.gmra.mxu0 %v1905
  %v1970 = vpop.f32.mrf.mxu0
  %v1971 = vadd.f32 0.0, %v1970
  %v1972 = vpop.f32.mrf.mxu0
  %1973 = vdwg.mxu0
  %1974 = vmatpush.bf16.msra.mxu0 %v923
  %1975 = vmatpush.bf16.msra.mxu0 %v915
  %1976 = vmatpush.bf16.msra.mxu0 %v907
  %1977 = vmatpush.bf16.msra.mxu0 %v899
  %1978 = vmatpush.bf16.msra.mxu0 %v891
  %1979 = vmatpush.bf16.msra.mxu0 %v883
  %1980 = vmatpush.bf16.msra.mxu0 %v875
  %1981 = vmatpush.bf16.msra.mxu0 %v867
  %1982 = vmatmul.bf16.gmra.mxu0 %v1906
  %v1983 = vpop.f32.mrf.mxu0
  %v1984 = vadd.f32 %v1971, %v1983
  %v1985 = vpop.f32.mrf.mxu0
  %1986 = vdwg.mxu0
  %1987 = vmatpush.bf16.msra.mxu0 %v860
  %1988 = vmatpush.bf16.msra.mxu0 %v852
  %1989 = vmatpush.bf16.msra.mxu0 %v844
  %1990 = vmatpush.bf16.msra.mxu0 %v836
  %1991 = vmatpush.bf16.msra.mxu0 %v828
  %1992 = vmatpush.bf16.msra.mxu0 %v820
  %1993 = vmatpush.bf16.msra.mxu0 %v812
  %1994 = vmatpush.bf16.msra.mxu0 %v804
  %1995 = vmatmul.bf16.gmra.mxu0 %v1905
  %v1996 = vpop.f32.mrf.mxu0
  %v1997 = vadd.f32 0.0, %v1996
  %v1998 = vpop.f32.mrf.mxu0
  %1999 = vdwg.mxu0
  %2000 = vmatpush.bf16.msra.mxu0 %v924
  %2001 = vmatpush.bf16.msra.mxu0 %v916
  %2002 = vmatpush.bf16.msra.mxu0 %v908
  %2003 = vmatpush.bf16.msra.mxu0 %v900
  %2004 = vmatpush.bf16.msra.mxu0 %v892
  %2005 = vmatpush.bf16.msra.mxu0 %v884
  %2006 = vmatpush.bf16.msra.mxu0 %v876
  %2007 = vmatpush.bf16.msra.mxu0 %v868
  %2008 = vmatmul.bf16.gmra.mxu0 %v1906
  %v2009 = vpop.f32.mrf.mxu0
  %v2010 = vadd.f32 %v1997, %v2009
  %v2011 = vpop.f32.mrf.mxu0
  %2012 = vdwg.mxu0
  %2013 = vmatpush.bf16.msra.mxu0 %v861
  %2014 = vmatpush.bf16.msra.mxu0 %v853
  %2015 = vmatpush.bf16.msra.mxu0 %v845
  %2016 = vmatpush.bf16.msra.mxu0 %v837
  %2017 = vmatpush.bf16.msra.mxu0 %v829
  %2018 = vmatpush.bf16.msra.mxu0 %v821
  %2019 = vmatpush.bf16.msra.mxu0 %v813
  %2020 = vmatpush.bf16.msra.mxu0 %v805
  %2021 = vmatmul.bf16.gmra.mxu0 %v1905
  %v2022 = vpop.f32.mrf.mxu0
  %v2023 = vadd.f32 0.0, %v2022
  %v2024 = vpop.f32.mrf.mxu0
  %2025 = vdwg.mxu0
  %2026 = vmatpush.bf16.msra.mxu0 %v925
  %2027 = vmatpush.bf16.msra.mxu0 %v917
  %2028 = vmatpush.bf16.msra.mxu0 %v909
  %2029 = vmatpush.bf16.msra.mxu0 %v901
  %2030 = vmatpush.bf16.msra.mxu0 %v893
  %2031 = vmatpush.bf16.msra.mxu0 %v885
  %2032 = vmatpush.bf16.msra.mxu0 %v877
  %2033 = vmatpush.bf16.msra.mxu0 %v869
  %2034 = vmatmul.bf16.gmra.mxu0 %v1906
  %v2035 = vpop.f32.mrf.mxu0
  %v2036 = vadd.f32 %v2023, %v2035
  %v2037 = vpop.f32.mrf.mxu0
  %2038 = vdwg.mxu0
  %2039 = vmatpush.bf16.msra.mxu0 %v862
  %2040 = vmatpush.bf16.msra.mxu0 %v854
  %2041 = vmatpush.bf16.msra.mxu0 %v846
  %2042 = vmatpush.bf16.msra.mxu0 %v838
  %2043 = vmatpush.bf16.msra.mxu0 %v830
  %2044 = vmatpush.bf16.msra.mxu0 %v822
  %2045 = vmatpush.bf16.msra.mxu0 %v814
  %2046 = vmatpush.bf16.msra.mxu0 %v806
  %2047 = vmatmul.bf16.gmra.mxu0 %v1905
  %v2048 = vpop.f32.mrf.mxu0
  %v2049 = vadd.f32 0.0, %v2048
  %v2050 = vpop.f32.mrf.mxu0
  %2051 = vdwg.mxu0
  %2052 = vmatpush.bf16.msra.mxu0 %v926
  %2053 = vmatpush.bf16.msra.mxu0 %v918
  %2054 = vmatpush.bf16.msra.mxu0 %v910
  %2055 = vmatpush.bf16.msra.mxu0 %v902
  %2056 = vmatpush.bf16.msra.mxu0 %v894
  %2057 = vmatpush.bf16.msra.mxu0 %v886
  %2058 = vmatpush.bf16.msra.mxu0 %v878
  %2059 = vmatpush.bf16.msra.mxu0 %v870
  %2060 = vmatmul.bf16.gmra.mxu0 %v1906
  %v2061 = vpop.f32.mrf.mxu0
  %v2062 = vadd.f32 %v2049, %v2061
  %v2063 = vpop.f32.mrf.mxu0
  %2064 = vdwg.mxu0
  %2065 = vmatpush.bf16.msra.mxu0 %v863
  %2066 = vmatpush.bf16.msra.mxu0 %v855
  %2067 = vmatpush.bf16.msra.mxu0 %v847
  %2068 = vmatpush.bf16.msra.mxu0 %v839
  %2069 = vmatpush.bf16.msra.mxu0 %v831
  %2070 = vmatpush.bf16.msra.mxu0 %v823
  %2071 = vmatpush.bf16.msra.mxu0 %v815
  %2072 = vmatpush.bf16.msra.mxu0 %v807
  %2073 = vmatmul.bf16.gmra.mxu0 %v1905
  %v2074 = vpop.f32.mrf.mxu0
  %v2075 = vadd.f32 0.0, %v2074
  %v2076 = vpop.f32.mrf.mxu0
  %2077 = vdwg.mxu0
  %2078 = vmatpush.bf16.msra.mxu0 %v927
  %2079 = vmatpush.bf16.msra.mxu0 %v919
  %2080 = vmatpush.bf16.msra.mxu0 %v911
  %2081 = vmatpush.bf16.msra.mxu0 %v903
  %2082 = vmatpush.bf16.msra.mxu0 %v895
  %2083 = vmatpush.bf16.msra.mxu0 %v887
  %2084 = vmatpush.bf16.msra.mxu0 %v879
  %2085 = vmatpush.bf16.msra.mxu0 %v871
  %2086 = vmatmul.bf16.gmra.mxu0 %v1906
  %v2087 = vpop.f32.mrf.mxu0
  %v2088 = vadd.f32 %v2075, %v2087
  %v2089 = vpop.f32.mrf.mxu0
  %2090 = vdwg.mxu0
  %2091 = vmatpush.bf16.msra.mxu0 %v864
  %2092 = vmatpush.bf16.msra.mxu0 %v856
  %2093 = vmatpush.bf16.msra.mxu0 %v848
  %2094 = vmatpush.bf16.msra.mxu0 %v840
  %2095 = vmatpush.bf16.msra.mxu0 %v832
  %2096 = vmatpush.bf16.msra.mxu0 %v824
  %2097 = vmatpush.bf16.msra.mxu0 %v816
  %2098 = vmatpush.bf16.msra.mxu0 %v808
  %2099 = vmatmul.bf16.gmra.mxu0 %v1905
  %v2100 = vpop.f32.mrf.mxu0
  %v2101 = vadd.f32 0.0, %v2100
  %v2102 = vpop.f32.mrf.mxu0
  %2103 = vdwg.mxu0
  %2104 = vmatpush.bf16.msra.mxu0 %v928
  %2105 = vmatpush.bf16.msra.mxu0 %v920
  %2106 = vmatpush.bf16.msra.mxu0 %v912
  %2107 = vmatpush.bf16.msra.mxu0 %v904
  %2108 = vmatpush.bf16.msra.mxu0 %v896
  %2109 = vmatpush.bf16.msra.mxu0 %v888
  %2110 = vmatpush.bf16.msra.mxu0 %v880
  %2111 = vmatpush.bf16.msra.mxu0 %v872
  %2112 = vmatmul.bf16.gmra.mxu0 %v1906
  %v2113 = vpop.f32.mrf.mxu0
  %v2114 = vadd.f32 %v2101, %v2113
  %v2115 = vpop.f32.mrf.mxu0
  %2116 = vdwg.mxu0
  %v2125 = vrot.slane %v1932, 2
  %v2126 = vrot.slane %v1958, 2
  %v2127 = vrot.slane %v1984, 2
  %v2128 = vrot.slane %v2010, 2
  %v2129 = vrot.slane %v2036, 2
  %v2130 = vrot.slane %v2062, 2
  %v2131 = vrot.slane %v2088, 2
  %v2132 = vrot.slane %v2114, 2
  %v2141 = vadd.f32 %v119, %v2125
  %v2142 = vadd.f32 %v142, %v2126
  %v2143 = vadd.f32 %v165, %v2127
  %v2144 = vadd.f32 %v188, %v2128
  %v2145 = vadd.f32 %v211, %v2129
  %v2146 = vadd.f32 %v234, %v2130
  %v2147 = vadd.f32 %v257, %v2131
  %v2148 = vadd.f32 %v280, %v2132
  %v2149 = vsub.f32 0.0, %v2141
  %v2150 = vsub.f32 0.0, %v2142
  %v2151 = vsub.f32 0.0, %v2143
  %v2152 = vsub.f32 0.0, %v2144
  %v2153 = vmul.f32 %v2149, 1.442695
  %v2154 = vpow.pop %v2153
  %v2155 = vmul.f32 %v2150, 1.442695
  %v2156 = vpow.pop %v2155
  %v2157 = vmul.f32 %v2151, 1.442695
  %v2158 = vpow.pop %v2157
  %v2159 = vmul.f32 %v2152, 1.442695
  %v2160 = vpow.pop %v2159
  %v2161 = vadd.f32 %v2154, 1.0
  %v2162 = vadd.f32 %v2156, 1.0
  %v2163 = vadd.f32 %v2158, 1.0
  %v2164 = vadd.f32 %v2160, 1.0
  %v2165 = vrcp.pop %v2161
  %v2166 = vrcp.pop %v2162
  %v2167 = vrcp.pop %v2163
  %v2168 = vrcp.pop %v2164
  %v2169 = vtanh.pop %v2145
  %v2170 = vtanh.pop %v2146
  %v2171 = vsub.f32 0.0, %v2147
  %v2172 = vsub.f32 0.0, %v2148
  %v2173 = vmul.f32 %v2171, 1.442695
  %v2174 = vpow.pop %v2173
  %v2175 = vmul.f32 %v2172, 1.442695
  %v2176 = vpow.pop %v2175
  %v2177 = vadd.f32 %v2174, 1.0
  %v2178 = vadd.f32 %v2176, 1.0
  %v2179 = vrcp.pop %v2177
  %v2180 = vrcp.pop %v2178
  %v2183 = vrot.slane %v1895, 6
  %v2184 = vrot.slane %v1896, 6
  %v2187 = vmul.f32 %v2167, %v2183
  %v2188 = vmul.f32 %v2168, %v2184
  %v2189 = vmul.f32 %v2165, %v2169
  %v2190 = vmul.f32 %v2166, %v2170
  %v2191 = vadd.f32 %v2187, %v2189
  %v2192 = vadd.f32 %v2188, %v2190
  %v2193 = vtanh.pop %v2191
  %v2194 = vtanh.pop %v2192
  %v2195 = vmul.f32 %v2179, %v2193
  %v2196 = vmul.f32 %v2180, %v2194
  %v2197 = vpack.c.bf16 %v2195, %v2195
  %v2198 = vpack.c.bf16 %v2196, %v2196
  %v2201 = vrot.slane %v2197, 3
  %v2202 = vrot.slane %v2198, 3
  %2205 = vmatpush.bf16.msra.mxu0 %v857
  %2206 = vmatpush.bf16.msra.mxu0 %v849
  %2207 = vmatpush.bf16.msra.mxu0 %v841
  %2208 = vmatpush.bf16.msra.mxu0 %v833
  %2209 = vmatpush.bf16.msra.mxu0 %v825
  %2210 = vmatpush.bf16.msra.mxu0 %v817
  %2211 = vmatpush.bf16.msra.mxu0 %v809
  %2212 = vmatpush.bf16.msra.mxu0 %v801
  %2213 = vmatmul.bf16.gmra.mxu0 %v2201
  %v2214 = vpop.f32.mrf.mxu0
  %v2215 = vadd.f32 0.0, %v2214
  %v2216 = vpop.f32.mrf.mxu0
  %2217 = vdwg.mxu0
  %2218 = vmatpush.bf16.msra.mxu0 %v921
  %2219 = vmatpush.bf16.msra.mxu0 %v913
  %2220 = vmatpush.bf16.msra.mxu0 %v905
  %2221 = vmatpush.bf16.msra.mxu0 %v897
  %2222 = vmatpush.bf16.msra.mxu0 %v889
  %2223 = vmatpush.bf16.msra.mxu0 %v881
  %2224 = vmatpush.bf16.msra.mxu0 %v873
  %2225 = vmatpush.bf16.msra.mxu0 %v865
  %2226 = vmatmul.bf16.gmra.mxu0 %v2202
  %v2227 = vpop.f32.mrf.mxu0
  %v2228 = vadd.f32 %v2215, %v2227
  %v2229 = vpop.f32.mrf.mxu0
  %2230 = vdwg.mxu0
  %2231 = vmatpush.bf16.msra.mxu0 %v858
  %2232 = vmatpush.bf16.msra.mxu0 %v850
  %2233 = vmatpush.bf16.msra.mxu0 %v842
  %2234 = vmatpush.bf16.msra.mxu0 %v834
  %2235 = vmatpush.bf16.msra.mxu0 %v826
  %2236 = vmatpush.bf16.msra.mxu0 %v818
  %2237 = vmatpush.bf16.msra.mxu0 %v810
  %2238 = vmatpush.bf16.msra.mxu0 %v802
  %2239 = vmatmul.bf16.gmra.mxu0 %v2201
  %v2240 = vpop.f32.mrf.mxu0
  %v2241 = vadd.f32 0.0, %v2240
  %v2242 = vpop.f32.mrf.mxu0
  %2243 = vdwg.mxu0
  %2244 = vmatpush.bf16.msra.mxu0 %v922
  %2245 = vmatpush.bf16.msra.mxu0 %v914
  %2246 = vmatpush.bf16.msra.mxu0 %v906
  %2247 = vmatpush.bf16.msra.mxu0 %v898
  %2248 = vmatpush.bf16.msra.mxu0 %v890
  %2249 = vmatpush.bf16.msra.mxu0 %v882
  %2250 = vmatpush.bf16.msra.mxu0 %v874
  %2251 = vmatpush.bf16.msra.mxu0 %v866
  %2252 = vmatmul.bf16.gmra.mxu0 %v2202
  %v2253 = vpop.f32.mrf.mxu0
  %v2254 = vadd.f32 %v2241, %v2253
  %v2255 = vpop.f32.mrf.mxu0
  %2256 = vdwg.mxu0
  %2257 = vmatpush.bf16.msra.mxu0 %v859
  %2258 = vmatpush.bf16.msra.mxu0 %v851
  %2259 = vmatpush.bf16.msra.mxu0 %v843
  %2260 = vmatpush.bf16.msra.mxu0 %v835
  %2261 = vmatpush.bf16.msra.mxu0 %v827
  %2262 = vmatpush.bf16.msra.mxu0 %v819
  %2263 = vmatpush.bf16.msra.mxu0 %v811
  %2264 = vmatpush.bf16.msra.mxu0 %v803
  %2265 = vmatmul.bf16.gmra.mxu0 %v2201
  %v2266 = vpop.f32.mrf.mxu0
  %v2267 = vadd.f32 0.0, %v2266
  %v2268 = vpop.f32.mrf.mxu0
  %2269 = vdwg.mxu0
  %2270 = vmatpush.bf16.msra.mxu0 %v923
  %2271 = vmatpush.bf16.msra.mxu0 %v915
  %2272 = vmatpush.bf16.msra.mxu0 %v907
  %2273 = vmatpush.bf16.msra.mxu0 %v899
  %2274 = vmatpush.bf16.msra.mxu0 %v891
  %2275 = vmatpush.bf16.msra.mxu0 %v883
  %2276 = vmatpush.bf16.msra.mxu0 %v875
  %2277 = vmatpush.bf16.msra.mxu0 %v867
  %2278 = vmatmul.bf16.gmra.mxu0 %v2202
  %v2279 = vpop.f32.mrf.mxu0
  %v2280 = vadd.f32 %v2267, %v2279
  %v2281 = vpop.f32.mrf.mxu0
  %2282 = vdwg.mxu0
  %2283 = vmatpush.bf16.msra.mxu0 %v860
  %2284 = vmatpush.bf16.msra.mxu0 %v852
  %2285 = vmatpush.bf16.msra.mxu0 %v844
  %2286 = vmatpush.bf16.msra.mxu0 %v836
  %2287 = vmatpush.bf16.msra.mxu0 %v828
  %2288 = vmatpush.bf16.msra.mxu0 %v820
  %2289 = vmatpush.bf16.msra.mxu0 %v812
  %2290 = vmatpush.bf16.msra.mxu0 %v804
  %2291 = vmatmul.bf16.gmra.mxu0 %v2201
  %v2292 = vpop.f32.mrf.mxu0
  %v2293 = vadd.f32 0.0, %v2292
  %v2294 = vpop.f32.mrf.mxu0
  %2295 = vdwg.mxu0
  %2296 = vmatpush.bf16.msra.mxu0 %v924
  %2297 = vmatpush.bf16.msra.mxu0 %v916
  %2298 = vmatpush.bf16.msra.mxu0 %v908
  %2299 = vmatpush.bf16.msra.mxu0 %v900
  %2300 = vmatpush.bf16.msra.mxu0 %v892
  %2301 = vmatpush.bf16.msra.mxu0 %v884
  %2302 = vmatpush.bf16.msra.mxu0 %v876
  %2303 = vmatpush.bf16.msra.mxu0 %v868
  %2304 = vmatmul.bf16.gmra.mxu0 %v2202
  %v2305 = vpop.f32.mrf.mxu0
  %v2306 = vadd.f32 %v2293, %v2305
  %v2307 = vpop.f32.mrf.mxu0
  %2308 = vdwg.mxu0
  %2309 = vmatpush.bf16.msra.mxu0 %v861
  %2310 = vmatpush.bf16.msra.mxu0 %v853
  %2311 = vmatpush.bf16.msra.mxu0 %v845
  %2312 = vmatpush.bf16.msra.mxu0 %v837
  %2313 = vmatpush.bf16.msra.mxu0 %v829
  %2314 = vmatpush.bf16.msra.mxu0 %v821
  %2315 = vmatpush.bf16.msra.mxu0 %v813
  %2316 = vmatpush.bf16.msra.mxu0 %v805
  %2317 = vmatmul.bf16.gmra.mxu0 %v2201
  %v2318 = vpop.f32.mrf.mxu0
  %v2319 = vadd.f32 0.0, %v2318
  %v2320 = vpop.f32.mrf.mxu0
  %2321 = vdwg.mxu0
  %2322 = vmatpush.bf16.msra.mxu0 %v925
  %2323 = vmatpush.bf16.msra.mxu0 %v917
  %2324 = vmatpush.bf16.msra.mxu0 %v909
  %2325 = vmatpush.bf16.msra.mxu0 %v901
  %2326 = vmatpush.bf16.msra.mxu0 %v893
  %2327 = vmatpush.bf16.msra.mxu0 %v885
  %2328 = vmatpush.bf16.msra.mxu0 %v877
  %2329 = vmatpush.bf16.msra.mxu0 %v869
  %2330 = vmatmul.bf16.gmra.mxu0 %v2202
  %v2331 = vpop.f32.mrf.mxu0
  %v2332 = vadd.f32 %v2319, %v2331
  %v2333 = vpop.f32.mrf.mxu0
  %2334 = vdwg.mxu0
  %2335 = vmatpush.bf16.msra.mxu0 %v862
  %2336 = vmatpush.bf16.msra.mxu0 %v854
  %2337 = vmatpush.bf16.msra.mxu0 %v846
  %2338 = vmatpush.bf16.msra.mxu0 %v838
  %2339 = vmatpush.bf16.msra.mxu0 %v830
  %2340 = vmatpush.bf16.msra.mxu0 %v822
  %2341 = vmatpush.bf16.msra.mxu0 %v814
  %2342 = vmatpush.bf16.msra.mxu0 %v806
  %2343 = vmatmul.bf16.gmra.mxu0 %v2201
  %v2344 = vpop.f32.mrf.mxu0
  %v2345 = vadd.f32 0.0, %v2344
  %v2346 = vpop.f32.mrf.mxu0
  %2347 = vdwg.mxu0
  %2348 = vmatpush.bf16.msra.mxu0 %v926
  %2349 = vmatpush.bf16.msra.mxu0 %v918
  %2350 = vmatpush.bf16.msra.mxu0 %v910
  %2351 = vmatpush.bf16.msra.mxu0 %v902
  %2352 = vmatpush.bf16.msra.mxu0 %v894
  %2353 = vmatpush.bf16.msra.mxu0 %v886
  %2354 = vmatpush.bf16.msra.mxu0 %v878
  %2355 = vmatpush.bf16.msra.mxu0 %v870
  %2356 = vmatmul.bf16.gmra.mxu0 %v2202
  %v2357 = vpop.f32.mrf.mxu0
  %v2358 = vadd.f32 %v2345, %v2357
  %v2359 = vpop.f32.mrf.mxu0
  %2360 = vdwg.mxu0
  %2361 = vmatpush.bf16.msra.mxu0 %v863
  %2362 = vmatpush.bf16.msra.mxu0 %v855
  %2363 = vmatpush.bf16.msra.mxu0 %v847
  %2364 = vmatpush.bf16.msra.mxu0 %v839
  %2365 = vmatpush.bf16.msra.mxu0 %v831
  %2366 = vmatpush.bf16.msra.mxu0 %v823
  %2367 = vmatpush.bf16.msra.mxu0 %v815
  %2368 = vmatpush.bf16.msra.mxu0 %v807
  %2369 = vmatmul.bf16.gmra.mxu0 %v2201
  %v2370 = vpop.f32.mrf.mxu0
  %v2371 = vadd.f32 0.0, %v2370
  %v2372 = vpop.f32.mrf.mxu0
  %2373 = vdwg.mxu0
  %2374 = vmatpush.bf16.msra.mxu0 %v927
  %2375 = vmatpush.bf16.msra.mxu0 %v919
  %2376 = vmatpush.bf16.msra.mxu0 %v911
  %2377 = vmatpush.bf16.msra.mxu0 %v903
  %2378 = vmatpush.bf16.msra.mxu0 %v895
  %2379 = vmatpush.bf16.msra.mxu0 %v887
  %2380 = vmatpush.bf16.msra.mxu0 %v879
  %2381 = vmatpush.bf16.msra.mxu0 %v871
  %2382 = vmatmul.bf16.gmra.mxu0 %v2202
  %v2383 = vpop.f32.mrf.mxu0
  %v2384 = vadd.f32 %v2371, %v2383
  %v2385 = vpop.f32.mrf.mxu0
  %2386 = vdwg.mxu0
  %2387 = vmatpush.bf16.msra.mxu0 %v864
  %2388 = vmatpush.bf16.msra.mxu0 %v856
  %2389 = vmatpush.bf16.msra.mxu0 %v848
  %2390 = vmatpush.bf16.msra.mxu0 %v840
  %2391 = vmatpush.bf16.msra.mxu0 %v832
  %2392 = vmatpush.bf16.msra.mxu0 %v824
  %2393 = vmatpush.bf16.msra.mxu0 %v816
  %2394 = vmatpush.bf16.msra.mxu0 %v808
  %2395 = vmatmul.bf16.gmra.mxu0 %v2201
  %v2396 = vpop.f32.mrf.mxu0
  %v2397 = vadd.f32 0.0, %v2396
  %v2398 = vpop.f32.mrf.mxu0
  %2399 = vdwg.mxu0
  %2400 = vmatpush.bf16.msra.mxu0 %v928
  %2401 = vmatpush.bf16.msra.mxu0 %v920
  %2402 = vmatpush.bf16.msra.mxu0 %v912
  %2403 = vmatpush.bf16.msra.mxu0 %v904
  %2404 = vmatpush.bf16.msra.mxu0 %v896
  %2405 = vmatpush.bf16.msra.mxu0 %v888
  %2406 = vmatpush.bf16.msra.mxu0 %v880
  %2407 = vmatpush.bf16.msra.mxu0 %v872
  %2408 = vmatmul.bf16.gmra.mxu0 %v2202
  %v2409 = vpop.f32.mrf.mxu0
  %v2410 = vadd.f32 %v2397, %v2409
  %v2411 = vpop.f32.mrf.mxu0
  %2412 = vdwg.mxu0
  %v2413 = vadd.f32 %v122, %v2228
  %v2414 = vadd.f32 %v145, %v2254
  %v2415 = vadd.f32 %v168, %v2280
  %v2416 = vadd.f32 %v191, %v2306
  %v2417 = vadd.f32 %v214, %v2332
  %v2418 = vadd.f32 %v237, %v2358
  %v2419 = vadd.f32 %v260, %v2384
  %v2420 = vadd.f32 %v283, %v2410
  %v2421 = vsub.f32 0.0, %v2413
  %v2422 = vsub.f32 0.0, %v2414
  %v2423 = vsub.f32 0.0, %v2415
  %v2424 = vsub.f32 0.0, %v2416
  %v2425 = vmul.f32 %v2421, 1.442695
  %v2426 = vpow.pop %v2425
  %v2427 = vmul.f32 %v2422, 1.442695
  %v2428 = vpow.pop %v2427
  %v2429 = vmul.f32 %v2423, 1.442695
  %v2430 = vpow.pop %v2429
  %v2431 = vmul.f32 %v2424, 1.442695
  %v2432 = vpow.pop %v2431
  %v2433 = vadd.f32 %v2426, 1.0
  %v2434 = vadd.f32 %v2428, 1.0
  %v2435 = vadd.f32 %v2430, 1.0
  %v2436 = vadd.f32 %v2432, 1.0
  %v2437 = vrcp.pop %v2433
  %v2438 = vrcp.pop %v2434
  %v2439 = vrcp.pop %v2435
  %v2440 = vrcp.pop %v2436
  %v2441 = vtanh.pop %v2417
  %v2442 = vtanh.pop %v2418
  %v2443 = vsub.f32 0.0, %v2419
  %v2444 = vsub.f32 0.0, %v2420
  %v2445 = vmul.f32 %v2443, 1.442695
  %v2446 = vpow.pop %v2445
  %v2447 = vmul.f32 %v2444, 1.442695
  %v2448 = vpow.pop %v2447
  %v2449 = vadd.f32 %v2446, 1.0
  %v2450 = vadd.f32 %v2448, 1.0
  %v2451 = vrcp.pop %v2449
  %v2452 = vrcp.pop %v2450
  %v2455 = vrot.slane %v2191, 6
  %v2456 = vrot.slane %v2192, 6
  %v2459 = vmul.f32 %v2439, %v2455
  %v2460 = vmul.f32 %v2440, %v2456
  %v2461 = vmul.f32 %v2437, %v2441
  %v2462 = vmul.f32 %v2438, %v2442
  %v2463 = vadd.f32 %v2459, %v2461
  %v2464 = vadd.f32 %v2460, %v2462
  %v2465 = vtanh.pop %v2463
  %v2466 = vtanh.pop %v2464
  %v2467 = vmul.f32 %v2451, %v2465
  %v2468 = vmul.f32 %v2452, %v2466
  %v2469 = vpack.c.bf16 %v2467, %v2467
  %v2470 = vpack.c.bf16 %v2468, %v2468
  %2471 = vmatpush.bf16.msra.mxu0 %v857
  %2472 = vmatpush.bf16.msra.mxu0 %v849
  %2473 = vmatpush.bf16.msra.mxu0 %v841
  %2474 = vmatpush.bf16.msra.mxu0 %v833
  %2475 = vmatpush.bf16.msra.mxu0 %v825
  %2476 = vmatpush.bf16.msra.mxu0 %v817
  %2477 = vmatpush.bf16.msra.mxu0 %v809
  %2478 = vmatpush.bf16.msra.mxu0 %v801
  %2479 = vmatmul.bf16.gmra.mxu0 %v2469
  %v2480 = vpop.f32.mrf.mxu0
  %v2481 = vadd.f32 0.0, %v2480
  %v2482 = vpop.f32.mrf.mxu0
  %2483 = vdwg.mxu0
  %2484 = vmatpush.bf16.msra.mxu0 %v921
  %2485 = vmatpush.bf16.msra.mxu0 %v913
  %2486 = vmatpush.bf16.msra.mxu0 %v905
  %2487 = vmatpush.bf16.msra.mxu0 %v897
  %2488 = vmatpush.bf16.msra.mxu0 %v889
  %2489 = vmatpush.bf16.msra.mxu0 %v881
  %2490 = vmatpush.bf16.msra.mxu0 %v873
  %2491 = vmatpush.bf16.msra.mxu0 %v865
  %2492 = vmatmul.bf16.gmra.mxu0 %v2470
  %v2493 = vpop.f32.mrf.mxu0
  %v2494 = vadd.f32 %v2481, %v2493
  %v2495 = vpop.f32.mrf.mxu0
  %2496 = vdwg.mxu0
  %2497 = vmatpush.bf16.msra.mxu0 %v858
  %2498 = vmatpush.bf16.msra.mxu0 %v850
  %2499 = vmatpush.bf16.msra.mxu0 %v842
  %2500 = vmatpush.bf16.msra.mxu0 %v834
  %2501 = vmatpush.bf16.msra.mxu0 %v826
  %2502 = vmatpush.bf16.msra.mxu0 %v818
  %2503 = vmatpush.bf16.msra.mxu0 %v810
  %2504 = vmatpush.bf16.msra.mxu0 %v802
  %2505 = vmatmul.bf16.gmra.mxu0 %v2469
  %v2506 = vpop.f32.mrf.mxu0
  %v2507 = vadd.f32 0.0, %v2506
  %v2508 = vpop.f32.mrf.mxu0
  %2509 = vdwg.mxu0
  %2510 = vmatpush.bf16.msra.mxu0 %v922
  %2511 = vmatpush.bf16.msra.mxu0 %v914
  %2512 = vmatpush.bf16.msra.mxu0 %v906
  %2513 = vmatpush.bf16.msra.mxu0 %v898
  %2514 = vmatpush.bf16.msra.mxu0 %v890
  %2515 = vmatpush.bf16.msra.mxu0 %v882
  %2516 = vmatpush.bf16.msra.mxu0 %v874
  %2517 = vmatpush.bf16.msra.mxu0 %v866
  %2518 = vmatmul.bf16.gmra.mxu0 %v2470
  %v2519 = vpop.f32.mrf.mxu0
  %v2520 = vadd.f32 %v2507, %v2519
  %v2521 = vpop.f32.mrf.mxu0
  %2522 = vdwg.mxu0
  %2523 = vmatpush.bf16.msra.mxu0 %v859
  %2524 = vmatpush.bf16.msra.mxu0 %v851
  %2525 = vmatpush.bf16.msra.mxu0 %v843
  %2526 = vmatpush.bf16.msra.mxu0 %v835
  %2527 = vmatpush.bf16.msra.mxu0 %v827
  %2528 = vmatpush.bf16.msra.mxu0 %v819
  %2529 = vmatpush.bf16.msra.mxu0 %v811
  %2530 = vmatpush.bf16.msra.mxu0 %v803
  %2531 = vmatmul.bf16.gmra.mxu0 %v2469
  %v2532 = vpop.f32.mrf.mxu0
  %v2533 = vadd.f32 0.0, %v2532
  %v2534 = vpop.f32.mrf.mxu0
  %2535 = vdwg.mxu0
  %2536 = vmatpush.bf16.msra.mxu0 %v923
  %2537 = vmatpush.bf16.msra.mxu0 %v915
  %2538 = vmatpush.bf16.msra.mxu0 %v907
  %2539 = vmatpush.bf16.msra.mxu0 %v899
  %2540 = vmatpush.bf16.msra.mxu0 %v891
  %2541 = vmatpush.bf16.msra.mxu0 %v883
  %2542 = vmatpush.bf16.msra.mxu0 %v875
  %2543 = vmatpush.bf16.msra.mxu0 %v867
  %2544 = vmatmul.bf16.gmra.mxu0 %v2470
  %v2545 = vpop.f32.mrf.mxu0
  %v2546 = vadd.f32 %v2533, %v2545
  %v2547 = vpop.f32.mrf.mxu0
  %2548 = vdwg.mxu0
  %2549 = vmatpush.bf16.msra.mxu0 %v860
  %2550 = vmatpush.bf16.msra.mxu0 %v852
  %2551 = vmatpush.bf16.msra.mxu0 %v844
  %2552 = vmatpush.bf16.msra.mxu0 %v836
  %2553 = vmatpush.bf16.msra.mxu0 %v828
  %2554 = vmatpush.bf16.msra.mxu0 %v820
  %2555 = vmatpush.bf16.msra.mxu0 %v812
  %2556 = vmatpush.bf16.msra.mxu0 %v804
  %2557 = vmatmul.bf16.gmra.mxu0 %v2469
  %v2558 = vpop.f32.mrf.mxu0
  %v2559 = vadd.f32 0.0, %v2558
  %v2560 = vpop.f32.mrf.mxu0
  %2561 = vdwg.mxu0
  %2562 = vmatpush.bf16.msra.mxu0 %v924
  %2563 = vmatpush.bf16.msra.mxu0 %v916
  %2564 = vmatpush.bf16.msra.mxu0 %v908
  %2565 = vmatpush.bf16.msra.mxu0 %v900
  %2566 = vmatpush.bf16.msra.mxu0 %v892
  %2567 = vmatpush.bf16.msra.mxu0 %v884
  %2568 = vmatpush.bf16.msra.mxu0 %v876
  %2569 = vmatpush.bf16.msra.mxu0 %v868
  %2570 = vmatmul.bf16.gmra.mxu0 %v2470
  %v2571 = vpop.f32.mrf.mxu0
  %v2572 = vadd.f32 %v2559, %v2571
  %v2573 = vpop.f32.mrf.mxu0
  %2574 = vdwg.mxu0
  %2575 = vmatpush.bf16.msra.mxu0 %v861
  %2576 = vmatpush.bf16.msra.mxu0 %v853
  %2577 = vmatpush.bf16.msra.mxu0 %v845
  %2578 = vmatpush.bf16.msra.mxu0 %v837
  %2579 = vmatpush.bf16.msra.mxu0 %v829
  %2580 = vmatpush.bf16.msra.mxu0 %v821
  %2581 = vmatpush.bf16.msra.mxu0 %v813
  %2582 = vmatpush.bf16.msra.mxu0 %v805
  %2583 = vmatmul.bf16.gmra.mxu0 %v2469
  %v2584 = vpop.f32.mrf.mxu0
  %v2585 = vadd.f32 0.0, %v2584
  %v2586 = vpop.f32.mrf.mxu0
  %2587 = vdwg.mxu0
  %2588 = vmatpush.bf16.msra.mxu0 %v925
  %2589 = vmatpush.bf16.msra.mxu0 %v917
  %2590 = vmatpush.bf16.msra.mxu0 %v909
  %2591 = vmatpush.bf16.msra.mxu0 %v901
  %2592 = vmatpush.bf16.msra.mxu0 %v893
  %2593 = vmatpush.bf16.msra.mxu0 %v885
  %2594 = vmatpush.bf16.msra.mxu0 %v877
  %2595 = vmatpush.bf16.msra.mxu0 %v869
  %2596 = vmatmul.bf16.gmra.mxu0 %v2470
  %v2597 = vpop.f32.mrf.mxu0
  %v2598 = vadd.f32 %v2585, %v2597
  %v2599 = vpop.f32.mrf.mxu0
  %2600 = vdwg.mxu0
  %2601 = vmatpush.bf16.msra.mxu0 %v862
  %2602 = vmatpush.bf16.msra.mxu0 %v854
  %2603 = vmatpush.bf16.msra.mxu0 %v846
  %2604 = vmatpush.bf16.msra.mxu0 %v838
  %2605 = vmatpush.bf16.msra.mxu0 %v830
  %2606 = vmatpush.bf16.msra.mxu0 %v822
  %2607 = vmatpush.bf16.msra.mxu0 %v814
  %2608 = vmatpush.bf16.msra.mxu0 %v806
  %2609 = vmatmul.bf16.gmra.mxu0 %v2469
  %v2610 = vpop.f32.mrf.mxu0
  %v2611 = vadd.f32 0.0, %v2610
  %v2612 = vpop.f32.mrf.mxu0
  %2613 = vdwg.mxu0
  %2614 = vmatpush.bf16.msra.mxu0 %v926
  %2615 = vmatpush.bf16.msra.mxu0 %v918
  %2616 = vmatpush.bf16.msra.mxu0 %v910
  %2617 = vmatpush.bf16.msra.mxu0 %v902
  %2618 = vmatpush.bf16.msra.mxu0 %v894
  %2619 = vmatpush.bf16.msra.mxu0 %v886
  %2620 = vmatpush.bf16.msra.mxu0 %v878
  %2621 = vmatpush.bf16.msra.mxu0 %v870
  %2622 = vmatmul.bf16.gmra.mxu0 %v2470
  %v2623 = vpop.f32.mrf.mxu0
  %v2624 = vadd.f32 %v2611, %v2623
  %v2625 = vpop.f32.mrf.mxu0
  %2626 = vdwg.mxu0
  %2627 = vmatpush.bf16.msra.mxu0 %v863
  %2628 = vmatpush.bf16.msra.mxu0 %v855
  %2629 = vmatpush.bf16.msra.mxu0 %v847
  %2630 = vmatpush.bf16.msra.mxu0 %v839
  %2631 = vmatpush.bf16.msra.mxu0 %v831
  %2632 = vmatpush.bf16.msra.mxu0 %v823
  %2633 = vmatpush.bf16.msra.mxu0 %v815
  %2634 = vmatpush.bf16.msra.mxu0 %v807
  %2635 = vmatmul.bf16.gmra.mxu0 %v2469
  %v2636 = vpop.f32.mrf.mxu0
  %v2637 = vadd.f32 0.0, %v2636
  %v2638 = vpop.f32.mrf.mxu0
  %2639 = vdwg.mxu0
  %2640 = vmatpush.bf16.msra.mxu0 %v927
  %2641 = vmatpush.bf16.msra.mxu0 %v919
  %2642 = vmatpush.bf16.msra.mxu0 %v911
  %2643 = vmatpush.bf16.msra.mxu0 %v903
  %2644 = vmatpush.bf16.msra.mxu0 %v895
  %2645 = vmatpush.bf16.msra.mxu0 %v887
  %2646 = vmatpush.bf16.msra.mxu0 %v879
  %2647 = vmatpush.bf16.msra.mxu0 %v871
  %2648 = vmatmul.bf16.gmra.mxu0 %v2470
  %v2649 = vpop.f32.mrf.mxu0
  %v2650 = vadd.f32 %v2637, %v2649
  %v2651 = vpop.f32.mrf.mxu0
  %2652 = vdwg.mxu0
  %2653 = vmatpush.bf16.msra.mxu0 %v864
  %2654 = vmatpush.bf16.msra.mxu0 %v856
  %2655 = vmatpush.bf16.msra.mxu0 %v848
  %2656 = vmatpush.bf16.msra.mxu0 %v840
  %2657 = vmatpush.bf16.msra.mxu0 %v832
  %2658 = vmatpush.bf16.msra.mxu0 %v824
  %2659 = vmatpush.bf16.msra.mxu0 %v816
  %2660 = vmatpush.bf16.msra.mxu0 %v808
  %2661 = vmatmul.bf16.gmra.mxu0 %v2469
  %v2662 = vpop.f32.mrf.mxu0
  %v2663 = vadd.f32 0.0, %v2662
  %v2664 = vpop.f32.mrf.mxu0
  %2665 = vdwg.mxu0
  %2666 = vmatpush.bf16.msra.mxu0 %v928
  %2667 = vmatpush.bf16.msra.mxu0 %v920
  %2668 = vmatpush.bf16.msra.mxu0 %v912
  %2669 = vmatpush.bf16.msra.mxu0 %v904
  %2670 = vmatpush.bf16.msra.mxu0 %v896
  %2671 = vmatpush.bf16.msra.mxu0 %v888
  %2672 = vmatpush.bf16.msra.mxu0 %v880
  %2673 = vmatpush.bf16.msra.mxu0 %v872
  %2674 = vmatmul.bf16.gmra.mxu0 %v2470
  %v2675 = vpop.f32.mrf.mxu0
  %v2676 = vadd.f32 %v2663, %v2675
  %v2677 = vpop.f32.mrf.mxu0
  %2678 = vdwg.mxu0
  %v2687 = vrot.slane %v2494, 6
  %v2688 = vrot.slane %v2520, 6
  %v2689 = vrot.slane %v2546, 6
  %v2690 = vrot.slane %v2572, 6
  %v2691 = vrot.slane %v2598, 6
  %v2692 = vrot.slane %v2624, 6
  %v2693 = vrot.slane %v2650, 6
  %v2694 = vrot.slane %v2676, 6
  %v2703 = vadd.f32 %v122, %v2687
  %v2704 = vadd.f32 %v145, %v2688
  %v2705 = vadd.f32 %v168, %v2689
  %v2706 = vadd.f32 %v191, %v2690
  %v2707 = vadd.f32 %v214, %v2691
  %v2708 = vadd.f32 %v237, %v2692
  %v2709 = vadd.f32 %v260, %v2693
  %v2710 = vadd.f32 %v283, %v2694
  %v2711 = vsub.f32 0.0, %v2703
  %v2712 = vsub.f32 0.0, %v2704
  %v2713 = vsub.f32 0.0, %v2705
  %v2714 = vsub.f32 0.0, %v2706
  %v2715 = vmul.f32 %v2711, 1.442695
  %v2716 = vpow.pop %v2715
  %v2717 = vmul.f32 %v2712, 1.442695
  %v2718 = vpow.pop %v2717
  %v2719 = vmul.f32 %v2713, 1.442695
  %v2720 = vpow.pop %v2719
  %v2721 = vmul.f32 %v2714, 1.442695
  %v2722 = vpow.pop %v2721
  %v2723 = vadd.f32 %v2716, 1.0
  %v2724 = vadd.f32 %v2718, 1.0
  %v2725 = vadd.f32 %v2720, 1.0
  %v2726 = vadd.f32 %v2722, 1.0
  %v2727 = vrcp.pop %v2723
  %v2728 = vrcp.pop %v2724
  %v2729 = vrcp.pop %v2725
  %v2730 = vrcp.pop %v2726
  %v2731 = vtanh.pop %v2707
  %v2732 = vtanh.pop %v2708
  %v2733 = vsub.f32 0.0, %v2709
  %v2734 = vsub.f32 0.0, %v2710
  %v2735 = vmul.f32 %v2733, 1.442695
  %v2736 = vpow.pop %v2735
  %v2737 = vmul.f32 %v2734, 1.442695
  %v2738 = vpow.pop %v2737
  %v2739 = vadd.f32 %v2736, 1.0
  %v2740 = vadd.f32 %v2738, 1.0
  %v2741 = vrcp.pop %v2739
  %v2742 = vrcp.pop %v2740
  %v2745 = vrot.slane %v2463, 6
  %v2746 = vrot.slane %v2464, 6
  %v2749 = vmul.f32 %v2729, %v2745
  %v2750 = vmul.f32 %v2730, %v2746
  %v2751 = vmul.f32 %v2727, %v2731
  %v2752 = vmul.f32 %v2728, %v2732
  %v2753 = vadd.f32 %v2749, %v2751
  %v2754 = vadd.f32 %v2750, %v2752
  %v2755 = vtanh.pop %v2753
  %v2756 = vtanh.pop %v2754
  %v2757 = vmul.f32 %v2741, %v2755
  %v2758 = vmul.f32 %v2742, %v2756
  %v2759 = vpack.c.bf16 %v2757, %v2757
  %v2760 = vpack.c.bf16 %v2758, %v2758
  %v2763 = vrot.slane %v2759, 1
  %v2764 = vrot.slane %v2760, 1
  %2767 = vmatpush.bf16.msra.mxu0 %v857
  %2768 = vmatpush.bf16.msra.mxu0 %v849
  %2769 = vmatpush.bf16.msra.mxu0 %v841
  %2770 = vmatpush.bf16.msra.mxu0 %v833
  %2771 = vmatpush.bf16.msra.mxu0 %v825
  %2772 = vmatpush.bf16.msra.mxu0 %v817
  %2773 = vmatpush.bf16.msra.mxu0 %v809
  %2774 = vmatpush.bf16.msra.mxu0 %v801
  %2775 = vmatmul.bf16.gmra.mxu0 %v2763
  %v2776 = vpop.f32.mrf.mxu0
  %v2777 = vadd.f32 0.0, %v2776
  %v2778 = vpop.f32.mrf.mxu0
  %2779 = vdwg.mxu0
  %2780 = vmatpush.bf16.msra.mxu0 %v921
  %2781 = vmatpush.bf16.msra.mxu0 %v913
  %2782 = vmatpush.bf16.msra.mxu0 %v905
  %2783 = vmatpush.bf16.msra.mxu0 %v897
  %2784 = vmatpush.bf16.msra.mxu0 %v889
  %2785 = vmatpush.bf16.msra.mxu0 %v881
  %2786 = vmatpush.bf16.msra.mxu0 %v873
  %2787 = vmatpush.bf16.msra.mxu0 %v865
  %2788 = vmatmul.bf16.gmra.mxu0 %v2764
  %v2789 = vpop.f32.mrf.mxu0
  %v2790 = vadd.f32 %v2777, %v2789
  %v2791 = vpop.f32.mrf.mxu0
  %2792 = vdwg.mxu0
  %2793 = vmatpush.bf16.msra.mxu0 %v858
  %2794 = vmatpush.bf16.msra.mxu0 %v850
  %2795 = vmatpush.bf16.msra.mxu0 %v842
  %2796 = vmatpush.bf16.msra.mxu0 %v834
  %2797 = vmatpush.bf16.msra.mxu0 %v826
  %2798 = vmatpush.bf16.msra.mxu0 %v818
  %2799 = vmatpush.bf16.msra.mxu0 %v810
  %2800 = vmatpush.bf16.msra.mxu0 %v802
  %2801 = vmatmul.bf16.gmra.mxu0 %v2763
  %v2802 = vpop.f32.mrf.mxu0
  %v2803 = vadd.f32 0.0, %v2802
  %v2804 = vpop.f32.mrf.mxu0
  %2805 = vdwg.mxu0
  %2806 = vmatpush.bf16.msra.mxu0 %v922
  %2807 = vmatpush.bf16.msra.mxu0 %v914
  %2808 = vmatpush.bf16.msra.mxu0 %v906
  %2809 = vmatpush.bf16.msra.mxu0 %v898
  %2810 = vmatpush.bf16.msra.mxu0 %v890
  %2811 = vmatpush.bf16.msra.mxu0 %v882
  %2812 = vmatpush.bf16.msra.mxu0 %v874
  %2813 = vmatpush.bf16.msra.mxu0 %v866
  %2814 = vmatmul.bf16.gmra.mxu0 %v2764
  %v2815 = vpop.f32.mrf.mxu0
  %v2816 = vadd.f32 %v2803, %v2815
  %v2817 = vpop.f32.mrf.mxu0
  %2818 = vdwg.mxu0
  %2819 = vmatpush.bf16.msra.mxu0 %v859
  %2820 = vmatpush.bf16.msra.mxu0 %v851
  %2821 = vmatpush.bf16.msra.mxu0 %v843
  %2822 = vmatpush.bf16.msra.mxu0 %v835
  %2823 = vmatpush.bf16.msra.mxu0 %v827
  %2824 = vmatpush.bf16.msra.mxu0 %v819
  %2825 = vmatpush.bf16.msra.mxu0 %v811
  %2826 = vmatpush.bf16.msra.mxu0 %v803
  %2827 = vmatmul.bf16.gmra.mxu0 %v2763
  %v2828 = vpop.f32.mrf.mxu0
  %v2829 = vadd.f32 0.0, %v2828
  %v2830 = vpop.f32.mrf.mxu0
  %2831 = vdwg.mxu0
  %2832 = vmatpush.bf16.msra.mxu0 %v923
  %2833 = vmatpush.bf16.msra.mxu0 %v915
  %2834 = vmatpush.bf16.msra.mxu0 %v907
  %2835 = vmatpush.bf16.msra.mxu0 %v899
  %2836 = vmatpush.bf16.msra.mxu0 %v891
  %2837 = vmatpush.bf16.msra.mxu0 %v883
  %2838 = vmatpush.bf16.msra.mxu0 %v875
  %2839 = vmatpush.bf16.msra.mxu0 %v867
  %2840 = vmatmul.bf16.gmra.mxu0 %v2764
  %v2841 = vpop.f32.mrf.mxu0
  %v2842 = vadd.f32 %v2829, %v2841
  %v2843 = vpop.f32.mrf.mxu0
  %2844 = vdwg.mxu0
  %2845 = vmatpush.bf16.msra.mxu0 %v860
  %2846 = vmatpush.bf16.msra.mxu0 %v852
  %2847 = vmatpush.bf16.msra.mxu0 %v844
  %2848 = vmatpush.bf16.msra.mxu0 %v836
  %2849 = vmatpush.bf16.msra.mxu0 %v828
  %2850 = vmatpush.bf16.msra.mxu0 %v820
  %2851 = vmatpush.bf16.msra.mxu0 %v812
  %2852 = vmatpush.bf16.msra.mxu0 %v804
  %2853 = vmatmul.bf16.gmra.mxu0 %v2763
  %v2854 = vpop.f32.mrf.mxu0
  %v2855 = vadd.f32 0.0, %v2854
  %v2856 = vpop.f32.mrf.mxu0
  %2857 = vdwg.mxu0
  %2858 = vmatpush.bf16.msra.mxu0 %v924
  %2859 = vmatpush.bf16.msra.mxu0 %v916
  %2860 = vmatpush.bf16.msra.mxu0 %v908
  %2861 = vmatpush.bf16.msra.mxu0 %v900
  %2862 = vmatpush.bf16.msra.mxu0 %v892
  %2863 = vmatpush.bf16.msra.mxu0 %v884
  %2864 = vmatpush.bf16.msra.mxu0 %v876
  %2865 = vmatpush.bf16.msra.mxu0 %v868
  %2866 = vmatmul.bf16.gmra.mxu0 %v2764
  %v2867 = vpop.f32.mrf.mxu0
  %v2868 = vadd.f32 %v2855, %v2867
  %v2869 = vpop.f32.mrf.mxu0
  %2870 = vdwg.mxu0
  %2871 = vmatpush.bf16.msra.mxu0 %v861
  %2872 = vmatpush.bf16.msra.mxu0 %v853
  %2873 = vmatpush.bf16.msra.mxu0 %v845
  %2874 = vmatpush.bf16.msra.mxu0 %v837
  %2875 = vmatpush.bf16.msra.mxu0 %v829
  %2876 = vmatpush.bf16.msra.mxu0 %v821
  %2877 = vmatpush.bf16.msra.mxu0 %v813
  %2878 = vmatpush.bf16.msra.mxu0 %v805
  %2879 = vmatmul.bf16.gmra.mxu0 %v2763
  %v2880 = vpop.f32.mrf.mxu0
  %v2881 = vadd.f32 0.0, %v2880
  %v2882 = vpop.f32.mrf.mxu0
  %2883 = vdwg.mxu0
  %2884 = vmatpush.bf16.msra.mxu0 %v925
  %2885 = vmatpush.bf16.msra.mxu0 %v917
  %2886 = vmatpush.bf16.msra.mxu0 %v909
  %2887 = vmatpush.bf16.msra.mxu0 %v901
  %2888 = vmatpush.bf16.msra.mxu0 %v893
  %2889 = vmatpush.bf16.msra.mxu0 %v885
  %2890 = vmatpush.bf16.msra.mxu0 %v877
  %2891 = vmatpush.bf16.msra.mxu0 %v869
  %2892 = vmatmul.bf16.gmra.mxu0 %v2764
  %v2893 = vpop.f32.mrf.mxu0
  %v2894 = vadd.f32 %v2881, %v2893
  %v2895 = vpop.f32.mrf.mxu0
  %2896 = vdwg.mxu0
  %2897 = vmatpush.bf16.msra.mxu0 %v862
  %2898 = vmatpush.bf16.msra.mxu0 %v854
  %2899 = vmatpush.bf16.msra.mxu0 %v846
  %2900 = vmatpush.bf16.msra.mxu0 %v838
  %2901 = vmatpush.bf16.msra.mxu0 %v830
  %2902 = vmatpush.bf16.msra.mxu0 %v822
  %2903 = vmatpush.bf16.msra.mxu0 %v814
  %2904 = vmatpush.bf16.msra.mxu0 %v806
  %2905 = vmatmul.bf16.gmra.mxu0 %v2763
  %v2906 = vpop.f32.mrf.mxu0
  %v2907 = vadd.f32 0.0, %v2906
  %v2908 = vpop.f32.mrf.mxu0
  %2909 = vdwg.mxu0
  %2910 = vmatpush.bf16.msra.mxu0 %v926
  %2911 = vmatpush.bf16.msra.mxu0 %v918
  %2912 = vmatpush.bf16.msra.mxu0 %v910
  %2913 = vmatpush.bf16.msra.mxu0 %v902
  %2914 = vmatpush.bf16.msra.mxu0 %v894
  %2915 = vmatpush.bf16.msra.mxu0 %v886
  %2916 = vmatpush.bf16.msra.mxu0 %v878
  %2917 = vmatpush.bf16.msra.mxu0 %v870
  %2918 = vmatmul.bf16.gmra.mxu0 %v2764
  %v2919 = vpop.f32.mrf.mxu0
  %v2920 = vadd.f32 %v2907, %v2919
  %v2921 = vpop.f32.mrf.mxu0
  %2922 = vdwg.mxu0
  %2923 = vmatpush.bf16.msra.mxu0 %v863
  %2924 = vmatpush.bf16.msra.mxu0 %v855
  %2925 = vmatpush.bf16.msra.mxu0 %v847
  %2926 = vmatpush.bf16.msra.mxu0 %v839
  %2927 = vmatpush.bf16.msra.mxu0 %v831
  %2928 = vmatpush.bf16.msra.mxu0 %v823
  %2929 = vmatpush.bf16.msra.mxu0 %v815
  %2930 = vmatpush.bf16.msra.mxu0 %v807
  %2931 = vmatmul.bf16.gmra.mxu0 %v2763
  %v2932 = vpop.f32.mrf.mxu0
  %v2933 = vadd.f32 0.0, %v2932
  %v2934 = vpop.f32.mrf.mxu0
  %2935 = vdwg.mxu0
  %2936 = vmatpush.bf16.msra.mxu0 %v927
  %2937 = vmatpush.bf16.msra.mxu0 %v919
  %2938 = vmatpush.bf16.msra.mxu0 %v911
  %2939 = vmatpush.bf16.msra.mxu0 %v903
  %2940 = vmatpush.bf16.msra.mxu0 %v895
  %2941 = vmatpush.bf16.msra.mxu0 %v887
  %2942 = vmatpush.bf16.msra.mxu0 %v879
  %2943 = vmatpush.bf16.msra.mxu0 %v871
  %2944 = vmatmul.bf16.gmra.mxu0 %v2764
  %v2945 = vpop.f32.mrf.mxu0
  %v2946 = vadd.f32 %v2933, %v2945
  %v2947 = vpop.f32.mrf.mxu0
  %2948 = vdwg.mxu0
  %2949 = vmatpush.bf16.msra.mxu0 %v864
  %2950 = vmatpush.bf16.msra.mxu0 %v856
  %2951 = vmatpush.bf16.msra.mxu0 %v848
  %2952 = vmatpush.bf16.msra.mxu0 %v840
  %2953 = vmatpush.bf16.msra.mxu0 %v832
  %2954 = vmatpush.bf16.msra.mxu0 %v824
  %2955 = vmatpush.bf16.msra.mxu0 %v816
  %2956 = vmatpush.bf16.msra.mxu0 %v808
  %2957 = vmatmul.bf16.gmra.mxu0 %v2763
  %v2958 = vpop.f32.mrf.mxu0
  %v2959 = vadd.f32 0.0, %v2958
  %v2960 = vpop.f32.mrf.mxu0
  %2961 = vdwg.mxu0
  %2962 = vmatpush.bf16.msra.mxu0 %v928
  %2963 = vmatpush.bf16.msra.mxu0 %v920
  %2964 = vmatpush.bf16.msra.mxu0 %v912
  %2965 = vmatpush.bf16.msra.mxu0 %v904
  %2966 = vmatpush.bf16.msra.mxu0 %v896
  %2967 = vmatpush.bf16.msra.mxu0 %v888
  %2968 = vmatpush.bf16.msra.mxu0 %v880
  %2969 = vmatpush.bf16.msra.mxu0 %v872
  %2970 = vmatmul.bf16.gmra.mxu0 %v2764
  %v2971 = vpop.f32.mrf.mxu0
  %v2972 = vadd.f32 %v2959, %v2971
  %v2973 = vpop.f32.mrf.mxu0
  %2974 = vdwg.mxu0
  %v2983 = vrot.slane %v2790, 4
  %v2984 = vrot.slane %v2816, 4
  %v2985 = vrot.slane %v2842, 4
  %v2986 = vrot.slane %v2868, 4
  %v2987 = vrot.slane %v2894, 4
  %v2988 = vrot.slane %v2920, 4
  %v2989 = vrot.slane %v2946, 4
  %v2990 = vrot.slane %v2972, 4
  %v2999 = vadd.f32 %v122, %v2983
  %v3000 = vadd.f32 %v145, %v2984
  %v3001 = vadd.f32 %v168, %v2985
  %v3002 = vadd.f32 %v191, %v2986
  %v3003 = vadd.f32 %v214, %v2987
  %v3004 = vadd.f32 %v237, %v2988
  %v3005 = vadd.f32 %v260, %v2989
  %v3006 = vadd.f32 %v283, %v2990
  %v3007 = vsub.f32 0.0, %v2999
  %v3008 = vsub.f32 0.0, %v3000
  %v3009 = vsub.f32 0.0, %v3001
  %v3010 = vsub.f32 0.0, %v3002
  %v3011 = vmul.f32 %v3007, 1.442695
  %v3012 = vpow.pop %v3011
  %v3013 = vmul.f32 %v3008, 1.442695
  %v3014 = vpow.pop %v3013
  %v3015 = vmul.f32 %v3009, 1.442695
  %v3016 = vpow.pop %v3015
  %v3017 = vmul.f32 %v3010, 1.442695
  %v3018 = vpow.pop %v3017
  %v3019 = vadd.f32 %v3012, 1.0
  %v3020 = vadd.f32 %v3014, 1.0
  %v3021 = vadd.f32 %v3016, 1.0
  %v3022 = vadd.f32 %v3018, 1.0
  %v3023 = vrcp.pop %v3019
  %v3024 = vrcp.pop %v3020
  %v3025 = vrcp.pop %v3021
  %v3026 = vrcp.pop %v3022
  %v3027 = vtanh.pop %v3003
  %v3028 = vtanh.pop %v3004
  %v3029 = vsub.f32 0.0, %v3005
  %v3030 = vsub.f32 0.0, %v3006
  %v3031 = vmul.f32 %v3029, 1.442695
  %v3032 = vpow.pop %v3031
  %v3033 = vmul.f32 %v3030, 1.442695
  %v3034 = vpow.pop %v3033
  %v3035 = vadd.f32 %v3032, 1.0
  %v3036 = vadd.f32 %v3034, 1.0
  %v3037 = vrcp.pop %v3035
  %v3038 = vrcp.pop %v3036
  %v3041 = vrot.slane %v2753, 6
  %v3042 = vrot.slane %v2754, 6
  %v3045 = vmul.f32 %v3025, %v3041
  %v3046 = vmul.f32 %v3026, %v3042
  %v3047 = vmul.f32 %v3023, %v3027
  %v3048 = vmul.f32 %v3024, %v3028
  %v3049 = vadd.f32 %v3045, %v3047
  %v3050 = vadd.f32 %v3046, %v3048
  %v3051 = vtanh.pop %v3049
  %v3052 = vtanh.pop %v3050
  %v3053 = vmul.f32 %v3037, %v3051
  %v3054 = vmul.f32 %v3038, %v3052
  %v3055 = vpack.c.bf16 %v3053, %v3053
  %v3056 = vpack.c.bf16 %v3054, %v3054
  %v3059 = vrot.slane %v3055, 2
  %v3060 = vrot.slane %v3056, 2
  %3063 = vmatpush.bf16.msra.mxu0 %v857
  %3064 = vmatpush.bf16.msra.mxu0 %v849
  %3065 = vmatpush.bf16.msra.mxu0 %v841
  %3066 = vmatpush.bf16.msra.mxu0 %v833
  %3067 = vmatpush.bf16.msra.mxu0 %v825
  %3068 = vmatpush.bf16.msra.mxu0 %v817
  %3069 = vmatpush.bf16.msra.mxu0 %v809
  %3070 = vmatpush.bf16.msra.mxu0 %v801
  %3071 = vmatmul.bf16.gmra.mxu0 %v3059
  %v3072 = vpop.f32.mrf.mxu0
  %v3073 = vadd.f32 0.0, %v3072
  %v3074 = vpop.f32.mrf.mxu0
  %3075 = vdwg.mxu0
  %3076 = vmatpush.bf16.msra.mxu0 %v921
  %3077 = vmatpush.bf16.msra.mxu0 %v913
  %3078 = vmatpush.bf16.msra.mxu0 %v905
  %3079 = vmatpush.bf16.msra.mxu0 %v897
  %3080 = vmatpush.bf16.msra.mxu0 %v889
  %3081 = vmatpush.bf16.msra.mxu0 %v881
  %3082 = vmatpush.bf16.msra.mxu0 %v873
  %3083 = vmatpush.bf16.msra.mxu0 %v865
  %3084 = vmatmul.bf16.gmra.mxu0 %v3060
  %v3085 = vpop.f32.mrf.mxu0
  %v3086 = vadd.f32 %v3073, %v3085
  %v3087 = vpop.f32.mrf.mxu0
  %3088 = vdwg.mxu0
  %3089 = vmatpush.bf16.msra.mxu0 %v858
  %3090 = vmatpush.bf16.msra.mxu0 %v850
  %3091 = vmatpush.bf16.msra.mxu0 %v842
  %3092 = vmatpush.bf16.msra.mxu0 %v834
  %3093 = vmatpush.bf16.msra.mxu0 %v826
  %3094 = vmatpush.bf16.msra.mxu0 %v818
  %3095 = vmatpush.bf16.msra.mxu0 %v810
  %3096 = vmatpush.bf16.msra.mxu0 %v802
  %3097 = vmatmul.bf16.gmra.mxu0 %v3059
  %v3098 = vpop.f32.mrf.mxu0
  %v3099 = vadd.f32 0.0, %v3098
  %v3100 = vpop.f32.mrf.mxu0
  %3101 = vdwg.mxu0
  %3102 = vmatpush.bf16.msra.mxu0 %v922
  %3103 = vmatpush.bf16.msra.mxu0 %v914
  %3104 = vmatpush.bf16.msra.mxu0 %v906
  %3105 = vmatpush.bf16.msra.mxu0 %v898
  %3106 = vmatpush.bf16.msra.mxu0 %v890
  %3107 = vmatpush.bf16.msra.mxu0 %v882
  %3108 = vmatpush.bf16.msra.mxu0 %v874
  %3109 = vmatpush.bf16.msra.mxu0 %v866
  %3110 = vmatmul.bf16.gmra.mxu0 %v3060
  %v3111 = vpop.f32.mrf.mxu0
  %v3112 = vadd.f32 %v3099, %v3111
  %v3113 = vpop.f32.mrf.mxu0
  %3114 = vdwg.mxu0
  %3115 = vmatpush.bf16.msra.mxu0 %v859
  %3116 = vmatpush.bf16.msra.mxu0 %v851
  %3117 = vmatpush.bf16.msra.mxu0 %v843
  %3118 = vmatpush.bf16.msra.mxu0 %v835
  %3119 = vmatpush.bf16.msra.mxu0 %v827
  %3120 = vmatpush.bf16.msra.mxu0 %v819
  %3121 = vmatpush.bf16.msra.mxu0 %v811
  %3122 = vmatpush.bf16.msra.mxu0 %v803
  %3123 = vmatmul.bf16.gmra.mxu0 %v3059
  %v3124 = vpop.f32.mrf.mxu0
  %v3125 = vadd.f32 0.0, %v3124
  %v3126 = vpop.f32.mrf.mxu0
  %3127 = vdwg.mxu0
  %3128 = vmatpush.bf16.msra.mxu0 %v923
  %3129 = vmatpush.bf16.msra.mxu0 %v915
  %3130 = vmatpush.bf16.msra.mxu0 %v907
  %3131 = vmatpush.bf16.msra.mxu0 %v899
  %3132 = vmatpush.bf16.msra.mxu0 %v891
  %3133 = vmatpush.bf16.msra.mxu0 %v883
  %3134 = vmatpush.bf16.msra.mxu0 %v875
  %3135 = vmatpush.bf16.msra.mxu0 %v867
  %3136 = vmatmul.bf16.gmra.mxu0 %v3060
  %v3137 = vpop.f32.mrf.mxu0
  %v3138 = vadd.f32 %v3125, %v3137
  %v3139 = vpop.f32.mrf.mxu0
  %3140 = vdwg.mxu0
  %3141 = vmatpush.bf16.msra.mxu0 %v860
  %3142 = vmatpush.bf16.msra.mxu0 %v852
  %3143 = vmatpush.bf16.msra.mxu0 %v844
  %3144 = vmatpush.bf16.msra.mxu0 %v836
  %3145 = vmatpush.bf16.msra.mxu0 %v828
  %3146 = vmatpush.bf16.msra.mxu0 %v820
  %3147 = vmatpush.bf16.msra.mxu0 %v812
  %3148 = vmatpush.bf16.msra.mxu0 %v804
  %3149 = vmatmul.bf16.gmra.mxu0 %v3059
  %v3150 = vpop.f32.mrf.mxu0
  %v3151 = vadd.f32 0.0, %v3150
  %v3152 = vpop.f32.mrf.mxu0
  %3153 = vdwg.mxu0
  %3154 = vmatpush.bf16.msra.mxu0 %v924
  %3155 = vmatpush.bf16.msra.mxu0 %v916
  %3156 = vmatpush.bf16.msra.mxu0 %v908
  %3157 = vmatpush.bf16.msra.mxu0 %v900
  %3158 = vmatpush.bf16.msra.mxu0 %v892
  %3159 = vmatpush.bf16.msra.mxu0 %v884
  %3160 = vmatpush.bf16.msra.mxu0 %v876
  %3161 = vmatpush.bf16.msra.mxu0 %v868
  %3162 = vmatmul.bf16.gmra.mxu0 %v3060
  %v3163 = vpop.f32.mrf.mxu0
  %v3164 = vadd.f32 %v3151, %v3163
  %v3165 = vpop.f32.mrf.mxu0
  %3166 = vdwg.mxu0
  %3167 = vmatpush.bf16.msra.mxu0 %v861
  %3168 = vmatpush.bf16.msra.mxu0 %v853
  %3169 = vmatpush.bf16.msra.mxu0 %v845
  %3170 = vmatpush.bf16.msra.mxu0 %v837
  %3171 = vmatpush.bf16.msra.mxu0 %v829
  %3172 = vmatpush.bf16.msra.mxu0 %v821
  %3173 = vmatpush.bf16.msra.mxu0 %v813
  %3174 = vmatpush.bf16.msra.mxu0 %v805
  %3175 = vmatmul.bf16.gmra.mxu0 %v3059
  %v3176 = vpop.f32.mrf.mxu0
  %v3177 = vadd.f32 0.0, %v3176
  %v3178 = vpop.f32.mrf.mxu0
  %3179 = vdwg.mxu0
  %3180 = vmatpush.bf16.msra.mxu0 %v925
  %3181 = vmatpush.bf16.msra.mxu0 %v917
  %3182 = vmatpush.bf16.msra.mxu0 %v909
  %3183 = vmatpush.bf16.msra.mxu0 %v901
  %3184 = vmatpush.bf16.msra.mxu0 %v893
  %3185 = vmatpush.bf16.msra.mxu0 %v885
  %3186 = vmatpush.bf16.msra.mxu0 %v877
  %3187 = vmatpush.bf16.msra.mxu0 %v869
  %3188 = vmatmul.bf16.gmra.mxu0 %v3060
  %v3189 = vpop.f32.mrf.mxu0
  %v3190 = vadd.f32 %v3177, %v3189
  %v3191 = vpop.f32.mrf.mxu0
  %3192 = vdwg.mxu0
  %3193 = vmatpush.bf16.msra.mxu0 %v862
  %3194 = vmatpush.bf16.msra.mxu0 %v854
  %3195 = vmatpush.bf16.msra.mxu0 %v846
  %3196 = vmatpush.bf16.msra.mxu0 %v838
  %3197 = vmatpush.bf16.msra.mxu0 %v830
  %3198 = vmatpush.bf16.msra.mxu0 %v822
  %3199 = vmatpush.bf16.msra.mxu0 %v814
  %3200 = vmatpush.bf16.msra.mxu0 %v806
  %3201 = vmatmul.bf16.gmra.mxu0 %v3059
  %v3202 = vpop.f32.mrf.mxu0
  %v3203 = vadd.f32 0.0, %v3202
  %v3204 = vpop.f32.mrf.mxu0
  %3205 = vdwg.mxu0
  %3206 = vmatpush.bf16.msra.mxu0 %v926
  %3207 = vmatpush.bf16.msra.mxu0 %v918
  %3208 = vmatpush.bf16.msra.mxu0 %v910
  %3209 = vmatpush.bf16.msra.mxu0 %v902
  %3210 = vmatpush.bf16.msra.mxu0 %v894
  %3211 = vmatpush.bf16.msra.mxu0 %v886
  %3212 = vmatpush.bf16.msra.mxu0 %v878
  %3213 = vmatpush.bf16.msra.mxu0 %v870
  %3214 = vmatmul.bf16.gmra.mxu0 %v3060
  %v3215 = vpop.f32.mrf.mxu0
  %v3216 = vadd.f32 %v3203, %v3215
  %v3217 = vpop.f32.mrf.mxu0
  %3218 = vdwg.mxu0
  %3219 = vmatpush.bf16.msra.mxu0 %v863
  %3220 = vmatpush.bf16.msra.mxu0 %v855
  %3221 = vmatpush.bf16.msra.mxu0 %v847
  %3222 = vmatpush.bf16.msra.mxu0 %v839
  %3223 = vmatpush.bf16.msra.mxu0 %v831
  %3224 = vmatpush.bf16.msra.mxu0 %v823
  %3225 = vmatpush.bf16.msra.mxu0 %v815
  %3226 = vmatpush.bf16.msra.mxu0 %v807
  %3227 = vmatmul.bf16.gmra.mxu0 %v3059
  %v3228 = vpop.f32.mrf.mxu0
  %v3229 = vadd.f32 0.0, %v3228
  %v3230 = vpop.f32.mrf.mxu0
  %3231 = vdwg.mxu0
  %3232 = vmatpush.bf16.msra.mxu0 %v927
  %3233 = vmatpush.bf16.msra.mxu0 %v919
  %3234 = vmatpush.bf16.msra.mxu0 %v911
  %3235 = vmatpush.bf16.msra.mxu0 %v903
  %3236 = vmatpush.bf16.msra.mxu0 %v895
  %3237 = vmatpush.bf16.msra.mxu0 %v887
  %3238 = vmatpush.bf16.msra.mxu0 %v879
  %3239 = vmatpush.bf16.msra.mxu0 %v871
  %3240 = vmatmul.bf16.gmra.mxu0 %v3060
  %v3241 = vpop.f32.mrf.mxu0
  %v3242 = vadd.f32 %v3229, %v3241
  %v3243 = vpop.f32.mrf.mxu0
  %3244 = vdwg.mxu0
  %3245 = vmatpush.bf16.msra.mxu0 %v864
  %3246 = vmatpush.bf16.msra.mxu0 %v856
  %3247 = vmatpush.bf16.msra.mxu0 %v848
  %3248 = vmatpush.bf16.msra.mxu0 %v840
  %3249 = vmatpush.bf16.msra.mxu0 %v832
  %3250 = vmatpush.bf16.msra.mxu0 %v824
  %3251 = vmatpush.bf16.msra.mxu0 %v816
  %3252 = vmatpush.bf16.msra.mxu0 %v808
  %3253 = vmatmul.bf16.gmra.mxu0 %v3059
  %v3254 = vpop.f32.mrf.mxu0
  %v3255 = vadd.f32 0.0, %v3254
  %v3256 = vpop.f32.mrf.mxu0
  %3257 = vdwg.mxu0
  %3258 = vmatpush.bf16.msra.mxu0 %v928
  %3259 = vmatpush.bf16.msra.mxu0 %v920
  %3260 = vmatpush.bf16.msra.mxu0 %v912
  %3261 = vmatpush.bf16.msra.mxu0 %v904
  %3262 = vmatpush.bf16.msra.mxu0 %v896
  %3263 = vmatpush.bf16.msra.mxu0 %v888
  %3264 = vmatpush.bf16.msra.mxu0 %v880
  %3265 = vmatpush.bf16.msra.mxu0 %v872
  %3266 = vmatmul.bf16.gmra.mxu0 %v3060
  %v3267 = vpop.f32.mrf.mxu0
  %v3268 = vadd.f32 %v3255, %v3267
  %v3269 = vpop.f32.mrf.mxu0
  %3270 = vdwg.mxu0
  %v3279 = vrot.slane %v3086, 2
  %v3280 = vrot.slane %v3112, 2
  %v3281 = vrot.slane %v3138, 2
  %v3282 = vrot.slane %v3164, 2
  %v3283 = vrot.slane %v3190, 2
  %v3284 = vrot.slane %v3216, 2
  %v3285 = vrot.slane %v3242, 2
  %v3286 = vrot.slane %v3268, 2
  %v3295 = vadd.f32 %v122, %v3279
  %v3296 = vadd.f32 %v145, %v3280
  %v3297 = vadd.f32 %v168, %v3281
  %v3298 = vadd.f32 %v191, %v3282
  %v3299 = vadd.f32 %v214, %v3283
  %v3300 = vadd.f32 %v237, %v3284
  %v3301 = vadd.f32 %v260, %v3285
  %v3302 = vadd.f32 %v283, %v3286
  %v3303 = vsub.f32 0.0, %v3295
  %v3304 = vsub.f32 0.0, %v3296
  %v3305 = vsub.f32 0.0, %v3297
  %v3306 = vsub.f32 0.0, %v3298
  %v3307 = vmul.f32 %v3303, 1.442695
  %v3308 = vpow.pop %v3307
  %v3309 = vmul.f32 %v3304, 1.442695
  %v3310 = vpow.pop %v3309
  %v3311 = vmul.f32 %v3305, 1.442695
  %v3312 = vpow.pop %v3311
  %v3313 = vmul.f32 %v3306, 1.442695
  %v3314 = vpow.pop %v3313
  %v3315 = vadd.f32 %v3308, 1.0
  %v3316 = vadd.f32 %v3310, 1.0
  %v3317 = vadd.f32 %v3312, 1.0
  %v3318 = vadd.f32 %v3314, 1.0
  %v3319 = vrcp.pop %v3315
  %v3320 = vrcp.pop %v3316
  %v3321 = vrcp.pop %v3317
  %v3322 = vrcp.pop %v3318
  %v3323 = vtanh.pop %v3299
  %v3324 = vtanh.pop %v3300
  %v3325 = vsub.f32 0.0, %v3301
  %v3326 = vsub.f32 0.0, %v3302
  %v3327 = vmul.f32 %v3325, 1.442695
  %v3328 = vpow.pop %v3327
  %v3329 = vmul.f32 %v3326, 1.442695
  %v3330 = vpow.pop %v3329
  %v3331 = vadd.f32 %v3328, 1.0
  %v3332 = vadd.f32 %v3330, 1.0
  %v3333 = vrcp.pop %v3331
  %v3334 = vrcp.pop %v3332
  %v3337 = vrot.slane %v3049, 6
  %v3338 = vrot.slane %v3050, 6
  %v3341 = vmul.f32 %v3321, %v3337
  %v3342 = vmul.f32 %v3322, %v3338
  %v3343 = vmul.f32 %v3319, %v3323
  %v3344 = vmul.f32 %v3320, %v3324
  %v3345 = vadd.f32 %v3341, %v3343
  %v3346 = vadd.f32 %v3342, %v3344
  %v3347 = vtanh.pop %v3345
  %v3348 = vtanh.pop %v3346
  %v3349 = vmul.f32 %v3333, %v3347
  %v3350 = vmul.f32 %v3334, %v3348
  %v3351 = vld [vmem:[%s4] sm:$0xff]
  %v3352 = vld [vmem:[%s4 + $0x8] sm:$0xff]
  %v3353 = vld [vmem:[%s4 + $0x10] sm:$0xff]
  %v3354 = vld [vmem:[%s4 + $0x18] sm:$0xff]
  %v3355 = vld [vmem:[%s4 + $0x20] sm:$0xff]
  %v3356 = vld [vmem:[%s4 + $0x28] sm:$0xff]
  %v3357 = vld [vmem:[%s4 + $0x30] sm:$0xff]
  %v3358 = vld [vmem:[%s4 + $0x38] sm:$0xff]
  %v3359 = vld [vmem:[%s4 + $0x40] sm:$0xff]
  %v3360 = vld [vmem:[%s4 + $0x48] sm:$0xff]
  %v3361 = vld [vmem:[%s4 + $0x50] sm:$0xff]
  %v3362 = vld [vmem:[%s4 + $0x58] sm:$0xff]
  %v3363 = vld [vmem:[%s4 + $0x60] sm:$0xff]
  %v3364 = vld [vmem:[%s4 + $0x68] sm:$0xff]
  %v3365 = vld [vmem:[%s4 + $0x70] sm:$0xff]
  %v3366 = vld [vmem:[%s4 + $0x78] sm:$0xff]
  %v3367 = vld [vmem:[%s4 + $0x80] sm:$0xff]
  %v3368 = vld [vmem:[%s4 + $0x88] sm:$0xff]
  %v3369 = vld [vmem:[%s4 + $0x90] sm:$0xff]
  %v3370 = vld [vmem:[%s4 + $0x98] sm:$0xff]
  %v3371 = vld [vmem:[%s4 + $0xa0] sm:$0xff]
  %v3372 = vld [vmem:[%s4 + $0xa8] sm:$0xff]
  %v3373 = vld [vmem:[%s4 + $0xb0] sm:$0xff]
  %v3374 = vld [vmem:[%s4 + $0xb8] sm:$0xff]
  %v3375 = vld [vmem:[%s4 + $0xc0] sm:$0xff]
  %v3376 = vld [vmem:[%s4 + $0xc8] sm:$0xff]
  %v3377 = vld [vmem:[%s4 + $0xd0] sm:$0xff]
  %v3378 = vld [vmem:[%s4 + $0xd8] sm:$0xff]
  %v3379 = vld [vmem:[%s4 + $0xe0] sm:$0xff]
  %v3380 = vld [vmem:[%s4 + $0xe8] sm:$0xff]
  %v3381 = vld [vmem:[%s4 + $0xf0] sm:$0xff]
  %v3382 = vld [vmem:[%s4 + $0xf8] sm:$0xff]
  %v3383 = vld [vmem:[%s5] sm:$0x1]
  %v3385 = vperm.slane %v3383, 0
  %v3389 = vrot.slane %v3349, 6
  %v3390 = vrot.slane %v3350, 6
  %3393 = vmatpush.msra.mxu0 %v3366
  %3394 = vmatpush.msra.mxu0 %v3365
  %3395 = vmatpush.msra.mxu0 %v3364
  %3396 = vmatpush.msra.mxu0 %v3363
  %3397 = vmatpush.msra.mxu0 %v3362
  %3398 = vmatpush.msra.mxu0 %v3361
  %3399 = vmatpush.msra.mxu0 %v3360
  %3400 = vmatpush.msra.mxu0 %v3359
  %3401 = vmatpush.msra.mxu0 %v3358
  %3402 = vmatpush.msra.mxu0 %v3357
  %3403 = vmatpush.msra.mxu0 %v3356
  %3404 = vmatpush.msra.mxu0 %v3355
  %3405 = vmatpush.msra.mxu0 %v3354
  %3406 = vmatpush.msra.mxu0 %v3353
  %3407 = vmatpush.msra.mxu0 %v3352
  %3408 = vmatpush.msra.mxu0 %v3351
  %3409 = vmatmul.f32.gmra.mxu0 %v3389
  %v3410 = vpop.f32.mrf.mxu0
  %v3411 = vadd.f32 %v3385, %v3410
  %3412 = vdwg.mxu0
  %3413 = vmatpush.msra.mxu0 %v3382
  %3414 = vmatpush.msra.mxu0 %v3381
  %3415 = vmatpush.msra.mxu0 %v3380
  %3416 = vmatpush.msra.mxu0 %v3379
  %3417 = vmatpush.msra.mxu0 %v3378
  %3418 = vmatpush.msra.mxu0 %v3377
  %3419 = vmatpush.msra.mxu0 %v3376
  %3420 = vmatpush.msra.mxu0 %v3375
  %3421 = vmatpush.msra.mxu0 %v3374
  %3422 = vmatpush.msra.mxu0 %v3373
  %3423 = vmatpush.msra.mxu0 %v3372
  %3424 = vmatpush.msra.mxu0 %v3371
  %3425 = vmatpush.msra.mxu0 %v3370
  %3426 = vmatpush.msra.mxu0 %v3369
  %3427 = vmatpush.msra.mxu0 %v3368
  %3428 = vmatpush.msra.mxu0 %v3367
  %3429 = vmatmul.f32.gmra.mxu0 %v3390
  %v3430 = vpop.f32.mrf.mxu0
  %v3431 = vadd.f32 %v3411, %v3430
  %3432 = vdwg.mxu0
  %v3433 = vmax.f32 %v3431, 0.0
  %v3434 = vld [vmem:[%s6] sm:$0x1]
  %v3436 = vperm.slane %v3434, 0
  %v3438 = vmul.f32 %v3433, %v3436
  %vm3439 = vcmask 254976
  %v3440 = vsel %vm3439, %v3438, 0.0
  %3441 = vadd.xlane.f32.xlu0 %v3440
  %v3442 = vpop.xlane.xlu0 %3441
  %s3443 = sld [smem:[#allocation4]]
  %v3444 = vstv %s3443
  %v3445 = vadd.f32 %v3442, %v3444
  %v3446 = vsub.f32 0.0, %v3445
  %v3447 = vmul.f32 %v3446, 1.442695
  %v3448 = vpow.pop %v3447
  %v3449 = vadd.f32 %v3448, 1.0
  %v3450 = vrcp.pop %v3449
  %vm3451 = vcmask 1024
  %3452 = vst.msk [vmem:[%s8] sm:$0x3] %vm3451, %v3450
  // Predicated region
  $region34: #{tpu_custom_call.1} parent=0 // pred_check
    _
  $region35: #{tpu_custom_call.1} parent=0 // pred_check_branch
    %3454 = sbr.rel (0) target = $region37
  $region36: #{tpu_custom_call.1} parent=0 // pred_region
    _
  $region37: #{tpu_custom_call.1} parent=0 // pred_fallthru
    _
  // Predicated region
  $region38: #{tpu_custom_call.1} parent=0 // pred_check
    _
  $region39: #{tpu_custom_call.1} parent=0 // pred_check_branch
    %3456 = sbr.rel (0) target = $region41
  $region40: #{tpu_custom_call.1} parent=0 // pred_region
    _
  $region41: #{tpu_custom_call.1} parent=0 // pred_fallthru
    _
  %3457 = vsyncmov [#allocation3]
  %s3458 = vpop.sfrf %3457
  %p3459 = scmp.eq.s32.totalorder %s3458, 0
  %p3460 = pneg %p3459
  %3462 = shalt.err (%p3460)

</llo_original>
